<compile_context>
chip_gen: v5e
topology: v5e:2x2
jax: 0.10.0
libtpu: 0.0.40
codegen_flags: <defaults>
</compile_context>

<pallas_src>
import numpy as np

import jax
import jax.numpy as jnp
from jax.experimental import pallas as pl

# ----------------------------- hyperparameters ------------------------------
CONV1_K = 3          # conv1_kernel_size
CONV2_K = 2          # conv2_kernel_size
CONV2_DIM = 8        # conv2_dimensions   (conv1 out channels)
CONV_OUT_DIM = 16    # conv_out_dimensions (conv2 out channels)
LINEAR_OUT = 32      # linear_out
POOL1 = 2            # pool_size_1
POOL2 = 2            # pool_size_2
# dropout = 0.25 -> identity at inference

B, CIN, H, W = 2, 3, 16, 16   # input shape (NCHW); Conv2d(3, ...) fixes CIN=3

# ------------------- derived flat-raster spatial bookkeeping ------------------
# conv1 output lives on the width-W raster: flat index p = h*W + w (w<OW1 valid)
OH1, OW1 = H - CONV1_K + 1, W - CONV1_K + 1              # 14, 14
L1 = (OH1 - 1) * W + OW1                                 # 222
PH1, PW1 = OH1 // POOL1, OW1 // POOL1                    # 7, 7
LZ1 = POOL1 * W * (PH1 - 1) + POOL1 * (PW1 - 1) + 1      # 205
# conv2 input (pooled1) lives on a width-PW1 raster
OH2, OW2 = PH1 - CONV2_K + 1, PW1 - CONV2_K + 1          # 6, 6
L2 = (OH2 - 1) * PW1 + OW2                               # 41
PH2, PW2 = OH2 // POOL2, OW2 // POOL2                    # 3, 3
LZ2 = POOL2 * PW1 * (PH2 - 1) + POOL2 * (PW2 - 1) + 1    # 33
FLAT_DIM = CONV_OUT_DIM * PH2 * PW2                      # 144 (LazyLinear in_features)


# ------------------------------ fused Pallas kernel ---------------------------
def _cnn_fused_kernel(x_ref, w1_ref, b1_ref, w2_ref, b2_ref,
                      fc1w_ref, fc1b_ref, fc2w_ref, fc2b_ref,
                      g1_ref, g2_ref, o_ref):
    f32 = jnp.float32
    x = x_ref[...]          # (B, CIN, H*W)          channel-major, spatial on lanes
    w1 = w1_ref[...]        # (K1, K1, C1, CIN)
    b1 = b1_ref[...]        # (C1, 1)
    w2 = w2_ref[...]        # (K2, K2, C2, C1)
    b2 = b2_ref[...]        # (C2, 1)
    fc1w = fc1w_ref[...]    # (PH2*PW2, LINEAR_OUT, C2)
    fc1b = fc1b_ref[...]    # (LINEAR_OUT, 1)
    fc2w = fc2w_ref[...]    # (1, LINEAR_OUT)
    fc2b = fc2b_ref[...]    # (1, 1)
    g1 = g1_ref[...]        # (LZ1, PH1*PW1)  0/1 stride-2 downsample matrix
    g2 = g2_ref[...]        # (LZ2, PH2*PW2)

    for b in range(x_ref.shape[0]):          # B is tiny & static -> unrolled
        xb = x[b]                                                     # (CIN, 256)

        # ---- conv1 + bias + ReLU: sum of per-tap [C1,CIN] @ [CIN,L1] matmuls ----
        acc1 = jnp.zeros((CONV2_DIM, L1), f32)
        for kh in range(CONV1_K):
            for kw in range(CONV1_K):
                s = kh * W + kw
                acc1 = acc1 + jnp.dot(w1[kh, kw], xb[:, s:s + L1],
                                      preferred_element_type=f32)
        y1 = jnp.maximum(acc1 + b1, 0.0)                              # (C1, 222)

        # ---- maxpool1 (2x2/2): VPU max over the 4 shifted slices, then one
        #      gather matmul for the stride-2 downsample ----
        z1 = jnp.maximum(jnp.maximum(y1[:, 0:LZ1], y1[:, 1:1 + LZ1]),
                         jnp.maximum(y1[:, W:W + LZ1],
                                     y1[:, W + 1:W + 1 + LZ1]))
        p1 = jnp.dot(z1, g1, preferred_element_type=f32)              # (C1, 49)

        # ---- conv2 + bias + ReLU ----
        acc2 = jnp.zeros((CONV_OUT_DIM, L2), f32)
        for kh in range(CONV2_K):
            for kw in range(CONV2_K):
                s = kh * PW1 + kw
                acc2 = acc2 + jnp.dot(w2[kh, kw], p1[:, s:s + L2],
                                      preferred_element_type=f32)
        y2 = jnp.maximum(acc2 + b2, 0.0)                              # (C2, 41)

        # ---- maxpool2 (2x2/2) ----
        z2 = jnp.maximum(jnp.maximum(y2[:, 0:LZ2], y2[:, 1:1 + LZ2]),
                         jnp.maximum(y2[:, PW1:PW1 + LZ2],
                                     y2[:, PW1 + 1:PW1 + 1 + LZ2]))
        p2 = jnp.dot(z2, g2, preferred_element_type=f32)              # (C2, 9)

        # ---- fc1 + ReLU: contract the 9 spatial positions; torch.flatten(NCHW)
        #      ordering is baked into fc1w on the host, so no flatten/transpose ----
        h1 = jnp.zeros((LINEAR_OUT, 1), f32)
        for s in range(PH2 * PW2):
            h1 = h1 + jnp.dot(fc1w[s], p2[:, s:s + 1],
                              preferred_element_type=f32)
        h1 = jnp.maximum(h1 + fc1b, 0.0)                              # (32, 1)

        # ---- fc2 + sigmoid (EUP exp + approximate EUP reciprocal) ----
        logit = jnp.dot(fc2w, h1, preferred_element_type=f32) + fc2b  # (1, 1)
        prob = pl.reciprocal(1.0 + jnp.exp(-logit), approx=True)
        o_ref[b:b + 1, :] = prob.astype(o_ref.dtype)


# --------------------- host-side (offline) parameter repack -------------------
def _downsample_matrix(src_len, src_width, out_h, out_w, stride):
    """0/1 matrix picking flat index stride*(src_width*ph + pw) -> out_w*ph + pw."""
    g = np.zeros((src_len, out_h * out_w), np.float32)
    for ph in range(out_h):
        for pw in range(out_w):
            g[stride * src_width * ph + stride * pw, out_w * ph + pw] = 1.0
    return jnp.asarray(g)


def prepare_params(params):
    """One-time repack of PyTorch-layout weights into the kernel's layouts."""
    w1, b1, w2, b2, fw1, fb1, fw2, fb2 = params
    w1t = jnp.transpose(w1, (2, 3, 0, 1))                 # (kh, kw, Cout, Cin)
    w2t = jnp.transpose(w2, (2, 3, 0, 1))
    # fc1 rows follow torch.flatten on NCHW: row = c*(PH2*PW2) + (h*PW2 + w).
    # Regroup into per-spatial-position (LINEAR_OUT, C2) slabs.
    fc1w = jnp.transpose(fw1.reshape(CONV_OUT_DIM, PH2 * PW2, LINEAR_OUT),
                         (1, 2, 0))                       # (9, 32, 16)
    return (
        w1t, b1.reshape(CONV2_DIM, 1),
        w2t, b2.reshape(CONV_OUT_DIM, 1),
        fc1w, fb1.reshape(LINEAR_OUT, 1),
        fw2.reshape(1, LINEAR_OUT), fb2.reshape(1, 1),
        _downsample_matrix(LZ1, W, PH1, PW1, POOL1),      # (205, 49)
        _downsample_matrix(LZ2, PW1, PH2, PW2, POOL2),    # (33, 9)
    )


# ------------------------------ forward pass ----------------------------------
@jax.jit
def custom_cnn_forward(x_nchw, prep):
    """Fused CustomCNN forward. x is NCHW; prep = prepare_params(raw_params)."""
    bb = x_nchw.shape[0]
    x_flat = x_nchw.reshape(bb, CIN, H * W)   # pure metadata reshape, no copy
    return pl.pallas_call(
        _cnn_fused_kernel,
        out_shape=jax.ShapeDtypeStruct((bb, 1), jnp.float32),
    )(x_flat, *prep)


# --------------------------- pure-JAX reference ------------------------------
def _ref_pool(x_nchw, p):
    bb, cc, hh, ww = x_nchw.shape
    oh, ow = hh // p, ww // p
    x = x_nchw[:, :, :oh * p, :ow * p].reshape(bb, cc, oh, p, ow, p)
    return x.max(axis=(3, 5))


def ref_forward(x, params):
    w1, b1, w2, b2, fw1, fb1, fw2, fb2 = params
    dn = ("NCHW", "OIHW", "NCHW")
    hp = jax.lax.Precision.HIGHEST
    y = jax.lax.conv_general_dilated(x, w1, (1, 1), "VALID",
                                     dimension_numbers=dn, precision=hp)
    y = _ref_pool(jnp.maximum(y + b1[None, :, None, None], 0.0), POOL1)
    y = jax.lax.conv_general_dilated(y, w2, (1, 1), "VALID",
                                     dimension_numbers=dn, precision=hp)
    y = _ref_pool(jnp.maximum(y + b2[None, :, None, None], 0.0), POOL2)
    y = y.reshape(y.shape[0], -1)
    y = jnp.maximum(jnp.dot(y, fw1, precision=hp) + fb1, 0.0)
    y = 1.0 / (1.0 + jnp.exp(-(jnp.dot(y, fw2, precision=hp) + fb2)))
    return y


# ---------------------------------- main --------------------------------------
if __name__ == "__main__":
    key = jax.random.PRNGKey(0)
    kx, kp = jax.random.split(key)
    x = jax.random.normal(kx, (B, CIN, H, W), jnp.float32)

    # deterministic synthetic parameters (shapes follow the module's __init__;
    # fc1 is LazyLinear -> in_features = CONV_OUT_DIM * 3 * 3 = 144 at these shapes)
    ks = jax.random.split(kp, 8)
    params = (
        0.1 * jax.random.normal(ks[0], (CONV2_DIM, CIN, CONV1_K, CONV1_K), jnp.float32),
        0.1 * jax.random.normal(ks[1], (CONV2_DIM,), jnp.float32),
        0.1 * jax.random.normal(ks[2], (CONV_OUT_DIM, CONV2_DIM, CONV2_K, CONV2_K), jnp.float32),
        0.1 * jax.random.normal(ks[3], (CONV_OUT_DIM,), jnp.float32),
        0.1 * jax.random.normal(ks[4], (FLAT_DIM, LINEAR_OUT), jnp.float32),
        0.1 * jax.random.normal(ks[5], (LINEAR_OUT,), jnp.float32),
        0.1 * jax.random.normal(ks[6], (LINEAR_OUT, 1), jnp.float32),
        0.1 * jax.random.normal(ks[7], (1,), jnp.float32),
    )

    prep = prepare_params(params)     # offline weight repack (out of the hot path)
    out = jax.block_until_ready(custom_cnn_forward(x, prep))
    assert out.shape == (B, 1), out.shape

    ref = jax.block_until_ready(ref_forward(x, params))
    max_err = float(jnp.max(jnp.abs(out - ref)))
    # 2e-3 budget: up to ~2.5e-4 from the approximate EUP reciprocal in the sigmoid,
    # the remainder is f32 matmul accumulation-order noise.
    assert max_err < 2e-3, f"mismatch vs reference: {max_err}"

    print("KERNEL_OK")
</pallas_src>

<mosaic_0001>
module attributes {stable_mosaic.version = 11 : i64} {
  func.func @_cnn_fused_kernel(%arg0: memref<2x3x256xf32, #tpu.memory_space<vmem>>, %arg1: memref<3x3x8x3xf32, #tpu.memory_space<vmem>>, %arg2: memref<8x1xf32, #tpu.memory_space<vmem>>, %arg3: memref<2x2x16x8xf32, #tpu.memory_space<vmem>>, %arg4: memref<16x1xf32, #tpu.memory_space<vmem>>, %arg5: memref<9x32x16xf32, #tpu.memory_space<vmem>>, %arg6: memref<32x1xf32, #tpu.memory_space<vmem>>, %arg7: memref<1x32xf32, #tpu.memory_space<vmem>>, %arg8: memref<1x1xf32, #tpu.memory_space<vmem>>, %arg9: memref<205x49xf32, #tpu.memory_space<vmem>>, %arg10: memref<33x9xf32, #tpu.memory_space<vmem>>, %arg11: memref<2x1xf32, #tpu.memory_space<vmem>>) attributes {dimension_semantics = [], scalar_prefetch = 0 : i64, scratch_operands = 0 : i64, tpu.core_type = #tpu.core_type<tc>} {
    %c0 = arith.constant 0 : index
    %c0_0 = arith.constant 0 : index
    %c0_1 = arith.constant 0 : index
    %0 = vector.load %arg0[%c0, %c0_0, %c0_1] : memref<2x3x256xf32, #tpu.memory_space<vmem>>, vector<2x3x256xf32>
    %c0_2 = arith.constant 0 : index
    %c0_3 = arith.constant 0 : index
    %c0_4 = arith.constant 0 : index
    %c0_5 = arith.constant 0 : index
    %1 = vector.load %arg1[%c0_2, %c0_3, %c0_4, %c0_5] : memref<3x3x8x3xf32, #tpu.memory_space<vmem>>, vector<3x3x8x3xf32>
    %c0_6 = arith.constant 0 : index
    %c0_7 = arith.constant 0 : index
    %2 = vector.load %arg2[%c0_6, %c0_7] : memref<8x1xf32, #tpu.memory_space<vmem>>, vector<8x1xf32>
    %c0_8 = arith.constant 0 : index
    %c0_9 = arith.constant 0 : index
    %c0_10 = arith.constant 0 : index
    %c0_11 = arith.constant 0 : index
    %3 = vector.load %arg3[%c0_8, %c0_9, %c0_10, %c0_11] : memref<2x2x16x8xf32, #tpu.memory_space<vmem>>, vector<2x2x16x8xf32>
    %c0_12 = arith.constant 0 : index
    %c0_13 = arith.constant 0 : index
    %4 = vector.load %arg4[%c0_12, %c0_13] : memref<16x1xf32, #tpu.memory_space<vmem>>, vector<16x1xf32>
    %c0_14 = arith.constant 0 : index
    %c0_15 = arith.constant 0 : index
    %c0_16 = arith.constant 0 : index
    %5 = vector.load %arg5[%c0_14, %c0_15, %c0_16] : memref<9x32x16xf32, #tpu.memory_space<vmem>>, vector<9x32x16xf32>
    %c0_17 = arith.constant 0 : index
    %c0_18 = arith.constant 0 : index
    %6 = vector.load %arg6[%c0_17, %c0_18] : memref<32x1xf32, #tpu.memory_space<vmem>>, vector<32x1xf32>
    %c0_19 = arith.constant 0 : index
    %c0_20 = arith.constant 0 : index
    %7 = vector.load %arg7[%c0_19, %c0_20] : memref<1x32xf32, #tpu.memory_space<vmem>>, vector<1x32xf32>
    %c0_21 = arith.constant 0 : index
    %c0_22 = arith.constant 0 : index
    %8 = vector.load %arg8[%c0_21, %c0_22] : memref<1x1xf32, #tpu.memory_space<vmem>>, vector<1x1xf32>
    %c0_23 = arith.constant 0 : index
    %c0_24 = arith.constant 0 : index
    %9 = vector.load %arg9[%c0_23, %c0_24] : memref<205x49xf32, #tpu.memory_space<vmem>>, vector<205x49xf32>
    %c0_25 = arith.constant 0 : index
    %c0_26 = arith.constant 0 : index
    %10 = vector.load %arg10[%c0_25, %c0_26] : memref<33x9xf32, #tpu.memory_space<vmem>>, vector<33x9xf32>
    %11 = vector.extract_strided_slice %0 {offsets = [0, 0, 0], sizes = [1, 3, 256], strides = [1, 1, 1]} : vector<2x3x256xf32> to vector<1x3x256xf32>
    %12 = vector.shape_cast %11 : vector<1x3x256xf32> to vector<3x256xf32>
    %cst = arith.constant 0.000000e+00 : f32
    %13 = vector.broadcast %cst : f32 to vector<8x222xf32>
    %14 = vector.extract_strided_slice %1 {offsets = [0, 0, 0, 0], sizes = [1, 1, 8, 3], strides = [1, 1, 1, 1]} : vector<3x3x8x3xf32> to vector<1x1x8x3xf32>
    %15 = vector.shape_cast %14 : vector<1x1x8x3xf32> to vector<8x3xf32>
    %16 = vector.extract_strided_slice %12 {offsets = [0, 0], sizes = [3, 222], strides = [1, 1]} : vector<3x256xf32> to vector<3x222xf32>
    %cst_27 = arith.constant dense<0.000000e+00> : vector<8x222xf32>
    %17 = tpu.matmul %15, %16, %cst_27 {dimension_numbers = #tpu.dot_dimension_numbers<[1], [0], [0], [1], [0, 0, 1, 1], [], []>} : vector<8x3xf32>, vector<3x222xf32>, vector<8x222xf32> -> vector<8x222xf32>
    %18 = arith.addf %13, %17 : vector<8x222xf32>
    %19 = vector.extract_strided_slice %1 {offsets = [0, 1, 0, 0], sizes = [1, 1, 8, 3], strides = [1, 1, 1, 1]} : vector<3x3x8x3xf32> to vector<1x1x8x3xf32>
    %20 = vector.shape_cast %19 : vector<1x1x8x3xf32> to vector<8x3xf32>
    %21 = vector.extract_strided_slice %12 {offsets = [0, 1], sizes = [3, 222], strides = [1, 1]} : vector<3x256xf32> to vector<3x222xf32>
    %cst_28 = arith.constant dense<0.000000e+00> : vector<8x222xf32>
    %22 = tpu.matmul %20, %21, %cst_28 {dimension_numbers = #tpu.dot_dimension_numbers<[1], [0], [0], [1], [0, 0, 1, 1], [], []>} : vector<8x3xf32>, vector<3x222xf32>, vector<8x222xf32> -> vector<8x222xf32>
    %23 = arith.addf %18, %22 : vector<8x222xf32>
    %24 = vector.extract_strided_slice %1 {offsets = [0, 2, 0, 0], sizes = [1, 1, 8, 3], strides = [1, 1, 1, 1]} : vector<3x3x8x3xf32> to vector<1x1x8x3xf32>
    %25 = vector.shape_cast %24 : vector<1x1x8x3xf32> to vector<8x3xf32>
    %26 = vector.extract_strided_slice %12 {offsets = [0, 2], sizes = [3, 222], strides = [1, 1]} : vector<3x256xf32> to vector<3x222xf32>
    %cst_29 = arith.constant dense<0.000000e+00> : vector<8x222xf32>
    %27 = tpu.matmul %25, %26, %cst_29 {dimension_numbers = #tpu.dot_dimension_numbers<[1], [0], [0], [1], [0, 0, 1, 1], [], []>} : vector<8x3xf32>, vector<3x222xf32>, vector<8x222xf32> -> vector<8x222xf32>
    %28 = arith.addf %23, %27 : vector<8x222xf32>
    %29 = vector.extract_strided_slice %1 {offsets = [1, 0, 0, 0], sizes = [1, 1, 8, 3], strides = [1, 1, 1, 1]} : vector<3x3x8x3xf32> to vector<1x1x8x3xf32>
    %30 = vector.shape_cast %29 : vector<1x1x8x3xf32> to vector<8x3xf32>
    %31 = vector.extract_strided_slice %12 {offsets = [0, 16], sizes = [3, 222], strides = [1, 1]} : vector<3x256xf32> to vector<3x222xf32>
    %cst_30 = arith.constant dense<0.000000e+00> : vector<8x222xf32>
    %32 = tpu.matmul %30, %31, %cst_30 {dimension_numbers = #tpu.dot_dimension_numbers<[1], [0], [0], [1], [0, 0, 1, 1], [], []>} : vector<8x3xf32>, vector<3x222xf32>, vector<8x222xf32> -> vector<8x222xf32>
    %33 = arith.addf %28, %32 : vector<8x222xf32>
    %34 = vector.extract_strided_slice %1 {offsets = [1, 1, 0, 0], sizes = [1, 1, 8, 3], strides = [1, 1, 1, 1]} : vector<3x3x8x3xf32> to vector<1x1x8x3xf32>
    %35 = vector.shape_cast %34 : vector<1x1x8x3xf32> to vector<8x3xf32>
    %36 = vector.extract_strided_slice %12 {offsets = [0, 17], sizes = [3, 222], strides = [1, 1]} : vector<3x256xf32> to vector<3x222xf32>
    %cst_31 = arith.constant dense<0.000000e+00> : vector<8x222xf32>
    %37 = tpu.matmul %35, %36, %cst_31 {dimension_numbers = #tpu.dot_dimension_numbers<[1], [0], [0], [1], [0, 0, 1, 1], [], []>} : vector<8x3xf32>, vector<3x222xf32>, vector<8x222xf32> -> vector<8x222xf32>
    %38 = arith.addf %33, %37 : vector<8x222xf32>
    %39 = vector.extract_strided_slice %1 {offsets = [1, 2, 0, 0], sizes = [1, 1, 8, 3], strides = [1, 1, 1, 1]} : vector<3x3x8x3xf32> to vector<1x1x8x3xf32>
    %40 = vector.shape_cast %39 : vector<1x1x8x3xf32> to vector<8x3xf32>
    %41 = vector.extract_strided_slice %12 {offsets = [0, 18], sizes = [3, 222], strides = [1, 1]} : vector<3x256xf32> to vector<3x222xf32>
    %cst_32 = arith.constant dense<0.000000e+00> : vector<8x222xf32>
    %42 = tpu.matmul %40, %41, %cst_32 {dimension_numbers = #tpu.dot_dimension_numbers<[1], [0], [0], [1], [0, 0, 1, 1], [], []>} : vector<8x3xf32>, vector<3x222xf32>, vector<8x222xf32> -> vector<8x222xf32>
    %43 = arith.addf %38, %42 : vector<8x222xf32>
    %44 = vector.extract_strided_slice %1 {offsets = [2, 0, 0, 0], sizes = [1, 1, 8, 3], strides = [1, 1, 1, 1]} : vector<3x3x8x3xf32> to vector<1x1x8x3xf32>
    %45 = vector.shape_cast %44 : vector<1x1x8x3xf32> to vector<8x3xf32>
    %46 = vector.extract_strided_slice %12 {offsets = [0, 32], sizes = [3, 222], strides = [1, 1]} : vector<3x256xf32> to vector<3x222xf32>
    %cst_33 = arith.constant dense<0.000000e+00> : vector<8x222xf32>
    %47 = tpu.matmul %45, %46, %cst_33 {dimension_numbers = #tpu.dot_dimension_numbers<[1], [0], [0], [1], [0, 0, 1, 1], [], []>} : vector<8x3xf32>, vector<3x222xf32>, vector<8x222xf32> -> vector<8x222xf32>
    %48 = arith.addf %43, %47 : vector<8x222xf32>
    %49 = vector.extract_strided_slice %1 {offsets = [2, 1, 0, 0], sizes = [1, 1, 8, 3], strides = [1, 1, 1, 1]} : vector<3x3x8x3xf32> to vector<1x1x8x3xf32>
    %50 = vector.shape_cast %49 : vector<1x1x8x3xf32> to vector<8x3xf32>
    %51 = vector.extract_strided_slice %12 {offsets = [0, 33], sizes = [3, 222], strides = [1, 1]} : vector<3x256xf32> to vector<3x222xf32>
    %cst_34 = arith.constant dense<0.000000e+00> : vector<8x222xf32>
    %52 = tpu.matmul %50, %51, %cst_34 {dimension_numbers = #tpu.dot_dimension_numbers<[1], [0], [0], [1], [0, 0, 1, 1], [], []>} : vector<8x3xf32>, vector<3x222xf32>, vector<8x222xf32> -> vector<8x222xf32>
    %53 = arith.addf %48, %52 : vector<8x222xf32>
    %54 = vector.extract_strided_slice %1 {offsets = [2, 2, 0, 0], sizes = [1, 1, 8, 3], strides = [1, 1, 1, 1]} : vector<3x3x8x3xf32> to vector<1x1x8x3xf32>
    %55 = vector.shape_cast %54 : vector<1x1x8x3xf32> to vector<8x3xf32>
    %56 = vector.extract_strided_slice %12 {offsets = [0, 34], sizes = [3, 222], strides = [1, 1]} : vector<3x256xf32> to vector<3x222xf32>
    %cst_35 = arith.constant dense<0.000000e+00> : vector<8x222xf32>
    %57 = tpu.matmul %55, %56, %cst_35 {dimension_numbers = #tpu.dot_dimension_numbers<[1], [0], [0], [1], [0, 0, 1, 1], [], []>} : vector<8x3xf32>, vector<3x222xf32>, vector<8x222xf32> -> vector<8x222xf32>
    %58 = arith.addf %53, %57 : vector<8x222xf32>
    %59 = vector.broadcast %2 : vector<8x1xf32> to vector<8x222xf32>
    %60 = arith.addf %58, %59 : vector<8x222xf32>
    %cst_36 = arith.constant 0.000000e+00 : f32
    %61 = vector.broadcast %cst_36 : f32 to vector<8x222xf32>
    %62 = arith.maximumf %60, %61 : vector<8x222xf32>
    %63 = vector.extract_strided_slice %62 {offsets = [0, 0], sizes = [8, 205], strides = [1, 1]} : vector<8x222xf32> to vector<8x205xf32>
    %64 = vector.extract_strided_slice %62 {offsets = [0, 1], sizes = [8, 205], strides = [1, 1]} : vector<8x222xf32> to vector<8x205xf32>
    %65 = arith.maximumf %63, %64 : vector<8x205xf32>
    %66 = vector.extract_strided_slice %62 {offsets = [0, 16], sizes = [8, 205], strides = [1, 1]} : vector<8x222xf32> to vector<8x205xf32>
    %67 = vector.extract_strided_slice %62 {offsets = [0, 17], sizes = [8, 205], strides = [1, 1]} : vector<8x222xf32> to vector<8x205xf32>
    %68 = arith.maximumf %66, %67 : vector<8x205xf32>
    %69 = arith.maximumf %65, %68 : vector<8x205xf32>
    %cst_37 = arith.constant dense<0.000000e+00> : vector<8x49xf32>
    %70 = tpu.matmul %69, %9, %cst_37 {dimension_numbers = #tpu.dot_dimension_numbers<[1], [0], [0], [1], [0, 0, 1, 1], [], []>} : vector<8x205xf32>, vector<205x49xf32>, vector<8x49xf32> -> vector<8x49xf32>
    %cst_38 = arith.constant 0.000000e+00 : f32
    %71 = vector.broadcast %cst_38 : f32 to vector<16x41xf32>
    %72 = vector.extract_strided_slice %3 {offsets = [0, 0, 0, 0], sizes = [1, 1, 16, 8], strides = [1, 1, 1, 1]} : vector<2x2x16x8xf32> to vector<1x1x16x8xf32>
    %73 = vector.shape_cast %72 : vector<1x1x16x8xf32> to vector<16x8xf32>
    %74 = vector.extract_strided_slice %70 {offsets = [0, 0], sizes = [8, 41], strides = [1, 1]} : vector<8x49xf32> to vector<8x41xf32>
    %cst_39 = arith.constant dense<0.000000e+00> : vector<16x41xf32>
    %75 = tpu.matmul %73, %74, %cst_39 {dimension_numbers = #tpu.dot_dimension_numbers<[1], [0], [0], [1], [0, 0, 1, 1], [], []>} : vector<16x8xf32>, vector<8x41xf32>, vector<16x41xf32> -> vector<16x41xf32>
    %76 = arith.addf %71, %75 : vector<16x41xf32>
    %77 = vector.extract_strided_slice %3 {offsets = [0, 1, 0, 0], sizes = [1, 1, 16, 8], strides = [1, 1, 1, 1]} : vector<2x2x16x8xf32> to vector<1x1x16x8xf32>
    %78 = vector.shape_cast %77 : vector<1x1x16x8xf32> to vector<16x8xf32>
    %79 = vector.extract_strided_slice %70 {offsets = [0, 1], sizes = [8, 41], strides = [1, 1]} : vector<8x49xf32> to vector<8x41xf32>
    %cst_40 = arith.constant dense<0.000000e+00> : vector<16x41xf32>
    %80 = tpu.matmul %78, %79, %cst_40 {dimension_numbers = #tpu.dot_dimension_numbers<[1], [0], [0], [1], [0, 0, 1, 1], [], []>} : vector<16x8xf32>, vector<8x41xf32>, vector<16x41xf32> -> vector<16x41xf32>
    %81 = arith.addf %76, %80 : vector<16x41xf32>
    %82 = vector.extract_strided_slice %3 {offsets = [1, 0, 0, 0], sizes = [1, 1, 16, 8], strides = [1, 1, 1, 1]} : vector<2x2x16x8xf32> to vector<1x1x16x8xf32>
    %83 = vector.shape_cast %82 : vector<1x1x16x8xf32> to vector<16x8xf32>
    %84 = vector.extract_strided_slice %70 {offsets = [0, 7], sizes = [8, 41], strides = [1, 1]} : vector<8x49xf32> to vector<8x41xf32>
    %cst_41 = arith.constant dense<0.000000e+00> : vector<16x41xf32>
    %85 = tpu.matmul %83, %84, %cst_41 {dimension_numbers = #tpu.dot_dimension_numbers<[1], [0], [0], [1], [0, 0, 1, 1], [], []>} : vector<16x8xf32>, vector<8x41xf32>, vector<16x41xf32> -> vector<16x41xf32>
    %86 = arith.addf %81, %85 : vector<16x41xf32>
    %87 = vector.extract_strided_slice %3 {offsets = [1, 1, 0, 0], sizes = [1, 1, 16, 8], strides = [1, 1, 1, 1]} : vector<2x2x16x8xf32> to vector<1x1x16x8xf32>
    %88 = vector.shape_cast %87 : vector<1x1x16x8xf32> to vector<16x8xf32>
    %89 = vector.extract_strided_slice %70 {offsets = [0, 8], sizes = [8, 41], strides = [1, 1]} : vector<8x49xf32> to vector<8x41xf32>
    %cst_42 = arith.constant dense<0.000000e+00> : vector<16x41xf32>
    %90 = tpu.matmul %88, %89, %cst_42 {dimension_numbers = #tpu.dot_dimension_numbers<[1], [0], [0], [1], [0, 0, 1, 1], [], []>} : vector<16x8xf32>, vector<8x41xf32>, vector<16x41xf32> -> vector<16x41xf32>
    %91 = arith.addf %86, %90 : vector<16x41xf32>
    %92 = vector.broadcast %4 : vector<16x1xf32> to vector<16x41xf32>
    %93 = arith.addf %91, %92 : vector<16x41xf32>
    %cst_43 = arith.constant 0.000000e+00 : f32
    %94 = vector.broadcast %cst_43 : f32 to vector<16x41xf32>
    %95 = arith.maximumf %93, %94 : vector<16x41xf32>
    %96 = vector.extract_strided_slice %95 {offsets = [0, 0], sizes = [16, 33], strides = [1, 1]} : vector<16x41xf32> to vector<16x33xf32>
    %97 = vector.extract_strided_slice %95 {offsets = [0, 1], sizes = [16, 33], strides = [1, 1]} : vector<16x41xf32> to vector<16x33xf32>
    %98 = arith.maximumf %96, %97 : vector<16x33xf32>
    %99 = vector.extract_strided_slice %95 {offsets = [0, 7], sizes = [16, 33], strides = [1, 1]} : vector<16x41xf32> to vector<16x33xf32>
    %100 = vector.extract_strided_slice %95 {offsets = [0, 8], sizes = [16, 33], strides = [1, 1]} : vector<16x41xf32> to vector<16x33xf32>
    %101 = arith.maximumf %99, %100 : vector<16x33xf32>
    %102 = arith.maximumf %98, %101 : vector<16x33xf32>
    %cst_44 = arith.constant dense<0.000000e+00> : vector<16x9xf32>
    %103 = tpu.matmul %102, %10, %cst_44 {dimension_numbers = #tpu.dot_dimension_numbers<[1], [0], [0], [1], [0, 0, 1, 1], [], []>} : vector<16x33xf32>, vector<33x9xf32>, vector<16x9xf32> -> vector<16x9xf32>
    %cst_45 = arith.constant 0.000000e+00 : f32
    %104 = vector.broadcast %cst_45 : f32 to vector<32x1xf32>
    %105 = vector.extract_strided_slice %5 {offsets = [0, 0, 0], sizes = [1, 32, 16], strides = [1, 1, 1]} : vector<9x32x16xf32> to vector<1x32x16xf32>
    %106 = vector.shape_cast %105 : vector<1x32x16xf32> to vector<32x16xf32>
    %107 = vector.extract_strided_slice %103 {offsets = [0, 0], sizes = [16, 1], strides = [1, 1]} : vector<16x9xf32> to vector<16x1xf32>
    %cst_46 = arith.constant dense<0.000000e+00> : vector<32x1xf32>
    %108 = tpu.matmul %106, %107, %cst_46 {dimension_numbers = #tpu.dot_dimension_numbers<[1], [0], [0], [1], [0, 0, 1, 1], [], []>} : vector<32x16xf32>, vector<16x1xf32>, vector<32x1xf32> -> vector<32x1xf32>
    %109 = arith.addf %104, %108 : vector<32x1xf32>
    %110 = vector.extract_strided_slice %5 {offsets = [1, 0, 0], sizes = [1, 32, 16], strides = [1, 1, 1]} : vector<9x32x16xf32> to vector<1x32x16xf32>
    %111 = vector.shape_cast %110 : vector<1x32x16xf32> to vector<32x16xf32>
    %112 = vector.extract_strided_slice %103 {offsets = [0, 1], sizes = [16, 1], strides = [1, 1]} : vector<16x9xf32> to vector<16x1xf32>
    %cst_47 = arith.constant dense<0.000000e+00> : vector<32x1xf32>
    %113 = tpu.matmul %111, %112, %cst_47 {dimension_numbers = #tpu.dot_dimension_numbers<[1], [0], [0], [1], [0, 0, 1, 1], [], []>} : vector<32x16xf32>, vector<16x1xf32>, vector<32x1xf32> -> vector<32x1xf32>
    %114 = arith.addf %109, %113 : vector<32x1xf32>
    %115 = vector.extract_strided_slice %5 {offsets = [2, 0, 0], sizes = [1, 32, 16], strides = [1, 1, 1]} : vector<9x32x16xf32> to vector<1x32x16xf32>
    %116 = vector.shape_cast %115 : vector<1x32x16xf32> to vector<32x16xf32>
    %117 = vector.extract_strided_slice %103 {offsets = [0, 2], sizes = [16, 1], strides = [1, 1]} : vector<16x9xf32> to vector<16x1xf32>
    %cst_48 = arith.constant dense<0.000000e+00> : vector<32x1xf32>
    %118 = tpu.matmul %116, %117, %cst_48 {dimension_numbers = #tpu.dot_dimension_numbers<[1], [0], [0], [1], [0, 0, 1, 1], [], []>} : vector<32x16xf32>, vector<16x1xf32>, vector<32x1xf32> -> vector<32x1xf32>
    %119 = arith.addf %114, %118 : vector<32x1xf32>
    %120 = vector.extract_strided_slice %5 {offsets = [3, 0, 0], sizes = [1, 32, 16], strides = [1, 1, 1]} : vector<9x32x16xf32> to vector<1x32x16xf32>
    %121 = vector.shape_cast %120 : vector<1x32x16xf32> to vector<32x16xf32>
    %122 = vector.extract_strided_slice %103 {offsets = [0, 3], sizes = [16, 1], strides = [1, 1]} : vector<16x9xf32> to vector<16x1xf32>
    %cst_49 = arith.constant dense<0.000000e+00> : vector<32x1xf32>
    %123 = tpu.matmul %121, %122, %cst_49 {dimension_numbers = #tpu.dot_dimension_numbers<[1], [0], [0], [1], [0, 0, 1, 1], [], []>} : vector<32x16xf32>, vector<16x1xf32>, vector<32x1xf32> -> vector<32x1xf32>
    %124 = arith.addf %119, %123 : vector<32x1xf32>
    %125 = vector.extract_strided_slice %5 {offsets = [4, 0, 0], sizes = [1, 32, 16], strides = [1, 1, 1]} : vector<9x32x16xf32> to vector<1x32x16xf32>
    %126 = vector.shape_cast %125 : vector<1x32x16xf32> to vector<32x16xf32>
    %127 = vector.extract_strided_slice %103 {offsets = [0, 4], sizes = [16, 1], strides = [1, 1]} : vector<16x9xf32> to vector<16x1xf32>
    %cst_50 = arith.constant dense<0.000000e+00> : vector<32x1xf32>
    %128 = tpu.matmul %126, %127, %cst_50 {dimension_numbers = #tpu.dot_dimension_numbers<[1], [0], [0], [1], [0, 0, 1, 1], [], []>} : vector<32x16xf32>, vector<16x1xf32>, vector<32x1xf32> -> vector<32x1xf32>
    %129 = arith.addf %124, %128 : vector<32x1xf32>
    %130 = vector.extract_strided_slice %5 {offsets = [5, 0, 0], sizes = [1, 32, 16], strides = [1, 1, 1]} : vector<9x32x16xf32> to vector<1x32x16xf32>
    %131 = vector.shape_cast %130 : vector<1x32x16xf32> to vector<32x16xf32>
    %132 = vector.extract_strided_slice %103 {offsets = [0, 5], sizes = [16, 1], strides = [1, 1]} : vector<16x9xf32> to vector<16x1xf32>
    %cst_51 = arith.constant dense<0.000000e+00> : vector<32x1xf32>
    %133 = tpu.matmul %131, %132, %cst_51 {dimension_numbers = #tpu.dot_dimension_numbers<[1], [0], [0], [1], [0, 0, 1, 1], [], []>} : vector<32x16xf32>, vector<16x1xf32>, vector<32x1xf32> -> vector<32x1xf32>
    %134 = arith.addf %129, %133 : vector<32x1xf32>
    %135 = vector.extract_strided_slice %5 {offsets = [6, 0, 0], sizes = [1, 32, 16], strides = [1, 1, 1]} : vector<9x32x16xf32> to vector<1x32x16xf32>
    %136 = vector.shape_cast %135 : vector<1x32x16xf32> to vector<32x16xf32>
    %137 = vector.extract_strided_slice %103 {offsets = [0, 6], sizes = [16, 1], strides = [1, 1]} : vector<16x9xf32> to vector<16x1xf32>
    %cst_52 = arith.constant dense<0.000000e+00> : vector<32x1xf32>
    %138 = tpu.matmul %136, %137, %cst_52 {dimension_numbers = #tpu.dot_dimension_numbers<[1], [0], [0], [1], [0, 0, 1, 1], [], []>} : vector<32x16xf32>, vector<16x1xf32>, vector<32x1xf32> -> vector<32x1xf32>
    %139 = arith.addf %134, %138 : vector<32x1xf32>
    %140 = vector.extract_strided_slice %5 {offsets = [7, 0, 0], sizes = [1, 32, 16], strides = [1, 1, 1]} : vector<9x32x16xf32> to vector<1x32x16xf32>
    %141 = vector.shape_cast %140 : vector<1x32x16xf32> to vector<32x16xf32>
    %142 = vector.extract_strided_slice %103 {offsets = [0, 7], sizes = [16, 1], strides = [1, 1]} : vector<16x9xf32> to vector<16x1xf32>
    %cst_53 = arith.constant dense<0.000000e+00> : vector<32x1xf32>
    %143 = tpu.matmul %141, %142, %cst_53 {dimension_numbers = #tpu.dot_dimension_numbers<[1], [0], [0], [1], [0, 0, 1, 1], [], []>} : vector<32x16xf32>, vector<16x1xf32>, vector<32x1xf32> -> vector<32x1xf32>
    %144 = arith.addf %139, %143 : vector<32x1xf32>
    %145 = vector.extract_strided_slice %5 {offsets = [8, 0, 0], sizes = [1, 32, 16], strides = [1, 1, 1]} : vector<9x32x16xf32> to vector<1x32x16xf32>
    %146 = vector.shape_cast %145 : vector<1x32x16xf32> to vector<32x16xf32>
    %147 = vector.extract_strided_slice %103 {offsets = [0, 8], sizes = [16, 1], strides = [1, 1]} : vector<16x9xf32> to vector<16x1xf32>
    %cst_54 = arith.constant dense<0.000000e+00> : vector<32x1xf32>
    %148 = tpu.matmul %146, %147, %cst_54 {dimension_numbers = #tpu.dot_dimension_numbers<[1], [0], [0], [1], [0, 0, 1, 1], [], []>} : vector<32x16xf32>, vector<16x1xf32>, vector<32x1xf32> -> vector<32x1xf32>
    %149 = arith.addf %144, %148 : vector<32x1xf32>
    %150 = arith.addf %149, %6 : vector<32x1xf32>
    %cst_55 = arith.constant 0.000000e+00 : f32
    %151 = vector.broadcast %cst_55 : f32 to vector<32x1xf32>
    %152 = arith.maximumf %150, %151 : vector<32x1xf32>
    %cst_56 = arith.constant dense<0.000000e+00> : vector<1x1xf32>
    %153 = tpu.matmul %7, %152, %cst_56 {dimension_numbers = #tpu.dot_dimension_numbers<[1], [0], [0], [1], [0, 0, 1, 1], [], []>} : vector<1x32xf32>, vector<32x1xf32>, vector<1x1xf32> -> vector<1x1xf32>
    %154 = arith.addf %153, %8 : vector<1x1xf32>
    %cst_57 = arith.constant 0.000000e+00 : f32
    %155 = vector.broadcast %cst_57 : f32 to vector<1x1xf32>
    %156 = arith.subf %155, %154 : vector<1x1xf32>
    %157 = math.exp %156 : vector<1x1xf32>
    %cst_58 = arith.constant 1.000000e+00 : f32
    %158 = vector.broadcast %cst_58 : f32 to vector<1x1xf32>
    %159 = arith.addf %158, %157 : vector<1x1xf32>
    %160 = tpu.reciprocal %159 {approx = true} : vector<1x1xf32> -> vector<1x1xf32>
    %c0_59 = arith.constant 0 : index
    %c0_60 = arith.constant 0 : index
    %161 = vector.load %arg11[%c0_59, %c0_60] : memref<2x1xf32, #tpu.memory_space<vmem>>, vector<1x1xf32>
    tpu.vector_store %arg11[%c0_59, %c0_60], %160 {strides = array<i32>} : memref<2x1xf32, #tpu.memory_space<vmem>>, vector<1x1xf32>,
    %162 = vector.extract_strided_slice %0 {offsets = [1, 0, 0], sizes = [1, 3, 256], strides = [1, 1, 1]} : vector<2x3x256xf32> to vector<1x3x256xf32>
    %163 = vector.shape_cast %162 : vector<1x3x256xf32> to vector<3x256xf32>
    %cst_61 = arith.constant 0.000000e+00 : f32
    %164 = vector.broadcast %cst_61 : f32 to vector<8x222xf32>
    %165 = vector.extract_strided_slice %1 {offsets = [0, 0, 0, 0], sizes = [1, 1, 8, 3], strides = [1, 1, 1, 1]} : vector<3x3x8x3xf32> to vector<1x1x8x3xf32>
    %166 = vector.shape_cast %165 : vector<1x1x8x3xf32> to vector<8x3xf32>
    %167 = vector.extract_strided_slice %163 {offsets = [0, 0], sizes = [3, 222], strides = [1, 1]} : vector<3x256xf32> to vector<3x222xf32>
    %cst_62 = arith.constant dense<0.000000e+00> : vector<8x222xf32>
    %168 = tpu.matmul %166, %167, %cst_62 {dimension_numbers = #tpu.dot_dimension_numbers<[1], [0], [0], [1], [0, 0, 1, 1], [], []>} : vector<8x3xf32>, vector<3x222xf32>, vector<8x222xf32> -> vector<8x222xf32>
    %169 = arith.addf %164, %168 : vector<8x222xf32>
    %170 = vector.extract_strided_slice %1 {offsets = [0, 1, 0, 0], sizes = [1, 1, 8, 3], strides = [1, 1, 1, 1]} : vector<3x3x8x3xf32> to vector<1x1x8x3xf32>
    %171 = vector.shape_cast %170 : vector<1x1x8x3xf32> to vector<8x3xf32>
    %172 = vector.extract_strided_slice %163 {offsets = [0, 1], sizes = [3, 222], strides = [1, 1]} : vector<3x256xf32> to vector<3x222xf32>
    %cst_63 = arith.constant dense<0.000000e+00> : vector<8x222xf32>
    %173 = tpu.matmul %171, %172, %cst_63 {dimension_numbers = #tpu.dot_dimension_numbers<[1], [0], [0], [1], [0, 0, 1, 1], [], []>} : vector<8x3xf32>, vector<3x222xf32>, vector<8x222xf32> -> vector<8x222xf32>
    %174 = arith.addf %169, %173 : vector<8x222xf32>
    %175 = vector.extract_strided_slice %1 {offsets = [0, 2, 0, 0], sizes = [1, 1, 8, 3], strides = [1, 1, 1, 1]} : vector<3x3x8x3xf32> to vector<1x1x8x3xf32>
    %176 = vector.shape_cast %175 : vector<1x1x8x3xf32> to vector<8x3xf32>
    %177 = vector.extract_strided_slice %163 {offsets = [0, 2], sizes = [3, 222], strides = [1, 1]} : vector<3x256xf32> to vector<3x222xf32>
    %cst_64 = arith.constant dense<0.000000e+00> : vector<8x222xf32>
    %178 = tpu.matmul %176, %177, %cst_64 {dimension_numbers = #tpu.dot_dimension_numbers<[1], [0], [0], [1], [0, 0, 1, 1], [], []>} : vector<8x3xf32>, vector<3x222xf32>, vector<8x222xf32> -> vector<8x222xf32>
    %179 = arith.addf %174, %178 : vector<8x222xf32>
    %180 = vector.extract_strided_slice %1 {offsets = [1, 0, 0, 0], sizes = [1, 1, 8, 3], strides = [1, 1, 1, 1]} : vector<3x3x8x3xf32> to vector<1x1x8x3xf32>
    %181 = vector.shape_cast %180 : vector<1x1x8x3xf32> to vector<8x3xf32>
    %182 = vector.extract_strided_slice %163 {offsets = [0, 16], sizes = [3, 222], strides = [1, 1]} : vector<3x256xf32> to vector<3x222xf32>
    %cst_65 = arith.constant dense<0.000000e+00> : vector<8x222xf32>
    %183 = tpu.matmul %181, %182, %cst_65 {dimension_numbers = #tpu.dot_dimension_numbers<[1], [0], [0], [1], [0, 0, 1, 1], [], []>} : vector<8x3xf32>, vector<3x222xf32>, vector<8x222xf32> -> vector<8x222xf32>
    %184 = arith.addf %179, %183 : vector<8x222xf32>
    %185 = vector.extract_strided_slice %1 {offsets = [1, 1, 0, 0], sizes = [1, 1, 8, 3], strides = [1, 1, 1, 1]} : vector<3x3x8x3xf32> to vector<1x1x8x3xf32>
    %186 = vector.shape_cast %185 : vector<1x1x8x3xf32> to vector<8x3xf32>
    %187 = vector.extract_strided_slice %163 {offsets = [0, 17], sizes = [3, 222], strides = [1, 1]} : vector<3x256xf32> to vector<3x222xf32>
    %cst_66 = arith.constant dense<0.000000e+00> : vector<8x222xf32>
    %188 = tpu.matmul %186, %187, %cst_66 {dimension_numbers = #tpu.dot_dimension_numbers<[1], [0], [0], [1], [0, 0, 1, 1], [], []>} : vector<8x3xf32>, vector<3x222xf32>, vector<8x222xf32> -> vector<8x222xf32>
    %189 = arith.addf %184, %188 : vector<8x222xf32>
    %190 = vector.extract_strided_slice %1 {offsets = [1, 2, 0, 0], sizes = [1, 1, 8, 3], strides = [1, 1, 1, 1]} : vector<3x3x8x3xf32> to vector<1x1x8x3xf32>
    %191 = vector.shape_cast %190 : vector<1x1x8x3xf32> to vector<8x3xf32>
    %192 = vector.extract_strided_slice %163 {offsets = [0, 18], sizes = [3, 222], strides = [1, 1]} : vector<3x256xf32> to vector<3x222xf32>
    %cst_67 = arith.constant dense<0.000000e+00> : vector<8x222xf32>
    %193 = tpu.matmul %191, %192, %cst_67 {dimension_numbers = #tpu.dot_dimension_numbers<[1], [0], [0], [1], [0, 0, 1, 1], [], []>} : vector<8x3xf32>, vector<3x222xf32>, vector<8x222xf32> -> vector<8x222xf32>
    %194 = arith.addf %189, %193 : vector<8x222xf32>
    %195 = vector.extract_strided_slice %1 {offsets = [2, 0, 0, 0], sizes = [1, 1, 8, 3], strides = [1, 1, 1, 1]} : vector<3x3x8x3xf32> to vector<1x1x8x3xf32>
    %196 = vector.shape_cast %195 : vector<1x1x8x3xf32> to vector<8x3xf32>
    %197 = vector.extract_strided_slice %163 {offsets = [0, 32], sizes = [3, 222], strides = [1, 1]} : vector<3x256xf32> to vector<3x222xf32>
    %cst_68 = arith.constant dense<0.000000e+00> : vector<8x222xf32>
    %198 = tpu.matmul %196, %197, %cst_68 {dimension_numbers = #tpu.dot_dimension_numbers<[1], [0], [0], [1], [0, 0, 1, 1], [], []>} : vector<8x3xf32>, vector<3x222xf32>, vector<8x222xf32> -> vector<8x222xf32>
    %199 = arith.addf %194, %198 : vector<8x222xf32>
    %200 = vector.extract_strided_slice %1 {offsets = [2, 1, 0, 0], sizes = [1, 1, 8, 3], strides = [1, 1, 1, 1]} : vector<3x3x8x3xf32> to vector<1x1x8x3xf32>
    %201 = vector.shape_cast %200 : vector<1x1x8x3xf32> to vector<8x3xf32>
    %202 = vector.extract_strided_slice %163 {offsets = [0, 33], sizes = [3, 222], strides = [1, 1]} : vector<3x256xf32> to vector<3x222xf32>
    %cst_69 = arith.constant dense<0.000000e+00> : vector<8x222xf32>
    %203 = tpu.matmul %201, %202, %cst_69 {dimension_numbers = #tpu.dot_dimension_numbers<[1], [0], [0], [1], [0, 0, 1, 1], [], []>} : vector<8x3xf32>, vector<3x222xf32>, vector<8x222xf32> -> vector<8x222xf32>
    %204 = arith.addf %199, %203 : vector<8x222xf32>
    %205 = vector.extract_strided_slice %1 {offsets = [2, 2, 0, 0], sizes = [1, 1, 8, 3], strides = [1, 1, 1, 1]} : vector<3x3x8x3xf32> to vector<1x1x8x3xf32>
    %206 = vector.shape_cast %205 : vector<1x1x8x3xf32> to vector<8x3xf32>
    %207 = vector.extract_strided_slice %163 {offsets = [0, 34], sizes = [3, 222], strides = [1, 1]} : vector<3x256xf32> to vector<3x222xf32>
    %cst_70 = arith.constant dense<0.000000e+00> : vector<8x222xf32>
    %208 = tpu.matmul %206, %207, %cst_70 {dimension_numbers = #tpu.dot_dimension_numbers<[1], [0], [0], [1], [0, 0, 1, 1], [], []>} : vector<8x3xf32>, vector<3x222xf32>, vector<8x222xf32> -> vector<8x222xf32>
    %209 = arith.addf %204, %208 : vector<8x222xf32>
    %210 = vector.broadcast %2 : vector<8x1xf32> to vector<8x222xf32>
    %211 = arith.addf %209, %210 : vector<8x222xf32>
    %cst_71 = arith.constant 0.000000e+00 : f32
    %212 = vector.broadcast %cst_71 : f32 to vector<8x222xf32>
    %213 = arith.maximumf %211, %212 : vector<8x222xf32>
    %214 = vector.extract_strided_slice %213 {offsets = [0, 0], sizes = [8, 205], strides = [1, 1]} : vector<8x222xf32> to vector<8x205xf32>
    %215 = vector.extract_strided_slice %213 {offsets = [0, 1], sizes = [8, 205], strides = [1, 1]} : vector<8x222xf32> to vector<8x205xf32>
    %216 = arith.maximumf %214, %215 : vector<8x205xf32>
    %217 = vector.extract_strided_slice %213 {offsets = [0, 16], sizes = [8, 205], strides = [1, 1]} : vector<8x222xf32> to vector<8x205xf32>
    %218 = vector.extract_strided_slice %213 {offsets = [0, 17], sizes = [8, 205], strides = [1, 1]} : vector<8x222xf32> to vector<8x205xf32>
    %219 = arith.maximumf %217, %218 : vector<8x205xf32>
    %220 = arith.maximumf %216, %219 : vector<8x205xf32>
    %cst_72 = arith.constant dense<0.000000e+00> : vector<8x49xf32>
    %221 = tpu.matmul %220, %9, %cst_72 {dimension_numbers = #tpu.dot_dimension_numbers<[1], [0], [0], [1], [0, 0, 1, 1], [], []>} : vector<8x205xf32>, vector<205x49xf32>, vector<8x49xf32> -> vector<8x49xf32>
    %cst_73 = arith.constant 0.000000e+00 : f32
    %222 = vector.broadcast %cst_73 : f32 to vector<16x41xf32>
    %223 = vector.extract_strided_slice %3 {offsets = [0, 0, 0, 0], sizes = [1, 1, 16, 8], strides = [1, 1, 1, 1]} : vector<2x2x16x8xf32> to vector<1x1x16x8xf32>
    %224 = vector.shape_cast %223 : vector<1x1x16x8xf32> to vector<16x8xf32>
    %225 = vector.extract_strided_slice %221 {offsets = [0, 0], sizes = [8, 41], strides = [1, 1]} : vector<8x49xf32> to vector<8x41xf32>
    %cst_74 = arith.constant dense<0.000000e+00> : vector<16x41xf32>
    %226 = tpu.matmul %224, %225, %cst_74 {dimension_numbers = #tpu.dot_dimension_numbers<[1], [0], [0], [1], [0, 0, 1, 1], [], []>} : vector<16x8xf32>, vector<8x41xf32>, vector<16x41xf32> -> vector<16x41xf32>
    %227 = arith.addf %222, %226 : vector<16x41xf32>
    %228 = vector.extract_strided_slice %3 {offsets = [0, 1, 0, 0], sizes = [1, 1, 16, 8], strides = [1, 1, 1, 1]} : vector<2x2x16x8xf32> to vector<1x1x16x8xf32>
    %229 = vector.shape_cast %228 : vector<1x1x16x8xf32> to vector<16x8xf32>
    %230 = vector.extract_strided_slice %221 {offsets = [0, 1], sizes = [8, 41], strides = [1, 1]} : vector<8x49xf32> to vector<8x41xf32>
    %cst_75 = arith.constant dense<0.000000e+00> : vector<16x41xf32>
    %231 = tpu.matmul %229, %230, %cst_75 {dimension_numbers = #tpu.dot_dimension_numbers<[1], [0], [0], [1], [0, 0, 1, 1], [], []>} : vector<16x8xf32>, vector<8x41xf32>, vector<16x41xf32> -> vector<16x41xf32>
    %232 = arith.addf %227, %231 : vector<16x41xf32>
    %233 = vector.extract_strided_slice %3 {offsets = [1, 0, 0, 0], sizes = [1, 1, 16, 8], strides = [1, 1, 1, 1]} : vector<2x2x16x8xf32> to vector<1x1x16x8xf32>
    %234 = vector.shape_cast %233 : vector<1x1x16x8xf32> to vector<16x8xf32>
    %235 = vector.extract_strided_slice %221 {offsets = [0, 7], sizes = [8, 41], strides = [1, 1]} : vector<8x49xf32> to vector<8x41xf32>
    %cst_76 = arith.constant dense<0.000000e+00> : vector<16x41xf32>
    %236 = tpu.matmul %234, %235, %cst_76 {dimension_numbers = #tpu.dot_dimension_numbers<[1], [0], [0], [1], [0, 0, 1, 1], [], []>} : vector<16x8xf32>, vector<8x41xf32>, vector<16x41xf32> -> vector<16x41xf32>
    %237 = arith.addf %232, %236 : vector<16x41xf32>
    %238 = vector.extract_strided_slice %3 {offsets = [1, 1, 0, 0], sizes = [1, 1, 16, 8], strides = [1, 1, 1, 1]} : vector<2x2x16x8xf32> to vector<1x1x16x8xf32>
    %239 = vector.shape_cast %238 : vector<1x1x16x8xf32> to vector<16x8xf32>
    %240 = vector.extract_strided_slice %221 {offsets = [0, 8], sizes = [8, 41], strides = [1, 1]} : vector<8x49xf32> to vector<8x41xf32>
    %cst_77 = arith.constant dense<0.000000e+00> : vector<16x41xf32>
    %241 = tpu.matmul %239, %240, %cst_77 {dimension_numbers = #tpu.dot_dimension_numbers<[1], [0], [0], [1], [0, 0, 1, 1], [], []>} : vector<16x8xf32>, vector<8x41xf32>, vector<16x41xf32> -> vector<16x41xf32>
    %242 = arith.addf %237, %241 : vector<16x41xf32>
    %243 = vector.broadcast %4 : vector<16x1xf32> to vector<16x41xf32>
    %244 = arith.addf %242, %243 : vector<16x41xf32>
    %cst_78 = arith.constant 0.000000e+00 : f32
    %245 = vector.broadcast %cst_78 : f32 to vector<16x41xf32>
    %246 = arith.maximumf %244, %245 : vector<16x41xf32>
    %247 = vector.extract_strided_slice %246 {offsets = [0, 0], sizes = [16, 33], strides = [1, 1]} : vector<16x41xf32> to vector<16x33xf32>
    %248 = vector.extract_strided_slice %246 {offsets = [0, 1], sizes = [16, 33], strides = [1, 1]} : vector<16x41xf32> to vector<16x33xf32>
    %249 = arith.maximumf %247, %248 : vector<16x33xf32>
    %250 = vector.extract_strided_slice %246 {offsets = [0, 7], sizes = [16, 33], strides = [1, 1]} : vector<16x41xf32> to vector<16x33xf32>
    %251 = vector.extract_strided_slice %246 {offsets = [0, 8], sizes = [16, 33], strides = [1, 1]} : vector<16x41xf32> to vector<16x33xf32>
    %252 = arith.maximumf %250, %251 : vector<16x33xf32>
    %253 = arith.maximumf %249, %252 : vector<16x33xf32>
    %cst_79 = arith.constant dense<0.000000e+00> : vector<16x9xf32>
    %254 = tpu.matmul %253, %10, %cst_79 {dimension_numbers = #tpu.dot_dimension_numbers<[1], [0], [0], [1], [0, 0, 1, 1], [], []>} : vector<16x33xf32>, vector<33x9xf32>, vector<16x9xf32> -> vector<16x9xf32>
    %cst_80 = arith.constant 0.000000e+00 : f32
    %255 = vector.broadcast %cst_80 : f32 to vector<32x1xf32>
    %256 = vector.extract_strided_slice %5 {offsets = [0, 0, 0], sizes = [1, 32, 16], strides = [1, 1, 1]} : vector<9x32x16xf32> to vector<1x32x16xf32>
    %257 = vector.shape_cast %256 : vector<1x32x16xf32> to vector<32x16xf32>
    %258 = vector.extract_strided_slice %254 {offsets = [0, 0], sizes = [16, 1], strides = [1, 1]} : vector<16x9xf32> to vector<16x1xf32>
    %cst_81 = arith.constant dense<0.000000e+00> : vector<32x1xf32>
    %259 = tpu.matmul %257, %258, %cst_81 {dimension_numbers = #tpu.dot_dimension_numbers<[1], [0], [0], [1], [0, 0, 1, 1], [], []>} : vector<32x16xf32>, vector<16x1xf32>, vector<32x1xf32> -> vector<32x1xf32>
    %260 = arith.addf %255, %259 : vector<32x1xf32>
    %261 = vector.extract_strided_slice %5 {offsets = [1, 0, 0], sizes = [1, 32, 16], strides = [1, 1, 1]} : vector<9x32x16xf32> to vector<1x32x16xf32>
    %262 = vector.shape_cast %261 : vector<1x32x16xf32> to vector<32x16xf32>
    %263 = vector.extract_strided_slice %254 {offsets = [0, 1], sizes = [16, 1], strides = [1, 1]} : vector<16x9xf32> to vector<16x1xf32>
    %cst_82 = arith.constant dense<0.000000e+00> : vector<32x1xf32>
    %264 = tpu.matmul %262, %263, %cst_82 {dimension_numbers = #tpu.dot_dimension_numbers<[1], [0], [0], [1], [0, 0, 1, 1], [], []>} : vector<32x16xf32>, vector<16x1xf32>, vector<32x1xf32> -> vector<32x1xf32>
    %265 = arith.addf %260, %264 : vector<32x1xf32>
    %266 = vector.extract_strided_slice %5 {offsets = [2, 0, 0], sizes = [1, 32, 16], strides = [1, 1, 1]} : vector<9x32x16xf32> to vector<1x32x16xf32>
    %267 = vector.shape_cast %266 : vector<1x32x16xf32> to vector<32x16xf32>
    %268 = vector.extract_strided_slice %254 {offsets = [0, 2], sizes = [16, 1], strides = [1, 1]} : vector<16x9xf32> to vector<16x1xf32>
    %cst_83 = arith.constant dense<0.000000e+00> : vector<32x1xf32>
    %269 = tpu.matmul %267, %268, %cst_83 {dimension_numbers = #tpu.dot_dimension_numbers<[1], [0], [0], [1], [0, 0, 1, 1], [], []>} : vector<32x16xf32>, vector<16x1xf32>, vector<32x1xf32> -> vector<32x1xf32>
    %270 = arith.addf %265, %269 : vector<32x1xf32>
    %271 = vector.extract_strided_slice %5 {offsets = [3, 0, 0], sizes = [1, 32, 16], strides = [1, 1, 1]} : vector<9x32x16xf32> to vector<1x32x16xf32>
    %272 = vector.shape_cast %271 : vector<1x32x16xf32> to vector<32x16xf32>
    %273 = vector.extract_strided_slice %254 {offsets = [0, 3], sizes = [16, 1], strides = [1, 1]} : vector<16x9xf32> to vector<16x1xf32>
    %cst_84 = arith.constant dense<0.000000e+00> : vector<32x1xf32>
    %274 = tpu.matmul %272, %273, %cst_84 {dimension_numbers = #tpu.dot_dimension_numbers<[1], [0], [0], [1], [0, 0, 1, 1], [], []>} : vector<32x16xf32>, vector<16x1xf32>, vector<32x1xf32> -> vector<32x1xf32>
    %275 = arith.addf %270, %274 : vector<32x1xf32>
    %276 = vector.extract_strided_slice %5 {offsets = [4, 0, 0], sizes = [1, 32, 16], strides = [1, 1, 1]} : vector<9x32x16xf32> to vector<1x32x16xf32>
    %277 = vector.shape_cast %276 : vector<1x32x16xf32> to vector<32x16xf32>
    %278 = vector.extract_strided_slice %254 {offsets = [0, 4], sizes = [16, 1], strides = [1, 1]} : vector<16x9xf32> to vector<16x1xf32>
    %cst_85 = arith.constant dense<0.000000e+00> : vector<32x1xf32>
    %279 = tpu.matmul %277, %278, %cst_85 {dimension_numbers = #tpu.dot_dimension_numbers<[1], [0], [0], [1], [0, 0, 1, 1], [], []>} : vector<32x16xf32>, vector<16x1xf32>, vector<32x1xf32> -> vector<32x1xf32>
    %280 = arith.addf %275, %279 : vector<32x1xf32>
    %281 = vector.extract_strided_slice %5 {offsets = [5, 0, 0], sizes = [1, 32, 16], strides = [1, 1, 1]} : vector<9x32x16xf32> to vector<1x32x16xf32>
    %282 = vector.shape_cast %281 : vector<1x32x16xf32> to vector<32x16xf32>
    %283 = vector.extract_strided_slice %254 {offsets = [0, 5], sizes = [16, 1], strides = [1, 1]} : vector<16x9xf32> to vector<16x1xf32>
    %cst_86 = arith.constant dense<0.000000e+00> : vector<32x1xf32>
    %284 = tpu.matmul %282, %283, %cst_86 {dimension_numbers = #tpu.dot_dimension_numbers<[1], [0], [0], [1], [0, 0, 1, 1], [], []>} : vector<32x16xf32>, vector<16x1xf32>, vector<32x1xf32> -> vector<32x1xf32>
    %285 = arith.addf %280, %284 : vector<32x1xf32>
    %286 = vector.extract_strided_slice %5 {offsets = [6, 0, 0], sizes = [1, 32, 16], strides = [1, 1, 1]} : vector<9x32x16xf32> to vector<1x32x16xf32>
    %287 = vector.shape_cast %286 : vector<1x32x16xf32> to vector<32x16xf32>
    %288 = vector.extract_strided_slice %254 {offsets = [0, 6], sizes = [16, 1], strides = [1, 1]} : vector<16x9xf32> to vector<16x1xf32>
    %cst_87 = arith.constant dense<0.000000e+00> : vector<32x1xf32>
    %289 = tpu.matmul %287, %288, %cst_87 {dimension_numbers = #tpu.dot_dimension_numbers<[1], [0], [0], [1], [0, 0, 1, 1], [], []>} : vector<32x16xf32>, vector<16x1xf32>, vector<32x1xf32> -> vector<32x1xf32>
    %290 = arith.addf %285, %289 : vector<32x1xf32>
    %291 = vector.extract_strided_slice %5 {offsets = [7, 0, 0], sizes = [1, 32, 16], strides = [1, 1, 1]} : vector<9x32x16xf32> to vector<1x32x16xf32>
    %292 = vector.shape_cast %291 : vector<1x32x16xf32> to vector<32x16xf32>
    %293 = vector.extract_strided_slice %254 {offsets = [0, 7], sizes = [16, 1], strides = [1, 1]} : vector<16x9xf32> to vector<16x1xf32>
    %cst_88 = arith.constant dense<0.000000e+00> : vector<32x1xf32>
    %294 = tpu.matmul %292, %293, %cst_88 {dimension_numbers = #tpu.dot_dimension_numbers<[1], [0], [0], [1], [0, 0, 1, 1], [], []>} : vector<32x16xf32>, vector<16x1xf32>, vector<32x1xf32> -> vector<32x1xf32>
    %295 = arith.addf %290, %294 : vector<32x1xf32>
    %296 = vector.extract_strided_slice %5 {offsets = [8, 0, 0], sizes = [1, 32, 16], strides = [1, 1, 1]} : vector<9x32x16xf32> to vector<1x32x16xf32>
    %297 = vector.shape_cast %296 : vector<1x32x16xf32> to vector<32x16xf32>
    %298 = vector.extract_strided_slice %254 {offsets = [0, 8], sizes = [16, 1], strides = [1, 1]} : vector<16x9xf32> to vector<16x1xf32>
    %cst_89 = arith.constant dense<0.000000e+00> : vector<32x1xf32>
    %299 = tpu.matmul %297, %298, %cst_89 {dimension_numbers = #tpu.dot_dimension_numbers<[1], [0], [0], [1], [0, 0, 1, 1], [], []>} : vector<32x16xf32>, vector<16x1xf32>, vector<32x1xf32> -> vector<32x1xf32>
    %300 = arith.addf %295, %299 : vector<32x1xf32>
    %301 = arith.addf %300, %6 : vector<32x1xf32>
    %cst_90 = arith.constant 0.000000e+00 : f32
    %302 = vector.broadcast %cst_90 : f32 to vector<32x1xf32>
    %303 = arith.maximumf %301, %302 : vector<32x1xf32>
    %cst_91 = arith.constant dense<0.000000e+00> : vector<1x1xf32>
    %304 = tpu.matmul %7, %303, %cst_91 {dimension_numbers = #tpu.dot_dimension_numbers<[1], [0], [0], [1], [0, 0, 1, 1], [], []>} : vector<1x32xf32>, vector<32x1xf32>, vector<1x1xf32> -> vector<1x1xf32>
    %305 = arith.addf %304, %8 : vector<1x1xf32>
    %cst_92 = arith.constant 0.000000e+00 : f32
    %306 = vector.broadcast %cst_92 : f32 to vector<1x1xf32>
    %307 = arith.subf %306, %305 : vector<1x1xf32>
    %308 = math.exp %307 : vector<1x1xf32>
    %cst_93 = arith.constant 1.000000e+00 : f32
    %309 = vector.broadcast %cst_93 : f32 to vector<1x1xf32>
    %310 = arith.addf %309, %308 : vector<1x1xf32>
    %311 = tpu.reciprocal %310 {approx = true} : vector<1x1xf32> -> vector<1x1xf32>
    %c1 = arith.constant 1 : index
    %c0_94 = arith.constant 0 : index
    %312 = vector.load %arg11[%c1, %c0_94] : memref<2x1xf32, #tpu.memory_space<vmem>>, vector<1x1xf32>
    tpu.vector_store %arg11[%c1, %c0_94], %311 {strides = array<i32>} : memref<2x1xf32, #tpu.memory_space<vmem>>, vector<1x1xf32>,
    return
  }
}

</mosaic_0001>

<llo_original>
// kernel: custom_cnn_forward.1
$region0: #{custom_cnn_forward.1}
  #allocation0 [shape = 'u32[]', space=smem, size = 0x4, offset = 0x4, fixed_abs, tag = 'smem constant byte address 0x4 - core index']
  #allocation1 [shape = 'u32[72,128]{1,0:T(1,128)}', space=vmem, size = 0x9000, scoped, tag = 'internal scratch']
  #allocation2 [shape = 'f32[1,1]{1,0:T(1,128)S(1)}', space=vmem, size = 0x200, scoped, tag = 'scoped memory for custom_cnn_forward.1']
  %s0 = inlined_call_operand.vmem [shape: f32[2,3,256], index: 0, kind: input, shape index: {}]
  %s1 = inlined_call_operand.vmem [shape: f32[3,3,8,3], index: 1, kind: input, shape index: {}]
  %s2 = inlined_call_operand.vmem [shape: f32[8,1], index: 2, kind: input, shape index: {}]
  %s3 = inlined_call_operand.vmem [shape: f32[2,2,16,8], index: 3, kind: input, shape index: {}]
  %s4 = inlined_call_operand.vmem [shape: f32[16,1], index: 4, kind: input, shape index: {}]
  %s5 = inlined_call_operand.vmem [shape: f32[9,32,16], index: 5, kind: input, shape index: {}]
  %s6 = inlined_call_operand.vmem [shape: f32[32,1], index: 6, kind: input, shape index: {}]
  %s7 = inlined_call_operand.vmem [shape: f32[1,32], index: 7, kind: input, shape index: {}]
  %s8 = inlined_call_operand.<no memory space> [shape: f32[1,1], index: 8, kind: input, shape index: {}]
  %s9 = inlined_call_operand.vmem [shape: f32[205,49], index: 9, kind: input, shape index: {}]
  %s10 = inlined_call_operand.vmem [shape: f32[33,9], index: 10, kind: input, shape index: {}]
  %s11 = inlined_call_operand.vmem [shape: f32[2,1], index: 11, kind: output, shape index: {}]
  %s12 = sld [smem:[#allocation0]]
  $region54: #{custom_cnn_forward.1} parent=0
    _
  %s14 = ssub.s32 1, %s12
  %s15 = scalar_select 0, %s14, %s12
  %v16 = vstv %s8
  %17 = vst [vmem:[#allocation2] sm:$0x1] %v16
  // Predicated region
  $region2: #{custom_cnn_forward.1} parent=0 // pred_check
    _
  $region3: #{custom_cnn_forward.1} parent=0 // pred_check_branch
    %19 = sbr.rel (0) target = $region5
  $region4: #{custom_cnn_forward.1} parent=0 // pred_region
    _
  $region5: #{custom_cnn_forward.1} parent=0 // pred_fallthru
    _
  // Predicated region
  $region6: #{custom_cnn_forward.1} parent=0 // pred_check
    _
  $region7: #{custom_cnn_forward.1} parent=0 // pred_check_branch
    %21 = sbr.rel (0) target = $region9
  $region8: #{custom_cnn_forward.1} parent=0 // pred_region
    _
  $region9: #{custom_cnn_forward.1} parent=0 // pred_fallthru
    _
  // Predicated region
  $region10: #{custom_cnn_forward.1} parent=0 // pred_check
    _
  $region11: #{custom_cnn_forward.1} parent=0 // pred_check_branch
    %23 = sbr.rel (0) target = $region13
  $region12: #{custom_cnn_forward.1} parent=0 // pred_region
    _
  $region13: #{custom_cnn_forward.1} parent=0 // pred_fallthru
    _
  // Predicated region
  $region14: #{custom_cnn_forward.1} parent=0 // pred_check
    _
  $region15: #{custom_cnn_forward.1} parent=0 // pred_check_branch
    %25 = sbr.rel (0) target = $region17
  $region16: #{custom_cnn_forward.1} parent=0 // pred_region
    _
  $region17: #{custom_cnn_forward.1} parent=0 // pred_fallthru
    _
  // Predicated region
  $region18: #{custom_cnn_forward.1} parent=0 // pred_check
    _
  $region19: #{custom_cnn_forward.1} parent=0 // pred_check_branch
    %27 = sbr.rel (0) target = $region21
  $region20: #{custom_cnn_forward.1} parent=0 // pred_region
    _
  $region21: #{custom_cnn_forward.1} parent=0 // pred_fallthru
    _
  // Predicated region
  $region22: #{custom_cnn_forward.1} parent=0 // pred_check
    _
  $region23: #{custom_cnn_forward.1} parent=0 // pred_check_branch
    %29 = sbr.rel (0) target = $region25
  $region24: #{custom_cnn_forward.1} parent=0 // pred_region
    _
  $region25: #{custom_cnn_forward.1} parent=0 // pred_fallthru
    _
  // Predicated region
  $region26: #{custom_cnn_forward.1} parent=0 // pred_check
    _
  $region27: #{custom_cnn_forward.1} parent=0 // pred_check_branch
    %31 = sbr.rel (0) target = $region29
  $region28: #{custom_cnn_forward.1} parent=0 // pred_region
    _
  $region29: #{custom_cnn_forward.1} parent=0 // pred_fallthru
    _
  // Predicated region
  $region30: #{custom_cnn_forward.1} parent=0 // pred_check
    _
  $region31: #{custom_cnn_forward.1} parent=0 // pred_check_branch
    %33 = sbr.rel (0) target = $region33
  $region32: #{custom_cnn_forward.1} parent=0 // pred_region
    _
  $region33: #{custom_cnn_forward.1} parent=0 // pred_fallthru
    _
  // Predicated region
  $region34: #{custom_cnn_forward.1} parent=0 // pred_check
    _
  $region35: #{custom_cnn_forward.1} parent=0 // pred_check_branch
    %35 = sbr.rel (0) target = $region37
  $region36: #{custom_cnn_forward.1} parent=0 // pred_region
    _
  $region37: #{custom_cnn_forward.1} parent=0 // pred_fallthru
    _
  // Predicated region
  $region38: #{custom_cnn_forward.1} parent=0 // pred_check
    _
  $region39: #{custom_cnn_forward.1} parent=0 // pred_check_branch
    %37 = sbr.rel (0) target = $region41
  $region40: #{custom_cnn_forward.1} parent=0 // pred_region
    _
  $region41: #{custom_cnn_forward.1} parent=0 // pred_fallthru
    _
  // Predicated region
  $region42: #{custom_cnn_forward.1} parent=0 // pred_check
    _
  $region43: #{custom_cnn_forward.1} parent=0 // pred_check_branch
    %39 = sbr.rel (0) target = $region45
  $region44: #{custom_cnn_forward.1} parent=0 // pred_region
    _
  $region45: #{custom_cnn_forward.1} parent=0 // pred_fallthru
    _
  %v40 = vld [vmem:[%s0] sm:$0x77]
  %v41 = vld [vmem:[%s0 + $0x8] sm:$0x77]
  %v42 = vld [vmem:[%s1] sm:$0xff]
  %v43 = vld [vmem:[%s1 + $0x8] sm:$0xff]
  %v44 = vld [vmem:[%s1 + $0x10] sm:$0xff]
  %v45 = vld [vmem:[%s1 + $0x18] sm:$0xff]
  %v46 = vld [vmem:[%s1 + $0x20] sm:$0xff]
  %v47 = vld [vmem:[%s1 + $0x28] sm:$0xff]
  %v48 = vld [vmem:[%s1 + $0x30] sm:$0xff]
  %v49 = vld [vmem:[%s1 + $0x38] sm:$0xff]
  %v50 = vld [vmem:[%s1 + $0x40] sm:$0xff]
  %v51 = vld [vmem:[%s2] sm:$0xff]
  %v52 = vld [vmem:[%s3] sm:$0xff]
  %v53 = vld [vmem:[%s3 + $0x8] sm:$0xff]
  %v54 = vld [vmem:[%s3 + $0x10] sm:$0xff]
  %v55 = vld [vmem:[%s3 + $0x18] sm:$0xff]
  %v56 = vld [vmem:[%s3 + $0x20] sm:$0xff]
  %v57 = vld [vmem:[%s3 + $0x28] sm:$0xff]
  %v58 = vld [vmem:[%s3 + $0x30] sm:$0xff]
  %v59 = vld [vmem:[%s3 + $0x38] sm:$0xff]
  %v60 = vld [vmem:[%s4] sm:$0xff]
  %v61 = vld [vmem:[%s4 + $0x8] sm:$0xff]
  %v62 = vld [vmem:[%s5] sm:$0xff]
  %v63 = vld [vmem:[%s5 + $0x8] sm:$0xff]
  %v64 = vld [vmem:[%s5 + $0x10] sm:$0xff]
  %v65 = vld [vmem:[%s5 + $0x18] sm:$0xff]
  %v66 = vld [vmem:[%s5 + $0x20] sm:$0xff]
  %v67 = vld [vmem:[%s5 + $0x28] sm:$0xff]
  %v68 = vld [vmem:[%s5 + $0x30] sm:$0xff]
  %v69 = vld [vmem:[%s5 + $0x38] sm:$0xff]
  %v70 = vld [vmem:[%s5 + $0x40] sm:$0xff]
  %v71 = vld [vmem:[%s5 + $0x48] sm:$0xff]
  %v72 = vld [vmem:[%s5 + $0x50] sm:$0xff]
  %v73 = vld [vmem:[%s5 + $0x58] sm:$0xff]
  %v74 = vld [vmem:[%s5 + $0x60] sm:$0xff]
  %v75 = vld [vmem:[%s5 + $0x68] sm:$0xff]
  %v76 = vld [vmem:[%s5 + $0x70] sm:$0xff]
  %v77 = vld [vmem:[%s5 + $0x78] sm:$0xff]
  %v78 = vld [vmem:[%s5 + $0x80] sm:$0xff]
  %v79 = vld [vmem:[%s5 + $0x88] sm:$0xff]
  %v80 = vld [vmem:[%s5 + $0x90] sm:$0xff]
  %v81 = vld [vmem:[%s5 + $0x98] sm:$0xff]
  %v82 = vld [vmem:[%s5 + $0xa0] sm:$0xff]
  %v83 = vld [vmem:[%s5 + $0xa8] sm:$0xff]
  %v84 = vld [vmem:[%s5 + $0xb0] sm:$0xff]
  %v85 = vld [vmem:[%s5 + $0xb8] sm:$0xff]
  %v86 = vld [vmem:[%s5 + $0xc0] sm:$0xff]
  %v87 = vld [vmem:[%s5 + $0xc8] sm:$0xff]
  %v88 = vld [vmem:[%s5 + $0xd0] sm:$0xff]
  %v89 = vld [vmem:[%s5 + $0xd8] sm:$0xff]
  %v90 = vld [vmem:[%s5 + $0xe0] sm:$0xff]
  %v91 = vld [vmem:[%s5 + $0xe8] sm:$0xff]
  %v92 = vld [vmem:[%s5 + $0xf0] sm:$0xff]
  %v93 = vld [vmem:[%s5 + $0xf8] sm:$0xff]
  %v94 = vld [vmem:[%s5 + $0x100] sm:$0xff]
  %v95 = vld [vmem:[%s5 + $0x108] sm:$0xff]
  %v96 = vld [vmem:[%s5 + $0x110] sm:$0xff]
  %v97 = vld [vmem:[%s5 + $0x118] sm:$0xff]
  %v98 = vld [vmem:[%s6] sm:$0xff]
  %v99 = vld [vmem:[%s6 + $0x8] sm:$0xff]
  %v100 = vld [vmem:[%s6 + $0x10] sm:$0xff]
  %v101 = vld [vmem:[%s6 + $0x18] sm:$0xff]
  %v102 = vld [vmem:[%s7] sm:$0x1]
  %v103 = vld [vmem:[#allocation2] sm:$0x1]
  %v104 = vld [vmem:[%s9] sm:$0xff]
  %v105 = vld [vmem:[%s9 + $0x8] sm:$0xff]
  %v106 = vld [vmem:[%s9 + $0x10] sm:$0xff]
  %v107 = vld [vmem:[%s9 + $0x18] sm:$0xff]
  %v108 = vld [vmem:[%s9 + $0x20] sm:$0xff]
  %v109 = vld [vmem:[%s9 + $0x28] sm:$0xff]
  %v110 = vld [vmem:[%s9 + $0x30] sm:$0xff]
  %v111 = vld [vmem:[%s9 + $0x38] sm:$0xff]
  %v112 = vld [vmem:[%s9 + $0x40] sm:$0xff]
  %v113 = vld [vmem:[%s9 + $0x48] sm:$0xff]
  %v114 = vld [vmem:[%s9 + $0x50] sm:$0xff]
  %v115 = vld [vmem:[%s9 + $0x58] sm:$0xff]
  %v116 = vld [vmem:[%s9 + $0x60] sm:$0xff]
  %v117 = vld [vmem:[%s9 + $0x68] sm:$0xff]
  %v118 = vld [vmem:[%s9 + $0x70] sm:$0xff]
  %v119 = vld [vmem:[%s9 + $0x78] sm:$0xff]
  %v120 = vld [vmem:[%s9 + $0x80] sm:$0xff]
  %v121 = vld [vmem:[%s9 + $0x88] sm:$0xff]
  %v122 = vld [vmem:[%s9 + $0x90] sm:$0xff]
  %v123 = vld [vmem:[%s9 + $0x98] sm:$0xff]
  %v124 = vld [vmem:[%s9 + $0xa0] sm:$0xff]
  %v125 = vld [vmem:[%s9 + $0xa8] sm:$0xff]
  %v126 = vld [vmem:[%s9 + $0xb0] sm:$0xff]
  %v127 = vld [vmem:[%s9 + $0xb8] sm:$0xff]
  %v128 = vld [vmem:[%s9 + $0xc0] sm:$0xff]
  %v129 = vld [vmem:[%s9 + $0xc8] sm:$0x1f]
  %v130 = vld [vmem:[%s10] sm:$0xff]
  %v131 = vld [vmem:[%s10 + $0x8] sm:$0xff]
  %v132 = vld [vmem:[%s10 + $0x10] sm:$0xff]
  %v133 = vld [vmem:[%s10 + $0x18] sm:$0xff]
  %v134 = vld [vmem:[%s10 + $0x20] sm:$0x1]
  %136 = vst [vmem:[#allocation1] ss:$2 sm:$0xff] %v40
  %v137 = vld.sshfl [vmem:[#allocation1] sm:$0xff pattern:$0x75316420]
  %v138 = vld.sshfl [vmem:[#allocation1 + $0x8] sm:$0xff pattern:$0x75316420]
  %139 = vrot.lane.b32.xlu0 %v137, 127
  %v140 = vpop.permute.xlu0 %139
  %141 = vrot.lane.b32.xlu0 %v138, 127
  %v142 = vpop.permute.xlu0 %141
  %vm143 = vcmask 1039360
  %v144 = vsel %vm143, %v140, %v142
  %vm145 = vcmask 23552
  %v147 = vsel %vm145, %v43, 0
  %vm149 = vcmask 1042432
  %v150 = vsel %vm149, %v144, 0
  %v152 = vsel %vm149, %v142, 0
  %154 = vmatpush.msra.mxu0 0.0
  %155 = vmatpush.msra.mxu0 0.0
  %156 = vmatpush.msra.mxu0 0.0
  %157 = vmatpush.msra.mxu0 0.0
  %158 = vmatpush.msra.mxu0 0.0
  %159 = vmatpush.msra.mxu0 0.0
  %160 = vmatpush.msra.mxu0 0.0
  %161 = vmatpush.msra.mxu0 0.0
  %162 = vmatpush.msra.mxu0 0.0
  %163 = vmatpush.msra.mxu0 0.0
  %164 = vmatpush.msra.mxu0 0.0
  %165 = vmatpush.msra.mxu0 0.0
  %166 = vmatpush.msra.mxu0 0.0
  %167 = vmatpush.msra.mxu0 0.0
  %168 = vmatpush.msra.mxu0 0.0
  %169 = vmatpush.msra.mxu0 %v150
  %170 = vmatmul.f32.gmra.mxu0 %v147
  %v171 = vpop.f32.mrf.mxu0
  %v172 = vadd.f32 0.0, %v171
  %173 = vdwg.mxu0
  %174 = vmatpush.msra.mxu0 0.0
  %175 = vmatpush.msra.mxu0 0.0
  %176 = vmatpush.msra.mxu0 0.0
  %177 = vmatpush.msra.mxu0 0.0
  %178 = vmatpush.msra.mxu0 0.0
  %179 = vmatpush.msra.mxu0 0.0
  %180 = vmatpush.msra.mxu0 0.0
  %181 = vmatpush.msra.mxu0 0.0
  %182 = vmatpush.msra.mxu0 0.0
  %183 = vmatpush.msra.mxu0 0.0
  %184 = vmatpush.msra.mxu0 0.0
  %185 = vmatpush.msra.mxu0 0.0
  %186 = vmatpush.msra.mxu0 0.0
  %187 = vmatpush.msra.mxu0 0.0
  %188 = vmatpush.msra.mxu0 0.0
  %189 = vmatpush.msra.mxu0 %v152
  %190 = vmatmul.f32.gmra.mxu0 %v147
  %v191 = vpop.f32.mrf.mxu0
  %v192 = vadd.f32 0.0, %v191
  %193 = vdwg.mxu0
  %194 = vst [vmem:[#allocation1] ss:$2 sm:$0xff] %v40
  %v195 = vld.sshfl [vmem:[#allocation1] sm:$0xff pattern:$0x75316420]
  %v196 = vld.sshfl [vmem:[#allocation1 + $0x8] sm:$0xff pattern:$0x75316420]
  %v198 = vsel %vm145, %v42, 0
  %v200 = vsel %vm149, %v195, 0
  %v202 = vsel %vm149, %v196, 0
  %204 = vmatpush.msra.mxu0 0.0
  %205 = vmatpush.msra.mxu0 0.0
  %206 = vmatpush.msra.mxu0 0.0
  %207 = vmatpush.msra.mxu0 0.0
  %208 = vmatpush.msra.mxu0 0.0
  %209 = vmatpush.msra.mxu0 0.0
  %210 = vmatpush.msra.mxu0 0.0
  %211 = vmatpush.msra.mxu0 0.0
  %212 = vmatpush.msra.mxu0 0.0
  %213 = vmatpush.msra.mxu0 0.0
  %214 = vmatpush.msra.mxu0 0.0
  %215 = vmatpush.msra.mxu0 0.0
  %216 = vmatpush.msra.mxu0 0.0
  %217 = vmatpush.msra.mxu0 0.0
  %218 = vmatpush.msra.mxu0 0.0
  %219 = vmatpush.msra.mxu0 %v200
  %220 = vmatmul.f32.gmra.mxu0 %v198
  %v221 = vpop.f32.mrf.mxu0
  %v222 = vadd.f32 %v172, %v221
  %223 = vdwg.mxu0
  %224 = vmatpush.msra.mxu0 0.0
  %225 = vmatpush.msra.mxu0 0.0
  %226 = vmatpush.msra.mxu0 0.0
  %227 = vmatpush.msra.mxu0 0.0
  %228 = vmatpush.msra.mxu0 0.0
  %229 = vmatpush.msra.mxu0 0.0
  %230 = vmatpush.msra.mxu0 0.0
  %231 = vmatpush.msra.mxu0 0.0
  %232 = vmatpush.msra.mxu0 0.0
  %233 = vmatpush.msra.mxu0 0.0
  %234 = vmatpush.msra.mxu0 0.0
  %235 = vmatpush.msra.mxu0 0.0
  %236 = vmatpush.msra.mxu0 0.0
  %237 = vmatpush.msra.mxu0 0.0
  %238 = vmatpush.msra.mxu0 0.0
  %239 = vmatpush.msra.mxu0 %v202
  %240 = vmatmul.f32.gmra.mxu0 %v198
  %v241 = vpop.f32.mrf.mxu0
  %v242 = vadd.f32 %v192, %v241
  %243 = vdwg.mxu0
  %244 = vst [vmem:[#allocation1] ss:$2 sm:$0xff] %v40
  %v245 = vld.sshfl [vmem:[#allocation1] sm:$0xff pattern:$0x75316420]
  %v246 = vld.sshfl [vmem:[#allocation1 + $0x8] sm:$0xff pattern:$0x75316420]
  %247 = vrot.lane.b32.xlu0 %v245, 126
  %v248 = vpop.permute.xlu0 %247
  %249 = vrot.lane.b32.xlu0 %v246, 126
  %v250 = vpop.permute.xlu0 %249
  %vm251 = vcmask 1031168
  %v252 = vsel %vm251, %v248, %v250
  %v254 = vsel %vm145, %v44, 0
  %v256 = vsel %vm149, %v252, 0
  %v258 = vsel %vm149, %v250, 0
  %260 = vmatpush.msra.mxu0 0.0
  %261 = vmatpush.msra.mxu0 0.0
  %262 = vmatpush.msra.mxu0 0.0
  %263 = vmatpush.msra.mxu0 0.0
  %264 = vmatpush.msra.mxu0 0.0
  %265 = vmatpush.msra.mxu0 0.0
  %266 = vmatpush.msra.mxu0 0.0
  %267 = vmatpush.msra.mxu0 0.0
  %268 = vmatpush.msra.mxu0 0.0
  %269 = vmatpush.msra.mxu0 0.0
  %270 = vmatpush.msra.mxu0 0.0
  %271 = vmatpush.msra.mxu0 0.0
  %272 = vmatpush.msra.mxu0 0.0
  %273 = vmatpush.msra.mxu0 0.0
  %274 = vmatpush.msra.mxu0 0.0
  %275 = vmatpush.msra.mxu0 %v256
  %276 = vmatmul.f32.gmra.mxu0 %v254
  %v277 = vpop.f32.mrf.mxu0
  %v278 = vadd.f32 0.0, %v277
  %279 = vdwg.mxu0
  %280 = vmatpush.msra.mxu0 0.0
  %281 = vmatpush.msra.mxu0 0.0
  %282 = vmatpush.msra.mxu0 0.0
  %283 = vmatpush.msra.mxu0 0.0
  %284 = vmatpush.msra.mxu0 0.0
  %285 = vmatpush.msra.mxu0 0.0
  %286 = vmatpush.msra.mxu0 0.0
  %287 = vmatpush.msra.mxu0 0.0
  %288 = vmatpush.msra.mxu0 0.0
  %289 = vmatpush.msra.mxu0 0.0
  %290 = vmatpush.msra.mxu0 0.0
  %291 = vmatpush.msra.mxu0 0.0
  %292 = vmatpush.msra.mxu0 0.0
  %293 = vmatpush.msra.mxu0 0.0
  %294 = vmatpush.msra.mxu0 0.0
  %295 = vmatpush.msra.mxu0 %v258
  %296 = vmatmul.f32.gmra.mxu0 %v254
  %v297 = vpop.f32.mrf.mxu0
  %v298 = vadd.f32 0.0, %v297
  %299 = vdwg.mxu0
  %v300 = vadd.f32 %v222, %v278
  %v301 = vadd.f32 %v242, %v298
  %302 = vst [vmem:[#allocation1] ss:$2 sm:$0xff] %v40
  %v303 = vld.sshfl [vmem:[#allocation1] sm:$0xff pattern:$0x75316420]
  %v304 = vld.sshfl [vmem:[#allocation1 + $0x8] sm:$0xff pattern:$0x75316420]
  %305 = vrot.lane.b32.xlu0 %v303, 112
  %v306 = vpop.permute.xlu0 %305
  %307 = vrot.lane.b32.xlu0 %v304, 112
  %v308 = vpop.permute.xlu0 %307
  %vm309 = vcmask 916480
  %v310 = vsel %vm309, %v306, %v308
  %v312 = vsel %vm145, %v45, 0
  %v314 = vsel %vm149, %v310, 0
  %v316 = vsel %vm149, %v308, 0
  %318 = vmatpush.msra.mxu0 0.0
  %319 = vmatpush.msra.mxu0 0.0
  %320 = vmatpush.msra.mxu0 0.0
  %321 = vmatpush.msra.mxu0 0.0
  %322 = vmatpush.msra.mxu0 0.0
  %323 = vmatpush.msra.mxu0 0.0
  %324 = vmatpush.msra.mxu0 0.0
  %325 = vmatpush.msra.mxu0 0.0
  %326 = vmatpush.msra.mxu0 0.0
  %327 = vmatpush.msra.mxu0 0.0
  %328 = vmatpush.msra.mxu0 0.0
  %329 = vmatpush.msra.mxu0 0.0
  %330 = vmatpush.msra.mxu0 0.0
  %331 = vmatpush.msra.mxu0 0.0
  %332 = vmatpush.msra.mxu0 0.0
  %333 = vmatpush.msra.mxu0 %v314
  %334 = vmatmul.f32.gmra.mxu0 %v312
  %v335 = vpop.f32.mrf.mxu0
  %v336 = vadd.f32 0.0, %v335
  %337 = vdwg.mxu0
  %338 = vmatpush.msra.mxu0 0.0
  %339 = vmatpush.msra.mxu0 0.0
  %340 = vmatpush.msra.mxu0 0.0
  %341 = vmatpush.msra.mxu0 0.0
  %342 = vmatpush.msra.mxu0 0.0
  %343 = vmatpush.msra.mxu0 0.0
  %344 = vmatpush.msra.mxu0 0.0
  %345 = vmatpush.msra.mxu0 0.0
  %346 = vmatpush.msra.mxu0 0.0
  %347 = vmatpush.msra.mxu0 0.0
  %348 = vmatpush.msra.mxu0 0.0
  %349 = vmatpush.msra.mxu0 0.0
  %350 = vmatpush.msra.mxu0 0.0
  %351 = vmatpush.msra.mxu0 0.0
  %352 = vmatpush.msra.mxu0 0.0
  %353 = vmatpush.msra.mxu0 %v316
  %354 = vmatmul.f32.gmra.mxu0 %v312
  %v355 = vpop.f32.mrf.mxu0
  %v356 = vadd.f32 0.0, %v355
  %357 = vdwg.mxu0
  %v358 = vadd.f32 %v300, %v336
  %v359 = vadd.f32 %v301, %v356
  %360 = vst [vmem:[#allocation1] ss:$2 sm:$0xff] %v40
  %v361 = vld.sshfl [vmem:[#allocation1] sm:$0xff pattern:$0x75316420]
  %v362 = vld.sshfl [vmem:[#allocation1 + $0x8] sm:$0xff pattern:$0x75316420]
  %363 = vrot.lane.b32.xlu0 %v361, 111
  %v364 = vpop.permute.xlu0 %363
  %365 = vrot.lane.b32.xlu0 %v362, 111
  %v366 = vpop.permute.xlu0 %365
  %vm367 = vcmask 908288
  %v368 = vsel %vm367, %v364, %v366
  %v370 = vsel %vm145, %v46, 0
  %v372 = vsel %vm149, %v368, 0
  %v374 = vsel %vm149, %v366, 0
  %376 = vmatpush.msra.mxu0 0.0
  %377 = vmatpush.msra.mxu0 0.0
  %378 = vmatpush.msra.mxu0 0.0
  %379 = vmatpush.msra.mxu0 0.0
  %380 = vmatpush.msra.mxu0 0.0
  %381 = vmatpush.msra.mxu0 0.0
  %382 = vmatpush.msra.mxu0 0.0
  %383 = vmatpush.msra.mxu0 0.0
  %384 = vmatpush.msra.mxu0 0.0
  %385 = vmatpush.msra.mxu0 0.0
  %386 = vmatpush.msra.mxu0 0.0
  %387 = vmatpush.msra.mxu0 0.0
  %388 = vmatpush.msra.mxu0 0.0
  %389 = vmatpush.msra.mxu0 0.0
  %390 = vmatpush.msra.mxu0 0.0
  %391 = vmatpush.msra.mxu0 %v372
  %392 = vmatmul.f32.gmra.mxu0 %v370
  %v393 = vpop.f32.mrf.mxu0
  %v394 = vadd.f32 0.0, %v393
  %395 = vdwg.mxu0
  %396 = vmatpush.msra.mxu0 0.0
  %397 = vmatpush.msra.mxu0 0.0
  %398 = vmatpush.msra.mxu0 0.0
  %399 = vmatpush.msra.mxu0 0.0
  %400 = vmatpush.msra.mxu0 0.0
  %401 = vmatpush.msra.mxu0 0.0
  %402 = vmatpush.msra.mxu0 0.0
  %403 = vmatpush.msra.mxu0 0.0
  %404 = vmatpush.msra.mxu0 0.0
  %405 = vmatpush.msra.mxu0 0.0
  %406 = vmatpush.msra.mxu0 0.0
  %407 = vmatpush.msra.mxu0 0.0
  %408 = vmatpush.msra.mxu0 0.0
  %409 = vmatpush.msra.mxu0 0.0
  %410 = vmatpush.msra.mxu0 0.0
  %411 = vmatpush.msra.mxu0 %v374
  %412 = vmatmul.f32.gmra.mxu0 %v370
  %v413 = vpop.f32.mrf.mxu0
  %v414 = vadd.f32 0.0, %v413
  %415 = vdwg.mxu0
  %v416 = vadd.f32 %v358, %v394
  %v417 = vadd.f32 %v359, %v414
  %418 = vst [vmem:[#allocation1] ss:$2 sm:$0xff] %v40
  %v419 = vld.sshfl [vmem:[#allocation1] sm:$0xff pattern:$0x75316420]
  %v420 = vld.sshfl [vmem:[#allocation1 + $0x8] sm:$0xff pattern:$0x75316420]
  %421 = vrot.lane.b32.xlu0 %v419, 110
  %v422 = vpop.permute.xlu0 %421
  %423 = vrot.lane.b32.xlu0 %v420, 110
  %v424 = vpop.permute.xlu0 %423
  %vm425 = vcmask 900096
  %v426 = vsel %vm425, %v422, %v424
  %v428 = vsel %vm145, %v47, 0
  %v430 = vsel %vm149, %v426, 0
  %v432 = vsel %vm149, %v424, 0
  %434 = vmatpush.msra.mxu0 0.0
  %435 = vmatpush.msra.mxu0 0.0
  %436 = vmatpush.msra.mxu0 0.0
  %437 = vmatpush.msra.mxu0 0.0
  %438 = vmatpush.msra.mxu0 0.0
  %439 = vmatpush.msra.mxu0 0.0
  %440 = vmatpush.msra.mxu0 0.0
  %441 = vmatpush.msra.mxu0 0.0
  %442 = vmatpush.msra.mxu0 0.0
  %443 = vmatpush.msra.mxu0 0.0
  %444 = vmatpush.msra.mxu0 0.0
  %445 = vmatpush.msra.mxu0 0.0
  %446 = vmatpush.msra.mxu0 0.0
  %447 = vmatpush.msra.mxu0 0.0
  %448 = vmatpush.msra.mxu0 0.0
  %449 = vmatpush.msra.mxu0 %v430
  %450 = vmatmul.f32.gmra.mxu0 %v428
  %v451 = vpop.f32.mrf.mxu0
  %v452 = vadd.f32 0.0, %v451
  %453 = vdwg.mxu0
  %454 = vmatpush.msra.mxu0 0.0
  %455 = vmatpush.msra.mxu0 0.0
  %456 = vmatpush.msra.mxu0 0.0
  %457 = vmatpush.msra.mxu0 0.0
  %458 = vmatpush.msra.mxu0 0.0
  %459 = vmatpush.msra.mxu0 0.0
  %460 = vmatpush.msra.mxu0 0.0
  %461 = vmatpush.msra.mxu0 0.0
  %462 = vmatpush.msra.mxu0 0.0
  %463 = vmatpush.msra.mxu0 0.0
  %464 = vmatpush.msra.mxu0 0.0
  %465 = vmatpush.msra.mxu0 0.0
  %466 = vmatpush.msra.mxu0 0.0
  %467 = vmatpush.msra.mxu0 0.0
  %468 = vmatpush.msra.mxu0 0.0
  %469 = vmatpush.msra.mxu0 %v432
  %470 = vmatmul.f32.gmra.mxu0 %v428
  %v471 = vpop.f32.mrf.mxu0
  %v472 = vadd.f32 0.0, %v471
  %473 = vdwg.mxu0
  %v474 = vadd.f32 %v416, %v452
  %v475 = vadd.f32 %v417, %v472
  %476 = vst [vmem:[#allocation1] ss:$2 sm:$0xff] %v40
  %v477 = vld.sshfl [vmem:[#allocation1] sm:$0xff pattern:$0x75316420]
  %v478 = vld.sshfl [vmem:[#allocation1 + $0x8] sm:$0xff pattern:$0x75316420]
  %479 = vrot.lane.b32.xlu0 %v477, 96
  %v480 = vpop.permute.xlu0 %479
  %481 = vrot.lane.b32.xlu0 %v478, 96
  %v482 = vpop.permute.xlu0 %481
  %vm483 = vcmask 785408
  %v484 = vsel %vm483, %v480, %v482
  %v486 = vsel %vm145, %v48, 0
  %v488 = vsel %vm149, %v484, 0
  %v490 = vsel %vm149, %v482, 0
  %492 = vmatpush.msra.mxu0 0.0
  %493 = vmatpush.msra.mxu0 0.0
  %494 = vmatpush.msra.mxu0 0.0
  %495 = vmatpush.msra.mxu0 0.0
  %496 = vmatpush.msra.mxu0 0.0
  %497 = vmatpush.msra.mxu0 0.0
  %498 = vmatpush.msra.mxu0 0.0
  %499 = vmatpush.msra.mxu0 0.0
  %500 = vmatpush.msra.mxu0 0.0
  %501 = vmatpush.msra.mxu0 0.0
  %502 = vmatpush.msra.mxu0 0.0
  %503 = vmatpush.msra.mxu0 0.0
  %504 = vmatpush.msra.mxu0 0.0
  %505 = vmatpush.msra.mxu0 0.0
  %506 = vmatpush.msra.mxu0 0.0
  %507 = vmatpush.msra.mxu0 %v488
  %508 = vmatmul.f32.gmra.mxu0 %v486
  %v509 = vpop.f32.mrf.mxu0
  %v510 = vadd.f32 0.0, %v509
  %511 = vdwg.mxu0
  %512 = vmatpush.msra.mxu0 0.0
  %513 = vmatpush.msra.mxu0 0.0
  %514 = vmatpush.msra.mxu0 0.0
  %515 = vmatpush.msra.mxu0 0.0
  %516 = vmatpush.msra.mxu0 0.0
  %517 = vmatpush.msra.mxu0 0.0
  %518 = vmatpush.msra.mxu0 0.0
  %519 = vmatpush.msra.mxu0 0.0
  %520 = vmatpush.msra.mxu0 0.0
  %521 = vmatpush.msra.mxu0 0.0
  %522 = vmatpush.msra.mxu0 0.0
  %523 = vmatpush.msra.mxu0 0.0
  %524 = vmatpush.msra.mxu0 0.0
  %525 = vmatpush.msra.mxu0 0.0
  %526 = vmatpush.msra.mxu0 0.0
  %527 = vmatpush.msra.mxu0 %v490
  %528 = vmatmul.f32.gmra.mxu0 %v486
  %v529 = vpop.f32.mrf.mxu0
  %v530 = vadd.f32 0.0, %v529
  %531 = vdwg.mxu0
  %v532 = vadd.f32 %v474, %v510
  %v533 = vadd.f32 %v475, %v530
  %534 = vst [vmem:[#allocation1] ss:$2 sm:$0xff] %v40
  %v535 = vld.sshfl [vmem:[#allocation1] sm:$0xff pattern:$0x75316420]
  %v536 = vld.sshfl [vmem:[#allocation1 + $0x8] sm:$0xff pattern:$0x75316420]
  %537 = vrot.lane.b32.xlu0 %v535, 95
  %v538 = vpop.permute.xlu0 %537
  %539 = vrot.lane.b32.xlu0 %v536, 95
  %v540 = vpop.permute.xlu0 %539
  %vm541 = vcmask 777216
  %v542 = vsel %vm541, %v538, %v540
  %v544 = vsel %vm145, %v49, 0
  %v546 = vsel %vm149, %v542, 0
  %v548 = vsel %vm149, %v540, 0
  %550 = vmatpush.msra.mxu0 0.0
  %551 = vmatpush.msra.mxu0 0.0
  %552 = vmatpush.msra.mxu0 0.0
  %553 = vmatpush.msra.mxu0 0.0
  %554 = vmatpush.msra.mxu0 0.0
  %555 = vmatpush.msra.mxu0 0.0
  %556 = vmatpush.msra.mxu0 0.0
  %557 = vmatpush.msra.mxu0 0.0
  %558 = vmatpush.msra.mxu0 0.0
  %559 = vmatpush.msra.mxu0 0.0
  %560 = vmatpush.msra.mxu0 0.0
  %561 = vmatpush.msra.mxu0 0.0
  %562 = vmatpush.msra.mxu0 0.0
  %563 = vmatpush.msra.mxu0 0.0
  %564 = vmatpush.msra.mxu0 0.0
  %565 = vmatpush.msra.mxu0 %v546
  %566 = vmatmul.f32.gmra.mxu0 %v544
  %v567 = vpop.f32.mrf.mxu0
  %v568 = vadd.f32 0.0, %v567
  %569 = vdwg.mxu0
  %570 = vmatpush.msra.mxu0 0.0
  %571 = vmatpush.msra.mxu0 0.0
  %572 = vmatpush.msra.mxu0 0.0
  %573 = vmatpush.msra.mxu0 0.0
  %574 = vmatpush.msra.mxu0 0.0
  %575 = vmatpush.msra.mxu0 0.0
  %576 = vmatpush.msra.mxu0 0.0
  %577 = vmatpush.msra.mxu0 0.0
  %578 = vmatpush.msra.mxu0 0.0
  %579 = vmatpush.msra.mxu0 0.0
  %580 = vmatpush.msra.mxu0 0.0
  %581 = vmatpush.msra.mxu0 0.0
  %582 = vmatpush.msra.mxu0 0.0
  %583 = vmatpush.msra.mxu0 0.0
  %584 = vmatpush.msra.mxu0 0.0
  %585 = vmatpush.msra.mxu0 %v548
  %586 = vmatmul.f32.gmra.mxu0 %v544
  %v587 = vpop.f32.mrf.mxu0
  %v588 = vadd.f32 0.0, %v587
  %589 = vdwg.mxu0
  %v590 = vadd.f32 %v532, %v568
  %v591 = vadd.f32 %v533, %v588
  %592 = vst [vmem:[#allocation1] ss:$2 sm:$0xff] %v40
  %v593 = vld.sshfl [vmem:[#allocation1] sm:$0xff pattern:$0x75316420]
  %v594 = vld.sshfl [vmem:[#allocation1 + $0x8] sm:$0xff pattern:$0x75316420]
  %595 = vrot.lane.b32.xlu0 %v593, 94
  %v596 = vpop.permute.xlu0 %595
  %597 = vrot.lane.b32.xlu0 %v594, 94
  %v598 = vpop.permute.xlu0 %597
  %vm599 = vcmask 769024
  %v600 = vsel %vm599, %v596, %v598
  %v602 = vsel %vm145, %v50, 0
  %v604 = vsel %vm149, %v600, 0
  %v606 = vsel %vm149, %v598, 0
  %608 = vmatpush.msra.mxu0 0.0
  %609 = vmatpush.msra.mxu0 0.0
  %610 = vmatpush.msra.mxu0 0.0
  %611 = vmatpush.msra.mxu0 0.0
  %612 = vmatpush.msra.mxu0 0.0
  %613 = vmatpush.msra.mxu0 0.0
  %614 = vmatpush.msra.mxu0 0.0
  %615 = vmatpush.msra.mxu0 0.0
  %616 = vmatpush.msra.mxu0 0.0
  %617 = vmatpush.msra.mxu0 0.0
  %618 = vmatpush.msra.mxu0 0.0
  %619 = vmatpush.msra.mxu0 0.0
  %620 = vmatpush.msra.mxu0 0.0
  %621 = vmatpush.msra.mxu0 0.0
  %622 = vmatpush.msra.mxu0 0.0
  %623 = vmatpush.msra.mxu0 %v604
  %624 = vmatmul.f32.gmra.mxu0 %v602
  %v625 = vpop.f32.mrf.mxu0
  %v626 = vadd.f32 0.0, %v625
  %627 = vdwg.mxu0
  %628 = vmatpush.msra.mxu0 0.0
  %629 = vmatpush.msra.mxu0 0.0
  %630 = vmatpush.msra.mxu0 0.0
  %631 = vmatpush.msra.mxu0 0.0
  %632 = vmatpush.msra.mxu0 0.0
  %633 = vmatpush.msra.mxu0 0.0
  %634 = vmatpush.msra.mxu0 0.0
  %635 = vmatpush.msra.mxu0 0.0
  %636 = vmatpush.msra.mxu0 0.0
  %637 = vmatpush.msra.mxu0 0.0
  %638 = vmatpush.msra.mxu0 0.0
  %639 = vmatpush.msra.mxu0 0.0
  %640 = vmatpush.msra.mxu0 0.0
  %641 = vmatpush.msra.mxu0 0.0
  %642 = vmatpush.msra.mxu0 0.0
  %643 = vmatpush.msra.mxu0 %v606
  %644 = vmatmul.f32.gmra.mxu0 %v602
  %v645 = vpop.f32.mrf.mxu0
  %v646 = vadd.f32 0.0, %v645
  %647 = vdwg.mxu0
  %v648 = vadd.f32 %v590, %v626
  %v649 = vadd.f32 %v591, %v646
  %651 = vset.pattern.permute.xlu0 0
  %652 = vperm.xlu0 %651, %v51
  %v653 = vpop.permute.xlu0 %652
  %v655 = vadd.f32 %v648, %v653
  %v656 = vadd.f32 %v649, %v653
  %v657 = vmax.f32 %v655, 0.0
  %v658 = vmax.f32 %v656, 0.0
  %661 = vrot.lane.b32.xlu0 %v657, 127
  %v662 = vpop.permute.xlu0 %661
  %663 = vrot.lane.b32.xlu0 %v658, 127
  %v664 = vpop.permute.xlu0 %663
  %v665 = vsel %vm143, %v662, %v664
  %v668 = vmax.f32 %v657, %v665
  %v669 = vmax.f32 %v658, %v664
  %672 = vrot.lane.b32.xlu0 %v668, 112
  %v673 = vpop.permute.xlu0 %672
  %674 = vrot.lane.b32.xlu0 %v669, 112
  %v675 = vpop.permute.xlu0 %674
  %v676 = vsel %vm309, %v673, %v675
  %v679 = vmax.f32 %v668, %v676
  %v680 = vmax.f32 %v669, %v675
  %vm681 = vcmask 629760
  %v683 = vsel %vm681, %v680, 0
  %vm685 = vcmask 1044480
  %v687 = vsel %vm685, %v129, 0
  %689 = vmatpush.msra.mxu0 %v119
  %690 = vmatpush.msra.mxu0 %v118
  %691 = vmatpush.msra.mxu0 %v117
  %692 = vmatpush.msra.mxu0 %v116
  %693 = vmatpush.msra.mxu0 %v115
  %694 = vmatpush.msra.mxu0 %v114
  %695 = vmatpush.msra.mxu0 %v113
  %696 = vmatpush.msra.mxu0 %v112
  %697 = vmatpush.msra.mxu0 %v111
  %698 = vmatpush.msra.mxu0 %v110
  %699 = vmatpush.msra.mxu0 %v109
  %700 = vmatpush.msra.mxu0 %v108
  %701 = vmatpush.msra.mxu0 %v107
  %702 = vmatpush.msra.mxu0 %v106
  %703 = vmatpush.msra.mxu0 %v105
  %704 = vmatpush.msra.mxu0 %v104
  %705 = vmatmul.f32.gmra.mxu0 %v679
  %v706 = vpop.f32.mrf.mxu0
  %v707 = vadd.f32 0.0, %v706
  %708 = vdwg.mxu0
  %709 = vmatpush.msra.mxu0 0.0
  %710 = vmatpush.msra.mxu0 0.0
  %711 = vmatpush.msra.mxu0 0.0
  %712 = vmatpush.msra.mxu0 0.0
  %713 = vmatpush.msra.mxu0 0.0
  %714 = vmatpush.msra.mxu0 0.0
  %715 = vmatpush.msra.mxu0 %v687
  %716 = vmatpush.msra.mxu0 %v128
  %717 = vmatpush.msra.mxu0 %v127
  %718 = vmatpush.msra.mxu0 %v126
  %719 = vmatpush.msra.mxu0 %v125
  %720 = vmatpush.msra.mxu0 %v124
  %721 = vmatpush.msra.mxu0 %v123
  %722 = vmatpush.msra.mxu0 %v122
  %723 = vmatpush.msra.mxu0 %v121
  %724 = vmatpush.msra.mxu0 %v120
  %725 = vmatmul.f32.gmra.mxu0 %v683
  %v726 = vpop.f32.mrf.mxu0
  %v727 = vadd.f32 %v707, %v726
  %728 = vdwg.mxu0
  %730 = vrot.lane.b32.xlu0 %v727, 127
  %v731 = vpop.permute.xlu0 %730
  %vm733 = vcmask 64512
  %v735 = vsel %vm733, %v54, 0
  %v738 = vsel %vm733, %v55, 0
  %740 = vmatpush.msra.mxu0 0.0
  %741 = vmatpush.msra.mxu0 0.0
  %742 = vmatpush.msra.mxu0 0.0
  %743 = vmatpush.msra.mxu0 0.0
  %744 = vmatpush.msra.mxu0 0.0
  %745 = vmatpush.msra.mxu0 0.0
  %746 = vmatpush.msra.mxu0 0.0
  %747 = vmatpush.msra.mxu0 0.0
  %748 = vmatpush.msra.mxu0 0.0
  %749 = vmatpush.msra.mxu0 0.0
  %750 = vmatpush.msra.mxu0 0.0
  %751 = vmatpush.msra.mxu0 0.0
  %752 = vmatpush.msra.mxu0 0.0
  %753 = vmatpush.msra.mxu0 0.0
  %754 = vmatpush.msra.mxu0 0.0
  %755 = vmatpush.msra.mxu0 %v731
  %756 = vmatmul.f32.gmra.mxu0 %v735
  %v757 = vpop.f32.mrf.mxu0
  %v758 = vadd.f32 0.0, %v757
  %759 = vmatmul.f32.gmra.mxu0 %v738
  %v760 = vpop.f32.mrf.mxu0
  %v761 = vadd.f32 0.0, %v760
  %762 = vdwg.mxu0
  %v764 = vsel %vm733, %v52, 0
  %v767 = vsel %vm733, %v53, 0
  %769 = vmatpush.msra.mxu0 0.0
  %770 = vmatpush.msra.mxu0 0.0
  %771 = vmatpush.msra.mxu0 0.0
  %772 = vmatpush.msra.mxu0 0.0
  %773 = vmatpush.msra.mxu0 0.0
  %774 = vmatpush.msra.mxu0 0.0
  %775 = vmatpush.msra.mxu0 0.0
  %776 = vmatpush.msra.mxu0 0.0
  %777 = vmatpush.msra.mxu0 0.0
  %778 = vmatpush.msra.mxu0 0.0
  %779 = vmatpush.msra.mxu0 0.0
  %780 = vmatpush.msra.mxu0 0.0
  %781 = vmatpush.msra.mxu0 0.0
  %782 = vmatpush.msra.mxu0 0.0
  %783 = vmatpush.msra.mxu0 0.0
  %784 = vmatpush.msra.mxu0 %v727
  %785 = vmatmul.f32.gmra.mxu0 %v764
  %v786 = vpop.f32.mrf.mxu0
  %v787 = vadd.f32 %v758, %v786
  %788 = vmatmul.f32.gmra.mxu0 %v767
  %v789 = vpop.f32.mrf.mxu0
  %v790 = vadd.f32 %v761, %v789
  %791 = vdwg.mxu0
  %792 = vrot.lane.b32.xlu0 %v727, 121
  %v793 = vpop.permute.xlu0 %792
  %v796 = vsel %vm733, %v56, 0
  %v799 = vsel %vm733, %v57, 0
  %801 = vmatpush.msra.mxu0 0.0
  %802 = vmatpush.msra.mxu0 0.0
  %803 = vmatpush.msra.mxu0 0.0
  %804 = vmatpush.msra.mxu0 0.0
  %805 = vmatpush.msra.mxu0 0.0
  %806 = vmatpush.msra.mxu0 0.0
  %807 = vmatpush.msra.mxu0 0.0
  %808 = vmatpush.msra.mxu0 0.0
  %809 = vmatpush.msra.mxu0 0.0
  %810 = vmatpush.msra.mxu0 0.0
  %811 = vmatpush.msra.mxu0 0.0
  %812 = vmatpush.msra.mxu0 0.0
  %813 = vmatpush.msra.mxu0 0.0
  %814 = vmatpush.msra.mxu0 0.0
  %815 = vmatpush.msra.mxu0 0.0
  %816 = vmatpush.msra.mxu0 %v793
  %817 = vmatmul.f32.gmra.mxu0 %v796
  %v818 = vpop.f32.mrf.mxu0
  %v819 = vadd.f32 0.0, %v818
  %820 = vmatmul.f32.gmra.mxu0 %v799
  %v821 = vpop.f32.mrf.mxu0
  %v822 = vadd.f32 0.0, %v821
  %823 = vdwg.mxu0
  %v824 = vadd.f32 %v787, %v819
  %v825 = vadd.f32 %v790, %v822
  %826 = vrot.lane.b32.xlu0 %v727, 120
  %v827 = vpop.permute.xlu0 %826
  %v830 = vsel %vm733, %v58, 0
  %v833 = vsel %vm733, %v59, 0
  %835 = vmatpush.msra.mxu0 0.0
  %836 = vmatpush.msra.mxu0 0.0
  %837 = vmatpush.msra.mxu0 0.0
  %838 = vmatpush.msra.mxu0 0.0
  %839 = vmatpush.msra.mxu0 0.0
  %840 = vmatpush.msra.mxu0 0.0
  %841 = vmatpush.msra.mxu0 0.0
  %842 = vmatpush.msra.mxu0 0.0
  %843 = vmatpush.msra.mxu0 0.0
  %844 = vmatpush.msra.mxu0 0.0
  %845 = vmatpush.msra.mxu0 0.0
  %846 = vmatpush.msra.mxu0 0.0
  %847 = vmatpush.msra.mxu0 0.0
  %848 = vmatpush.msra.mxu0 0.0
  %849 = vmatpush.msra.mxu0 0.0
  %850 = vmatpush.msra.mxu0 %v827
  %851 = vmatmul.f32.gmra.mxu0 %v830
  %v852 = vpop.f32.mrf.mxu0
  %v853 = vadd.f32 0.0, %v852
  %854 = vmatmul.f32.gmra.mxu0 %v833
  %v855 = vpop.f32.mrf.mxu0
  %v856 = vadd.f32 0.0, %v855
  %857 = vdwg.mxu0
  %v858 = vadd.f32 %v824, %v853
  %v859 = vadd.f32 %v825, %v856
  %861 = vset.pattern.permute.xlu0 0
  %862 = vperm.xlu0 %861, %v60
  %v863 = vpop.permute.xlu0 %862
  %866 = vset.pattern.permute.xlu0 0
  %867 = vperm.xlu0 %866, %v61
  %v868 = vpop.permute.xlu0 %867
  %v870 = vadd.f32 %v858, %v863
  %v871 = vadd.f32 %v859, %v868
  %v872 = vmax.f32 %v870, 0.0
  %v873 = vmax.f32 %v871, 0.0
  %876 = vrot.lane.b32.xlu0 %v872, 127
  %v877 = vpop.permute.xlu0 %876
  %878 = vrot.lane.b32.xlu0 %v873, 127
  %v879 = vpop.permute.xlu0 %878
  %v882 = vmax.f32 %v872, %v877
  %v883 = vmax.f32 %v873, %v879
  %886 = vrot.lane.b32.xlu0 %v882, 121
  %v887 = vpop.permute.xlu0 %886
  %888 = vrot.lane.b32.xlu0 %v883, 121
  %v889 = vpop.permute.xlu0 %888
  %v892 = vmax.f32 %v882, %v887
  %v893 = vmax.f32 %v883, %v889
  %vm894 = vcmask 269312
  %v896 = vsel %vm894, %v892, 0
  %v899 = vsel %vm894, %v893, 0
  %vm901 = vcmask 1040384
  %v903 = vsel %vm901, %v134, 0
  %905 = vmatpush.msra.mxu0 0.0
  %906 = vmatpush.msra.mxu0 0.0
  %907 = vmatpush.msra.mxu0 0.0
  %908 = vmatpush.msra.mxu0 0.0
  %909 = vmatpush.msra.mxu0 0.0
  %910 = vmatpush.msra.mxu0 0.0
  %911 = vmatpush.msra.mxu0 0.0
  %912 = vmatpush.msra.mxu0 0.0
  %913 = vmatpush.msra.mxu0 0.0
  %914 = vmatpush.msra.mxu0 0.0
  %915 = vmatpush.msra.mxu0 0.0
  %916 = vmatpush.msra.mxu0 %v903
  %917 = vmatpush.msra.mxu0 %v133
  %918 = vmatpush.msra.mxu0 %v132
  %919 = vmatpush.msra.mxu0 %v131
  %920 = vmatpush.msra.mxu0 %v130
  %921 = vmatmul.f32.gmra.mxu0 %v896
  %v922 = vpop.f32.mrf.mxu0
  %v923 = vadd.f32 0.0, %v922
  %924 = vmatmul.f32.gmra.mxu0 %v899
  %v925 = vpop.f32.mrf.mxu0
  %v926 = vadd.f32 0.0, %v925
  %927 = vdwg.mxu0
  %930 = vrot.lane.b32.xlu0 %v923, 127
  %v931 = vpop.permute.xlu0 %930
  %932 = vrot.lane.b32.xlu0 %v926, 127
  %v933 = vpop.permute.xlu0 %932
  %vm936 = vcmask 130048
  %v938 = vsel %vm936, %v66, 0
  %v941 = vsel %vm936, %v67, 0
  %v944 = vsel %vm936, %v68, 0
  %v947 = vsel %vm936, %v69, 0
  %949 = vmatpush.msra.mxu0 0.0
  %950 = vmatpush.msra.mxu0 0.0
  %951 = vmatpush.msra.mxu0 0.0
  %952 = vmatpush.msra.mxu0 0.0
  %953 = vmatpush.msra.mxu0 0.0
  %954 = vmatpush.msra.mxu0 0.0
  %955 = vmatpush.msra.mxu0 0.0
  %956 = vmatpush.msra.mxu0 0.0
  %957 = vmatpush.msra.mxu0 0.0
  %958 = vmatpush.msra.mxu0 0.0
  %959 = vmatpush.msra.mxu0 0.0
  %960 = vmatpush.msra.mxu0 0.0
  %961 = vmatpush.msra.mxu0 0.0
  %962 = vmatpush.msra.mxu0 0.0
  %963 = vmatpush.msra.mxu0 %v933
  %964 = vmatpush.msra.mxu0 %v931
  %965 = vmatmul.f32.gmra.mxu0 %v938
  %v966 = vpop.f32.mrf.mxu0
  %v967 = vadd.f32 0.0, %v966
  %968 = vmatmul.f32.gmra.mxu0 %v941
  %v969 = vpop.f32.mrf.mxu0
  %v970 = vadd.f32 0.0, %v969
  %971 = vmatmul.f32.gmra.mxu0 %v944
  %v972 = vpop.f32.mrf.mxu0
  %v973 = vadd.f32 0.0, %v972
  %974 = vmatmul.f32.gmra.mxu0 %v947
  %v975 = vpop.f32.mrf.mxu0
  %v976 = vadd.f32 0.0, %v975
  %977 = vdwg.mxu0
  %v979 = vsel %vm936, %v62, 0
  %v982 = vsel %vm936, %v63, 0
  %v985 = vsel %vm936, %v64, 0
  %v988 = vsel %vm936, %v65, 0
  %990 = vmatpush.msra.mxu0 0.0
  %991 = vmatpush.msra.mxu0 0.0
  %992 = vmatpush.msra.mxu0 0.0
  %993 = vmatpush.msra.mxu0 0.0
  %994 = vmatpush.msra.mxu0 0.0
  %995 = vmatpush.msra.mxu0 0.0
  %996 = vmatpush.msra.mxu0 0.0
  %997 = vmatpush.msra.mxu0 0.0
  %998 = vmatpush.msra.mxu0 0.0
  %999 = vmatpush.msra.mxu0 0.0
  %1000 = vmatpush.msra.mxu0 0.0
  %1001 = vmatpush.msra.mxu0 0.0
  %1002 = vmatpush.msra.mxu0 0.0
  %1003 = vmatpush.msra.mxu0 0.0
  %1004 = vmatpush.msra.mxu0 %v926
  %1005 = vmatpush.msra.mxu0 %v923
  %1006 = vmatmul.f32.gmra.mxu0 %v979
  %v1007 = vpop.f32.mrf.mxu0
  %v1008 = vadd.f32 %v967, %v1007
  %1009 = vmatmul.f32.gmra.mxu0 %v982
  %v1010 = vpop.f32.mrf.mxu0
  %v1011 = vadd.f32 %v970, %v1010
  %1012 = vmatmul.f32.gmra.mxu0 %v985
  %v1013 = vpop.f32.mrf.mxu0
  %v1014 = vadd.f32 %v973, %v1013
  %1015 = vmatmul.f32.gmra.mxu0 %v988
  %v1016 = vpop.f32.mrf.mxu0
  %v1017 = vadd.f32 %v976, %v1016
  %1018 = vdwg.mxu0
  %1019 = vrot.lane.b32.xlu0 %v923, 126
  %v1020 = vpop.permute.xlu0 %1019
  %1021 = vrot.lane.b32.xlu0 %v926, 126
  %v1022 = vpop.permute.xlu0 %1021
  %v1026 = vsel %vm936, %v70, 0
  %v1029 = vsel %vm936, %v71, 0
  %v1032 = vsel %vm936, %v72, 0
  %v1035 = vsel %vm936, %v73, 0
  %1037 = vmatpush.msra.mxu0 0.0
  %1038 = vmatpush.msra.mxu0 0.0
  %1039 = vmatpush.msra.mxu0 0.0
  %1040 = vmatpush.msra.mxu0 0.0
  %1041 = vmatpush.msra.mxu0 0.0
  %1042 = vmatpush.msra.mxu0 0.0
  %1043 = vmatpush.msra.mxu0 0.0
  %1044 = vmatpush.msra.mxu0 0.0
  %1045 = vmatpush.msra.mxu0 0.0
  %1046 = vmatpush.msra.mxu0 0.0
  %1047 = vmatpush.msra.mxu0 0.0
  %1048 = vmatpush.msra.mxu0 0.0
  %1049 = vmatpush.msra.mxu0 0.0
  %1050 = vmatpush.msra.mxu0 0.0
  %1051 = vmatpush.msra.mxu0 %v1022
  %1052 = vmatpush.msra.mxu0 %v1020
  %1053 = vmatmul.f32.gmra.mxu0 %v1026
  %v1054 = vpop.f32.mrf.mxu0
  %v1055 = vadd.f32 0.0, %v1054
  %1056 = vmatmul.f32.gmra.mxu0 %v1029
  %v1057 = vpop.f32.mrf.mxu0
  %v1058 = vadd.f32 0.0, %v1057
  %1059 = vmatmul.f32.gmra.mxu0 %v1032
  %v1060 = vpop.f32.mrf.mxu0
  %v1061 = vadd.f32 0.0, %v1060
  %1062 = vmatmul.f32.gmra.mxu0 %v1035
  %v1063 = vpop.f32.mrf.mxu0
  %v1064 = vadd.f32 0.0, %v1063
  %1065 = vdwg.mxu0
  %v1066 = vadd.f32 %v1008, %v1055
  %v1067 = vadd.f32 %v1011, %v1058
  %v1068 = vadd.f32 %v1014, %v1061
  %v1069 = vadd.f32 %v1017, %v1064
  %1070 = vrot.lane.b32.xlu0 %v923, 125
  %v1071 = vpop.permute.xlu0 %1070
  %1072 = vrot.lane.b32.xlu0 %v926, 125
  %v1073 = vpop.permute.xlu0 %1072
  %v1077 = vsel %vm936, %v74, 0
  %v1080 = vsel %vm936, %v75, 0
  %v1083 = vsel %vm936, %v76, 0
  %v1086 = vsel %vm936, %v77, 0
  %1088 = vmatpush.msra.mxu0 0.0
  %1089 = vmatpush.msra.mxu0 0.0
  %1090 = vmatpush.msra.mxu0 0.0
  %1091 = vmatpush.msra.mxu0 0.0
  %1092 = vmatpush.msra.mxu0 0.0
  %1093 = vmatpush.msra.mxu0 0.0
  %1094 = vmatpush.msra.mxu0 0.0
  %1095 = vmatpush.msra.mxu0 0.0
  %1096 = vmatpush.msra.mxu0 0.0
  %1097 = vmatpush.msra.mxu0 0.0
  %1098 = vmatpush.msra.mxu0 0.0
  %1099 = vmatpush.msra.mxu0 0.0
  %1100 = vmatpush.msra.mxu0 0.0
  %1101 = vmatpush.msra.mxu0 0.0
  %1102 = vmatpush.msra.mxu0 %v1073
  %1103 = vmatpush.msra.mxu0 %v1071
  %1104 = vmatmul.f32.gmra.mxu0 %v1077
  %v1105 = vpop.f32.mrf.mxu0
  %v1106 = vadd.f32 0.0, %v1105
  %1107 = vmatmul.f32.gmra.mxu0 %v1080
  %v1108 = vpop.f32.mrf.mxu0
  %v1109 = vadd.f32 0.0, %v1108
  %1110 = vmatmul.f32.gmra.mxu0 %v1083
  %v1111 = vpop.f32.mrf.mxu0
  %v1112 = vadd.f32 0.0, %v1111
  %1113 = vmatmul.f32.gmra.mxu0 %v1086
  %v1114 = vpop.f32.mrf.mxu0
  %v1115 = vadd.f32 0.0, %v1114
  %1116 = vdwg.mxu0
  %v1117 = vadd.f32 %v1066, %v1106
  %v1118 = vadd.f32 %v1067, %v1109
  %v1119 = vadd.f32 %v1068, %v1112
  %v1120 = vadd.f32 %v1069, %v1115
  %1121 = vrot.lane.b32.xlu0 %v923, 124
  %v1122 = vpop.permute.xlu0 %1121
  %1123 = vrot.lane.b32.xlu0 %v926, 124
  %v1124 = vpop.permute.xlu0 %1123
  %v1128 = vsel %vm936, %v78, 0
  %v1131 = vsel %vm936, %v79, 0
  %v1134 = vsel %vm936, %v80, 0
  %v1137 = vsel %vm936, %v81, 0
  %1139 = vmatpush.msra.mxu0 0.0
  %1140 = vmatpush.msra.mxu0 0.0
  %1141 = vmatpush.msra.mxu0 0.0
  %1142 = vmatpush.msra.mxu0 0.0
  %1143 = vmatpush.msra.mxu0 0.0
  %1144 = vmatpush.msra.mxu0 0.0
  %1145 = vmatpush.msra.mxu0 0.0
  %1146 = vmatpush.msra.mxu0 0.0
  %1147 = vmatpush.msra.mxu0 0.0
  %1148 = vmatpush.msra.mxu0 0.0
  %1149 = vmatpush.msra.mxu0 0.0
  %1150 = vmatpush.msra.mxu0 0.0
  %1151 = vmatpush.msra.mxu0 0.0
  %1152 = vmatpush.msra.mxu0 0.0
  %1153 = vmatpush.msra.mxu0 %v1124
  %1154 = vmatpush.msra.mxu0 %v1122
  %1155 = vmatmul.f32.gmra.mxu0 %v1128
  %v1156 = vpop.f32.mrf.mxu0
  %v1157 = vadd.f32 0.0, %v1156
  %1158 = vmatmul.f32.gmra.mxu0 %v1131
  %v1159 = vpop.f32.mrf.mxu0
  %v1160 = vadd.f32 0.0, %v1159
  %1161 = vmatmul.f32.gmra.mxu0 %v1134
  %v1162 = vpop.f32.mrf.mxu0
  %v1163 = vadd.f32 0.0, %v1162
  %1164 = vmatmul.f32.gmra.mxu0 %v1137
  %v1165 = vpop.f32.mrf.mxu0
  %v1166 = vadd.f32 0.0, %v1165
  %1167 = vdwg.mxu0
  %v1168 = vadd.f32 %v1117, %v1157
  %v1169 = vadd.f32 %v1118, %v1160
  %v1170 = vadd.f32 %v1119, %v1163
  %v1171 = vadd.f32 %v1120, %v1166
  %1172 = vrot.lane.b32.xlu0 %v923, 123
  %v1173 = vpop.permute.xlu0 %1172
  %1174 = vrot.lane.b32.xlu0 %v926, 123
  %v1175 = vpop.permute.xlu0 %1174
  %v1179 = vsel %vm936, %v82, 0
  %v1182 = vsel %vm936, %v83, 0
  %v1185 = vsel %vm936, %v84, 0
  %v1188 = vsel %vm936, %v85, 0
  %1190 = vmatpush.msra.mxu0 0.0
  %1191 = vmatpush.msra.mxu0 0.0
  %1192 = vmatpush.msra.mxu0 0.0
  %1193 = vmatpush.msra.mxu0 0.0
  %1194 = vmatpush.msra.mxu0 0.0
  %1195 = vmatpush.msra.mxu0 0.0
  %1196 = vmatpush.msra.mxu0 0.0
  %1197 = vmatpush.msra.mxu0 0.0
  %1198 = vmatpush.msra.mxu0 0.0
  %1199 = vmatpush.msra.mxu0 0.0
  %1200 = vmatpush.msra.mxu0 0.0
  %1201 = vmatpush.msra.mxu0 0.0
  %1202 = vmatpush.msra.mxu0 0.0
  %1203 = vmatpush.msra.mxu0 0.0
  %1204 = vmatpush.msra.mxu0 %v1175
  %1205 = vmatpush.msra.mxu0 %v1173
  %1206 = vmatmul.f32.gmra.mxu0 %v1179
  %v1207 = vpop.f32.mrf.mxu0
  %v1208 = vadd.f32 0.0, %v1207
  %1209 = vmatmul.f32.gmra.mxu0 %v1182
  %v1210 = vpop.f32.mrf.mxu0
  %v1211 = vadd.f32 0.0, %v1210
  %1212 = vmatmul.f32.gmra.mxu0 %v1185
  %v1213 = vpop.f32.mrf.mxu0
  %v1214 = vadd.f32 0.0, %v1213
  %1215 = vmatmul.f32.gmra.mxu0 %v1188
  %v1216 = vpop.f32.mrf.mxu0
  %v1217 = vadd.f32 0.0, %v1216
  %1218 = vdwg.mxu0
  %v1219 = vadd.f32 %v1168, %v1208
  %v1220 = vadd.f32 %v1169, %v1211
  %v1221 = vadd.f32 %v1170, %v1214
  %v1222 = vadd.f32 %v1171, %v1217
  %1223 = vrot.lane.b32.xlu0 %v923, 122
  %v1224 = vpop.permute.xlu0 %1223
  %1225 = vrot.lane.b32.xlu0 %v926, 122
  %v1226 = vpop.permute.xlu0 %1225
  %v1230 = vsel %vm936, %v86, 0
  %v1233 = vsel %vm936, %v87, 0
  %v1236 = vsel %vm936, %v88, 0
  %v1239 = vsel %vm936, %v89, 0
  %1241 = vmatpush.msra.mxu0 0.0
  %1242 = vmatpush.msra.mxu0 0.0
  %1243 = vmatpush.msra.mxu0 0.0
  %1244 = vmatpush.msra.mxu0 0.0
  %1245 = vmatpush.msra.mxu0 0.0
  %1246 = vmatpush.msra.mxu0 0.0
  %1247 = vmatpush.msra.mxu0 0.0
  %1248 = vmatpush.msra.mxu0 0.0
  %1249 = vmatpush.msra.mxu0 0.0
  %1250 = vmatpush.msra.mxu0 0.0
  %1251 = vmatpush.msra.mxu0 0.0
  %1252 = vmatpush.msra.mxu0 0.0
  %1253 = vmatpush.msra.mxu0 0.0
  %1254 = vmatpush.msra.mxu0 0.0
  %1255 = vmatpush.msra.mxu0 %v1226
  %1256 = vmatpush.msra.mxu0 %v1224
  %1257 = vmatmul.f32.gmra.mxu0 %v1230
  %v1258 = vpop.f32.mrf.mxu0
  %v1259 = vadd.f32 0.0, %v1258
  %1260 = vmatmul.f32.gmra.mxu0 %v1233
  %v1261 = vpop.f32.mrf.mxu0
  %v1262 = vadd.f32 0.0, %v1261
  %1263 = vmatmul.f32.gmra.mxu0 %v1236
  %v1264 = vpop.f32.mrf.mxu0
  %v1265 = vadd.f32 0.0, %v1264
  %1266 = vmatmul.f32.gmra.mxu0 %v1239
  %v1267 = vpop.f32.mrf.mxu0
  %v1268 = vadd.f32 0.0, %v1267
  %1269 = vdwg.mxu0
  %v1270 = vadd.f32 %v1219, %v1259
  %v1271 = vadd.f32 %v1220, %v1262
  %v1272 = vadd.f32 %v1221, %v1265
  %v1273 = vadd.f32 %v1222, %v1268
  %1274 = vrot.lane.b32.xlu0 %v923, 121
  %v1275 = vpop.permute.xlu0 %1274
  %1276 = vrot.lane.b32.xlu0 %v926, 121
  %v1277 = vpop.permute.xlu0 %1276
  %v1281 = vsel %vm936, %v90, 0
  %v1284 = vsel %vm936, %v91, 0
  %v1287 = vsel %vm936, %v92, 0
  %v1290 = vsel %vm936, %v93, 0
  %1292 = vmatpush.msra.mxu0 0.0
  %1293 = vmatpush.msra.mxu0 0.0
  %1294 = vmatpush.msra.mxu0 0.0
  %1295 = vmatpush.msra.mxu0 0.0
  %1296 = vmatpush.msra.mxu0 0.0
  %1297 = vmatpush.msra.mxu0 0.0
  %1298 = vmatpush.msra.mxu0 0.0
  %1299 = vmatpush.msra.mxu0 0.0
  %1300 = vmatpush.msra.mxu0 0.0
  %1301 = vmatpush.msra.mxu0 0.0
  %1302 = vmatpush.msra.mxu0 0.0
  %1303 = vmatpush.msra.mxu0 0.0
  %1304 = vmatpush.msra.mxu0 0.0
  %1305 = vmatpush.msra.mxu0 0.0
  %1306 = vmatpush.msra.mxu0 %v1277
  %1307 = vmatpush.msra.mxu0 %v1275
  %1308 = vmatmul.f32.gmra.mxu0 %v1281
  %v1309 = vpop.f32.mrf.mxu0
  %v1310 = vadd.f32 0.0, %v1309
  %1311 = vmatmul.f32.gmra.mxu0 %v1284
  %v1312 = vpop.f32.mrf.mxu0
  %v1313 = vadd.f32 0.0, %v1312
  %1314 = vmatmul.f32.gmra.mxu0 %v1287
  %v1315 = vpop.f32.mrf.mxu0
  %v1316 = vadd.f32 0.0, %v1315
  %1317 = vmatmul.f32.gmra.mxu0 %v1290
  %v1318 = vpop.f32.mrf.mxu0
  %v1319 = vadd.f32 0.0, %v1318
  %1320 = vdwg.mxu0
  %v1321 = vadd.f32 %v1270, %v1310
  %v1322 = vadd.f32 %v1271, %v1313
  %v1323 = vadd.f32 %v1272, %v1316
  %v1324 = vadd.f32 %v1273, %v1319
  %1325 = vrot.lane.b32.xlu0 %v923, 120
  %v1326 = vpop.permute.xlu0 %1325
  %1327 = vrot.lane.b32.xlu0 %v926, 120
  %v1328 = vpop.permute.xlu0 %1327
  %v1332 = vsel %vm936, %v94, 0
  %v1335 = vsel %vm936, %v95, 0
  %v1338 = vsel %vm936, %v96, 0
  %v1341 = vsel %vm936, %v97, 0
  %1343 = vmatpush.msra.mxu0 0.0
  %1344 = vmatpush.msra.mxu0 0.0
  %1345 = vmatpush.msra.mxu0 0.0
  %1346 = vmatpush.msra.mxu0 0.0
  %1347 = vmatpush.msra.mxu0 0.0
  %1348 = vmatpush.msra.mxu0 0.0
  %1349 = vmatpush.msra.mxu0 0.0
  %1350 = vmatpush.msra.mxu0 0.0
  %1351 = vmatpush.msra.mxu0 0.0
  %1352 = vmatpush.msra.mxu0 0.0
  %1353 = vmatpush.msra.mxu0 0.0
  %1354 = vmatpush.msra.mxu0 0.0
  %1355 = vmatpush.msra.mxu0 0.0
  %1356 = vmatpush.msra.mxu0 0.0
  %1357 = vmatpush.msra.mxu0 %v1328
  %1358 = vmatpush.msra.mxu0 %v1326
  %1359 = vmatmul.f32.gmra.mxu0 %v1332
  %v1360 = vpop.f32.mrf.mxu0
  %v1361 = vadd.f32 0.0, %v1360
  %1362 = vmatmul.f32.gmra.mxu0 %v1335
  %v1363 = vpop.f32.mrf.mxu0
  %v1364 = vadd.f32 0.0, %v1363
  %1365 = vmatmul.f32.gmra.mxu0 %v1338
  %v1366 = vpop.f32.mrf.mxu0
  %v1367 = vadd.f32 0.0, %v1366
  %1368 = vmatmul.f32.gmra.mxu0 %v1341
  %v1369 = vpop.f32.mrf.mxu0
  %v1370 = vadd.f32 0.0, %v1369
  %1371 = vdwg.mxu0
  %v1372 = vadd.f32 %v1321, %v1361
  %v1373 = vadd.f32 %v1322, %v1364
  %v1374 = vadd.f32 %v1323, %v1367
  %v1375 = vadd.f32 %v1324, %v1370
  %v1376 = vadd.f32 %v1372, %v98
  %v1377 = vadd.f32 %v1373, %v99
  %v1378 = vadd.f32 %v1374, %v100
  %v1379 = vadd.f32 %v1375, %v101
  %v1380 = vmax.f32 %v1376, 0.0
  %v1381 = vmax.f32 %v1377, 0.0
  %v1382 = vmax.f32 %v1378, 0.0
  %v1383 = vmax.f32 %v1379, 0.0
  %vm1384 = vcmask 261120
  %v1386 = vsel %vm1384, %v102, 0
  %1388 = vmatpush.msra.mxu0 0.0
  %1389 = vmatpush.msra.mxu0 0.0
  %1390 = vmatpush.msra.mxu0 0.0
  %1391 = vmatpush.msra.mxu0 0.0
  %1392 = vmatpush.msra.mxu0 0.0
  %1393 = vmatpush.msra.mxu0 0.0
  %1394 = vmatpush.msra.mxu0 0.0
  %1395 = vmatpush.msra.mxu0 0.0
  %1396 = vmatpush.msra.mxu0 0.0
  %1397 = vmatpush.msra.mxu0 0.0
  %1398 = vmatpush.msra.mxu0 0.0
  %1399 = vmatpush.msra.mxu0 0.0
  %1400 = vmatpush.msra.mxu0 %v1383
  %1401 = vmatpush.msra.mxu0 %v1382
  %1402 = vmatpush.msra.mxu0 %v1381
  %1403 = vmatpush.msra.mxu0 %v1380
  %1404 = vmatmul.f32.gmra.mxu0 %v1386
  %v1405 = vpop.f32.mrf.mxu0
  %v1406 = vadd.f32 %v103, %v1405
  %1407 = vdwg.mxu0
  %v1408 = vsub.f32 0.0, %v1406
  %v1409 = vmul.f32 %v1408, 1.442695
  %v1410 = vpow.pop %v1409
  %v1411 = vadd.f32 %v1410, 1.0
  %v1412 = vrcp.pop %v1411
  %vm1413 = vcmask 0
  %1414 = vst.msk [vmem:[%s11] sm:$0x1] %vm1413, %v1412
  %1416 = vst [vmem:[#allocation1] ss:$2 sm:$0xff] %v41
  %v1417 = vld.sshfl [vmem:[#allocation1] sm:$0xff pattern:$0x75316420]
  %v1418 = vld.sshfl [vmem:[#allocation1 + $0x8] sm:$0xff pattern:$0x75316420]
  %1419 = vrot.lane.b32.xlu0 %v1417, 127
  %v1420 = vpop.permute.xlu0 %1419
  %1421 = vrot.lane.b32.xlu0 %v1418, 127
  %v1422 = vpop.permute.xlu0 %1421
  %v1423 = vsel %vm143, %v1420, %v1422
  %v1424 = vsel %vm149, %v1423, 0
  %v1426 = vsel %vm149, %v1422, 0
  %1428 = vmatpush.msra.mxu0 0.0
  %1429 = vmatpush.msra.mxu0 0.0
  %1430 = vmatpush.msra.mxu0 0.0
  %1431 = vmatpush.msra.mxu0 0.0
  %1432 = vmatpush.msra.mxu0 0.0
  %1433 = vmatpush.msra.mxu0 0.0
  %1434 = vmatpush.msra.mxu0 0.0
  %1435 = vmatpush.msra.mxu0 0.0
  %1436 = vmatpush.msra.mxu0 0.0
  %1437 = vmatpush.msra.mxu0 0.0
  %1438 = vmatpush.msra.mxu0 0.0
  %1439 = vmatpush.msra.mxu0 0.0
  %1440 = vmatpush.msra.mxu0 0.0
  %1441 = vmatpush.msra.mxu0 0.0
  %1442 = vmatpush.msra.mxu0 0.0
  %1443 = vmatpush.msra.mxu0 %v1424
  %1444 = vmatmul.f32.gmra.mxu0 %v147
  %v1445 = vpop.f32.mrf.mxu0
  %v1446 = vadd.f32 0.0, %v1445
  %1447 = vdwg.mxu0
  %1448 = vmatpush.msra.mxu0 0.0
  %1449 = vmatpush.msra.mxu0 0.0
  %1450 = vmatpush.msra.mxu0 0.0
  %1451 = vmatpush.msra.mxu0 0.0
  %1452 = vmatpush.msra.mxu0 0.0
  %1453 = vmatpush.msra.mxu0 0.0
  %1454 = vmatpush.msra.mxu0 0.0
  %1455 = vmatpush.msra.mxu0 0.0
  %1456 = vmatpush.msra.mxu0 0.0
  %1457 = vmatpush.msra.mxu0 0.0
  %1458 = vmatpush.msra.mxu0 0.0
  %1459 = vmatpush.msra.mxu0 0.0
  %1460 = vmatpush.msra.mxu0 0.0
  %1461 = vmatpush.msra.mxu0 0.0
  %1462 = vmatpush.msra.mxu0 0.0
  %1463 = vmatpush.msra.mxu0 %v1426
  %1464 = vmatmul.f32.gmra.mxu0 %v147
  %v1465 = vpop.f32.mrf.mxu0
  %v1466 = vadd.f32 0.0, %v1465
  %1467 = vdwg.mxu0
  %1468 = vst [vmem:[#allocation1] ss:$2 sm:$0xff] %v41
  %v1469 = vld.sshfl [vmem:[#allocation1] sm:$0xff pattern:$0x75316420]
  %v1470 = vld.sshfl [vmem:[#allocation1 + $0x8] sm:$0xff pattern:$0x75316420]
  %v1471 = vsel %vm149, %v1469, 0
  %v1473 = vsel %vm149, %v1470, 0
  %1475 = vmatpush.msra.mxu0 0.0
  %1476 = vmatpush.msra.mxu0 0.0
  %1477 = vmatpush.msra.mxu0 0.0
  %1478 = vmatpush.msra.mxu0 0.0
  %1479 = vmatpush.msra.mxu0 0.0
  %1480 = vmatpush.msra.mxu0 0.0
  %1481 = vmatpush.msra.mxu0 0.0
  %1482 = vmatpush.msra.mxu0 0.0
  %1483 = vmatpush.msra.mxu0 0.0
  %1484 = vmatpush.msra.mxu0 0.0
  %1485 = vmatpush.msra.mxu0 0.0
  %1486 = vmatpush.msra.mxu0 0.0
  %1487 = vmatpush.msra.mxu0 0.0
  %1488 = vmatpush.msra.mxu0 0.0
  %1489 = vmatpush.msra.mxu0 0.0
  %1490 = vmatpush.msra.mxu0 %v1471
  %1491 = vmatmul.f32.gmra.mxu0 %v198
  %v1492 = vpop.f32.mrf.mxu0
  %v1493 = vadd.f32 %v1446, %v1492
  %1494 = vdwg.mxu0
  %1495 = vmatpush.msra.mxu0 0.0
  %1496 = vmatpush.msra.mxu0 0.0
  %1497 = vmatpush.msra.mxu0 0.0
  %1498 = vmatpush.msra.mxu0 0.0
  %1499 = vmatpush.msra.mxu0 0.0
  %1500 = vmatpush.msra.mxu0 0.0
  %1501 = vmatpush.msra.mxu0 0.0
  %1502 = vmatpush.msra.mxu0 0.0
  %1503 = vmatpush.msra.mxu0 0.0
  %1504 = vmatpush.msra.mxu0 0.0
  %1505 = vmatpush.msra.mxu0 0.0
  %1506 = vmatpush.msra.mxu0 0.0
  %1507 = vmatpush.msra.mxu0 0.0
  %1508 = vmatpush.msra.mxu0 0.0
  %1509 = vmatpush.msra.mxu0 0.0
  %1510 = vmatpush.msra.mxu0 %v1473
  %1511 = vmatmul.f32.gmra.mxu0 %v198
  %v1512 = vpop.f32.mrf.mxu0
  %v1513 = vadd.f32 %v1466, %v1512
  %1514 = vdwg.mxu0
  %1515 = vst [vmem:[#allocation1] ss:$2 sm:$0xff] %v41
  %v1516 = vld.sshfl [vmem:[#allocation1] sm:$0xff pattern:$0x75316420]
  %v1517 = vld.sshfl [vmem:[#allocation1 + $0x8] sm:$0xff pattern:$0x75316420]
  %1518 = vrot.lane.b32.xlu0 %v1516, 126
  %v1519 = vpop.permute.xlu0 %1518
  %1520 = vrot.lane.b32.xlu0 %v1517, 126
  %v1521 = vpop.permute.xlu0 %1520
  %v1522 = vsel %vm251, %v1519, %v1521
  %v1523 = vsel %vm149, %v1522, 0
  %v1525 = vsel %vm149, %v1521, 0
  %1527 = vmatpush.msra.mxu0 0.0
  %1528 = vmatpush.msra.mxu0 0.0
  %1529 = vmatpush.msra.mxu0 0.0
  %1530 = vmatpush.msra.mxu0 0.0
  %1531 = vmatpush.msra.mxu0 0.0
  %1532 = vmatpush.msra.mxu0 0.0
  %1533 = vmatpush.msra.mxu0 0.0
  %1534 = vmatpush.msra.mxu0 0.0
  %1535 = vmatpush.msra.mxu0 0.0
  %1536 = vmatpush.msra.mxu0 0.0
  %1537 = vmatpush.msra.mxu0 0.0
  %1538 = vmatpush.msra.mxu0 0.0
  %1539 = vmatpush.msra.mxu0 0.0
  %1540 = vmatpush.msra.mxu0 0.0
  %1541 = vmatpush.msra.mxu0 0.0
  %1542 = vmatpush.msra.mxu0 %v1523
  %1543 = vmatmul.f32.gmra.mxu0 %v254
  %v1544 = vpop.f32.mrf.mxu0
  %v1545 = vadd.f32 0.0, %v1544
  %1546 = vdwg.mxu0
  %1547 = vmatpush.msra.mxu0 0.0
  %1548 = vmatpush.msra.mxu0 0.0
  %1549 = vmatpush.msra.mxu0 0.0
  %1550 = vmatpush.msra.mxu0 0.0
  %1551 = vmatpush.msra.mxu0 0.0
  %1552 = vmatpush.msra.mxu0 0.0
  %1553 = vmatpush.msra.mxu0 0.0
  %1554 = vmatpush.msra.mxu0 0.0
  %1555 = vmatpush.msra.mxu0 0.0
  %1556 = vmatpush.msra.mxu0 0.0
  %1557 = vmatpush.msra.mxu0 0.0
  %1558 = vmatpush.msra.mxu0 0.0
  %1559 = vmatpush.msra.mxu0 0.0
  %1560 = vmatpush.msra.mxu0 0.0
  %1561 = vmatpush.msra.mxu0 0.0
  %1562 = vmatpush.msra.mxu0 %v1525
  %1563 = vmatmul.f32.gmra.mxu0 %v254
  %v1564 = vpop.f32.mrf.mxu0
  %v1565 = vadd.f32 0.0, %v1564
  %1566 = vdwg.mxu0
  %v1567 = vadd.f32 %v1493, %v1545
  %v1568 = vadd.f32 %v1513, %v1565
  %1569 = vst [vmem:[#allocation1] ss:$2 sm:$0xff] %v41
  %v1570 = vld.sshfl [vmem:[#allocation1] sm:$0xff pattern:$0x75316420]
  %v1571 = vld.sshfl [vmem:[#allocation1 + $0x8] sm:$0xff pattern:$0x75316420]
  %1572 = vrot.lane.b32.xlu0 %v1570, 112
  %v1573 = vpop.permute.xlu0 %1572
  %1574 = vrot.lane.b32.xlu0 %v1571, 112
  %v1575 = vpop.permute.xlu0 %1574
  %v1576 = vsel %vm309, %v1573, %v1575
  %v1577 = vsel %vm149, %v1576, 0
  %v1579 = vsel %vm149, %v1575, 0
  %1581 = vmatpush.msra.mxu0 0.0
  %1582 = vmatpush.msra.mxu0 0.0
  %1583 = vmatpush.msra.mxu0 0.0
  %1584 = vmatpush.msra.mxu0 0.0
  %1585 = vmatpush.msra.mxu0 0.0
  %1586 = vmatpush.msra.mxu0 0.0
  %1587 = vmatpush.msra.mxu0 0.0
  %1588 = vmatpush.msra.mxu0 0.0
  %1589 = vmatpush.msra.mxu0 0.0
  %1590 = vmatpush.msra.mxu0 0.0
  %1591 = vmatpush.msra.mxu0 0.0
  %1592 = vmatpush.msra.mxu0 0.0
  %1593 = vmatpush.msra.mxu0 0.0
  %1594 = vmatpush.msra.mxu0 0.0
  %1595 = vmatpush.msra.mxu0 0.0
  %1596 = vmatpush.msra.mxu0 %v1577
  %1597 = vmatmul.f32.gmra.mxu0 %v312
  %v1598 = vpop.f32.mrf.mxu0
  %v1599 = vadd.f32 0.0, %v1598
  %1600 = vdwg.mxu0
  %1601 = vmatpush.msra.mxu0 0.0
  %1602 = vmatpush.msra.mxu0 0.0
  %1603 = vmatpush.msra.mxu0 0.0
  %1604 = vmatpush.msra.mxu0 0.0
  %1605 = vmatpush.msra.mxu0 0.0
  %1606 = vmatpush.msra.mxu0 0.0
  %1607 = vmatpush.msra.mxu0 0.0
  %1608 = vmatpush.msra.mxu0 0.0
  %1609 = vmatpush.msra.mxu0 0.0
  %1610 = vmatpush.msra.mxu0 0.0
  %1611 = vmatpush.msra.mxu0 0.0
  %1612 = vmatpush.msra.mxu0 0.0
  %1613 = vmatpush.msra.mxu0 0.0
  %1614 = vmatpush.msra.mxu0 0.0
  %1615 = vmatpush.msra.mxu0 0.0
  %1616 = vmatpush.msra.mxu0 %v1579
  %1617 = vmatmul.f32.gmra.mxu0 %v312
  %v1618 = vpop.f32.mrf.mxu0
  %v1619 = vadd.f32 0.0, %v1618
  %1620 = vdwg.mxu0
  %v1621 = vadd.f32 %v1567, %v1599
  %v1622 = vadd.f32 %v1568, %v1619
  %1623 = vst [vmem:[#allocation1] ss:$2 sm:$0xff] %v41
  %v1624 = vld.sshfl [vmem:[#allocation1] sm:$0xff pattern:$0x75316420]
  %v1625 = vld.sshfl [vmem:[#allocation1 + $0x8] sm:$0xff pattern:$0x75316420]
  %1626 = vrot.lane.b32.xlu0 %v1624, 111
  %v1627 = vpop.permute.xlu0 %1626
  %1628 = vrot.lane.b32.xlu0 %v1625, 111
  %v1629 = vpop.permute.xlu0 %1628
  %v1630 = vsel %vm367, %v1627, %v1629
  %v1631 = vsel %vm149, %v1630, 0
  %v1633 = vsel %vm149, %v1629, 0
  %1635 = vmatpush.msra.mxu0 0.0
  %1636 = vmatpush.msra.mxu0 0.0
  %1637 = vmatpush.msra.mxu0 0.0
  %1638 = vmatpush.msra.mxu0 0.0
  %1639 = vmatpush.msra.mxu0 0.0
  %1640 = vmatpush.msra.mxu0 0.0
  %1641 = vmatpush.msra.mxu0 0.0
  %1642 = vmatpush.msra.mxu0 0.0
  %1643 = vmatpush.msra.mxu0 0.0
  %1644 = vmatpush.msra.mxu0 0.0
  %1645 = vmatpush.msra.mxu0 0.0
  %1646 = vmatpush.msra.mxu0 0.0
  %1647 = vmatpush.msra.mxu0 0.0
  %1648 = vmatpush.msra.mxu0 0.0
  %1649 = vmatpush.msra.mxu0 0.0
  %1650 = vmatpush.msra.mxu0 %v1631
  %1651 = vmatmul.f32.gmra.mxu0 %v370
  %v1652 = vpop.f32.mrf.mxu0
  %v1653 = vadd.f32 0.0, %v1652
  %1654 = vdwg.mxu0
  %1655 = vmatpush.msra.mxu0 0.0
  %1656 = vmatpush.msra.mxu0 0.0
  %1657 = vmatpush.msra.mxu0 0.0
  %1658 = vmatpush.msra.mxu0 0.0
  %1659 = vmatpush.msra.mxu0 0.0
  %1660 = vmatpush.msra.mxu0 0.0
  %1661 = vmatpush.msra.mxu0 0.0
  %1662 = vmatpush.msra.mxu0 0.0
  %1663 = vmatpush.msra.mxu0 0.0
  %1664 = vmatpush.msra.mxu0 0.0
  %1665 = vmatpush.msra.mxu0 0.0
  %1666 = vmatpush.msra.mxu0 0.0
  %1667 = vmatpush.msra.mxu0 0.0
  %1668 = vmatpush.msra.mxu0 0.0
  %1669 = vmatpush.msra.mxu0 0.0
  %1670 = vmatpush.msra.mxu0 %v1633
  %1671 = vmatmul.f32.gmra.mxu0 %v370
  %v1672 = vpop.f32.mrf.mxu0
  %v1673 = vadd.f32 0.0, %v1672
  %1674 = vdwg.mxu0
  %v1675 = vadd.f32 %v1621, %v1653
  %v1676 = vadd.f32 %v1622, %v1673
  %1677 = vst [vmem:[#allocation1] ss:$2 sm:$0xff] %v41
  %v1678 = vld.sshfl [vmem:[#allocation1] sm:$0xff pattern:$0x75316420]
  %v1679 = vld.sshfl [vmem:[#allocation1 + $0x8] sm:$0xff pattern:$0x75316420]
  %1680 = vrot.lane.b32.xlu0 %v1678, 110
  %v1681 = vpop.permute.xlu0 %1680
  %1682 = vrot.lane.b32.xlu0 %v1679, 110
  %v1683 = vpop.permute.xlu0 %1682
  %v1684 = vsel %vm425, %v1681, %v1683
  %v1685 = vsel %vm149, %v1684, 0
  %v1687 = vsel %vm149, %v1683, 0
  %1689 = vmatpush.msra.mxu0 0.0
  %1690 = vmatpush.msra.mxu0 0.0
  %1691 = vmatpush.msra.mxu0 0.0
  %1692 = vmatpush.msra.mxu0 0.0
  %1693 = vmatpush.msra.mxu0 0.0
  %1694 = vmatpush.msra.mxu0 0.0
  %1695 = vmatpush.msra.mxu0 0.0
  %1696 = vmatpush.msra.mxu0 0.0
  %1697 = vmatpush.msra.mxu0 0.0
  %1698 = vmatpush.msra.mxu0 0.0
  %1699 = vmatpush.msra.mxu0 0.0
  %1700 = vmatpush.msra.mxu0 0.0
  %1701 = vmatpush.msra.mxu0 0.0
  %1702 = vmatpush.msra.mxu0 0.0
  %1703 = vmatpush.msra.mxu0 0.0
  %1704 = vmatpush.msra.mxu0 %v1685
  %1705 = vmatmul.f32.gmra.mxu0 %v428
  %v1706 = vpop.f32.mrf.mxu0
  %v1707 = vadd.f32 0.0, %v1706
  %1708 = vdwg.mxu0
  %1709 = vmatpush.msra.mxu0 0.0
  %1710 = vmatpush.msra.mxu0 0.0
  %1711 = vmatpush.msra.mxu0 0.0
  %1712 = vmatpush.msra.mxu0 0.0
  %1713 = vmatpush.msra.mxu0 0.0
  %1714 = vmatpush.msra.mxu0 0.0
  %1715 = vmatpush.msra.mxu0 0.0
  %1716 = vmatpush.msra.mxu0 0.0
  %1717 = vmatpush.msra.mxu0 0.0
  %1718 = vmatpush.msra.mxu0 0.0
  %1719 = vmatpush.msra.mxu0 0.0
  %1720 = vmatpush.msra.mxu0 0.0
  %1721 = vmatpush.msra.mxu0 0.0
  %1722 = vmatpush.msra.mxu0 0.0
  %1723 = vmatpush.msra.mxu0 0.0
  %1724 = vmatpush.msra.mxu0 %v1687
  %1725 = vmatmul.f32.gmra.mxu0 %v428
  %v1726 = vpop.f32.mrf.mxu0
  %v1727 = vadd.f32 0.0, %v1726
  %1728 = vdwg.mxu0
  %v1729 = vadd.f32 %v1675, %v1707
  %v1730 = vadd.f32 %v1676, %v1727
  %1731 = vst [vmem:[#allocation1] ss:$2 sm:$0xff] %v41
  %v1732 = vld.sshfl [vmem:[#allocation1] sm:$0xff pattern:$0x75316420]
  %v1733 = vld.sshfl [vmem:[#allocation1 + $0x8] sm:$0xff pattern:$0x75316420]
  %1734 = vrot.lane.b32.xlu0 %v1732, 96
  %v1735 = vpop.permute.xlu0 %1734
  %1736 = vrot.lane.b32.xlu0 %v1733, 96
  %v1737 = vpop.permute.xlu0 %1736
  %v1738 = vsel %vm483, %v1735, %v1737
  %v1739 = vsel %vm149, %v1738, 0
  %v1741 = vsel %vm149, %v1737, 0
  %1743 = vmatpush.msra.mxu0 0.0
  %1744 = vmatpush.msra.mxu0 0.0
  %1745 = vmatpush.msra.mxu0 0.0
  %1746 = vmatpush.msra.mxu0 0.0
  %1747 = vmatpush.msra.mxu0 0.0
  %1748 = vmatpush.msra.mxu0 0.0
  %1749 = vmatpush.msra.mxu0 0.0
  %1750 = vmatpush.msra.mxu0 0.0
  %1751 = vmatpush.msra.mxu0 0.0
  %1752 = vmatpush.msra.mxu0 0.0
  %1753 = vmatpush.msra.mxu0 0.0
  %1754 = vmatpush.msra.mxu0 0.0
  %1755 = vmatpush.msra.mxu0 0.0
  %1756 = vmatpush.msra.mxu0 0.0
  %1757 = vmatpush.msra.mxu0 0.0
  %1758 = vmatpush.msra.mxu0 %v1739
  %1759 = vmatmul.f32.gmra.mxu0 %v486
  %v1760 = vpop.f32.mrf.mxu0
  %v1761 = vadd.f32 0.0, %v1760
  %1762 = vdwg.mxu0
  %1763 = vmatpush.msra.mxu0 0.0
  %1764 = vmatpush.msra.mxu0 0.0
  %1765 = vmatpush.msra.mxu0 0.0
  %1766 = vmatpush.msra.mxu0 0.0
  %1767 = vmatpush.msra.mxu0 0.0
  %1768 = vmatpush.msra.mxu0 0.0
  %1769 = vmatpush.msra.mxu0 0.0
  %1770 = vmatpush.msra.mxu0 0.0
  %1771 = vmatpush.msra.mxu0 0.0
  %1772 = vmatpush.msra.mxu0 0.0
  %1773 = vmatpush.msra.mxu0 0.0
  %1774 = vmatpush.msra.mxu0 0.0
  %1775 = vmatpush.msra.mxu0 0.0
  %1776 = vmatpush.msra.mxu0 0.0
  %1777 = vmatpush.msra.mxu0 0.0
  %1778 = vmatpush.msra.mxu0 %v1741
  %1779 = vmatmul.f32.gmra.mxu0 %v486
  %v1780 = vpop.f32.mrf.mxu0
  %v1781 = vadd.f32 0.0, %v1780
  %1782 = vdwg.mxu0
  %v1783 = vadd.f32 %v1729, %v1761
  %v1784 = vadd.f32 %v1730, %v1781
  %1785 = vst [vmem:[#allocation1] ss:$2 sm:$0xff] %v41
  %v1786 = vld.sshfl [vmem:[#allocation1] sm:$0xff pattern:$0x75316420]
  %v1787 = vld.sshfl [vmem:[#allocation1 + $0x8] sm:$0xff pattern:$0x75316420]
  %1788 = vrot.lane.b32.xlu0 %v1786, 95
  %v1789 = vpop.permute.xlu0 %1788
  %1790 = vrot.lane.b32.xlu0 %v1787, 95
  %v1791 = vpop.permute.xlu0 %1790
  %v1792 = vsel %vm541, %v1789, %v1791
  %v1793 = vsel %vm149, %v1792, 0
  %v1795 = vsel %vm149, %v1791, 0
  %1797 = vmatpush.msra.mxu0 0.0
  %1798 = vmatpush.msra.mxu0 0.0
  %1799 = vmatpush.msra.mxu0 0.0
  %1800 = vmatpush.msra.mxu0 0.0
  %1801 = vmatpush.msra.mxu0 0.0
  %1802 = vmatpush.msra.mxu0 0.0
  %1803 = vmatpush.msra.mxu0 0.0
  %1804 = vmatpush.msra.mxu0 0.0
  %1805 = vmatpush.msra.mxu0 0.0
  %1806 = vmatpush.msra.mxu0 0.0
  %1807 = vmatpush.msra.mxu0 0.0
  %1808 = vmatpush.msra.mxu0 0.0
  %1809 = vmatpush.msra.mxu0 0.0
  %1810 = vmatpush.msra.mxu0 0.0
  %1811 = vmatpush.msra.mxu0 0.0
  %1812 = vmatpush.msra.mxu0 %v1793
  %1813 = vmatmul.f32.gmra.mxu0 %v544
  %v1814 = vpop.f32.mrf.mxu0
  %v1815 = vadd.f32 0.0, %v1814
  %1816 = vdwg.mxu0
  %1817 = vmatpush.msra.mxu0 0.0
  %1818 = vmatpush.msra.mxu0 0.0
  %1819 = vmatpush.msra.mxu0 0.0
  %1820 = vmatpush.msra.mxu0 0.0
  %1821 = vmatpush.msra.mxu0 0.0
  %1822 = vmatpush.msra.mxu0 0.0
  %1823 = vmatpush.msra.mxu0 0.0
  %1824 = vmatpush.msra.mxu0 0.0
  %1825 = vmatpush.msra.mxu0 0.0
  %1826 = vmatpush.msra.mxu0 0.0
  %1827 = vmatpush.msra.mxu0 0.0
  %1828 = vmatpush.msra.mxu0 0.0
  %1829 = vmatpush.msra.mxu0 0.0
  %1830 = vmatpush.msra.mxu0 0.0
  %1831 = vmatpush.msra.mxu0 0.0
  %1832 = vmatpush.msra.mxu0 %v1795
  %1833 = vmatmul.f32.gmra.mxu0 %v544
  %v1834 = vpop.f32.mrf.mxu0
  %v1835 = vadd.f32 0.0, %v1834
  %1836 = vdwg.mxu0
  %v1837 = vadd.f32 %v1783, %v1815
  %v1838 = vadd.f32 %v1784, %v1835
  %1839 = vst [vmem:[#allocation1] ss:$2 sm:$0xff] %v41
  %v1840 = vld.sshfl [vmem:[#allocation1] sm:$0xff pattern:$0x75316420]
  %v1841 = vld.sshfl [vmem:[#allocation1 + $0x8] sm:$0xff pattern:$0x75316420]
  %1842 = vrot.lane.b32.xlu0 %v1840, 94
  %v1843 = vpop.permute.xlu0 %1842
  %1844 = vrot.lane.b32.xlu0 %v1841, 94
  %v1845 = vpop.permute.xlu0 %1844
  %v1846 = vsel %vm599, %v1843, %v1845
  %v1847 = vsel %vm149, %v1846, 0
  %v1849 = vsel %vm149, %v1845, 0
  %1851 = vmatpush.msra.mxu0 0.0
  %1852 = vmatpush.msra.mxu0 0.0
  %1853 = vmatpush.msra.mxu0 0.0
  %1854 = vmatpush.msra.mxu0 0.0
  %1855 = vmatpush.msra.mxu0 0.0
  %1856 = vmatpush.msra.mxu0 0.0
  %1857 = vmatpush.msra.mxu0 0.0
  %1858 = vmatpush.msra.mxu0 0.0
  %1859 = vmatpush.msra.mxu0 0.0
  %1860 = vmatpush.msra.mxu0 0.0
  %1861 = vmatpush.msra.mxu0 0.0
  %1862 = vmatpush.msra.mxu0 0.0
  %1863 = vmatpush.msra.mxu0 0.0
  %1864 = vmatpush.msra.mxu0 0.0
  %1865 = vmatpush.msra.mxu0 0.0
  %1866 = vmatpush.msra.mxu0 %v1847
  %1867 = vmatmul.f32.gmra.mxu0 %v602
  %v1868 = vpop.f32.mrf.mxu0
  %v1869 = vadd.f32 0.0, %v1868
  %1870 = vdwg.mxu0
  %1871 = vmatpush.msra.mxu0 0.0
  %1872 = vmatpush.msra.mxu0 0.0
  %1873 = vmatpush.msra.mxu0 0.0
  %1874 = vmatpush.msra.mxu0 0.0
  %1875 = vmatpush.msra.mxu0 0.0
  %1876 = vmatpush.msra.mxu0 0.0
  %1877 = vmatpush.msra.mxu0 0.0
  %1878 = vmatpush.msra.mxu0 0.0
  %1879 = vmatpush.msra.mxu0 0.0
  %1880 = vmatpush.msra.mxu0 0.0
  %1881 = vmatpush.msra.mxu0 0.0
  %1882 = vmatpush.msra.mxu0 0.0
  %1883 = vmatpush.msra.mxu0 0.0
  %1884 = vmatpush.msra.mxu0 0.0
  %1885 = vmatpush.msra.mxu0 0.0
  %1886 = vmatpush.msra.mxu0 %v1849
  %1887 = vmatmul.f32.gmra.mxu0 %v602
  %v1888 = vpop.f32.mrf.mxu0
  %v1889 = vadd.f32 0.0, %v1888
  %1890 = vdwg.mxu0
  %v1891 = vadd.f32 %v1837, %v1869
  %v1892 = vadd.f32 %v1838, %v1889
  %v1893 = vadd.f32 %v1891, %v653
  %v1894 = vadd.f32 %v1892, %v653
  %v1895 = vmax.f32 %v1893, 0.0
  %v1896 = vmax.f32 %v1894, 0.0
  %1899 = vrot.lane.b32.xlu0 %v1895, 127
  %v1900 = vpop.permute.xlu0 %1899
  %1901 = vrot.lane.b32.xlu0 %v1896, 127
  %v1902 = vpop.permute.xlu0 %1901
  %v1903 = vsel %vm143, %v1900, %v1902
  %v1906 = vmax.f32 %v1895, %v1903
  %v1907 = vmax.f32 %v1896, %v1902
  %1910 = vrot.lane.b32.xlu0 %v1906, 112
  %v1911 = vpop.permute.xlu0 %1910
  %1912 = vrot.lane.b32.xlu0 %v1907, 112
  %v1913 = vpop.permute.xlu0 %1912
  %v1914 = vsel %vm309, %v1911, %v1913
  %v1917 = vmax.f32 %v1906, %v1914
  %v1918 = vmax.f32 %v1907, %v1913
  %v1920 = vsel %vm681, %v1918, 0
  %1922 = vmatpush.msra.mxu0 %v119
  %1923 = vmatpush.msra.mxu0 %v118
  %1924 = vmatpush.msra.mxu0 %v117
  %1925 = vmatpush.msra.mxu0 %v116
  %1926 = vmatpush.msra.mxu0 %v115
  %1927 = vmatpush.msra.mxu0 %v114
  %1928 = vmatpush.msra.mxu0 %v113
  %1929 = vmatpush.msra.mxu0 %v112
  %1930 = vmatpush.msra.mxu0 %v111
  %1931 = vmatpush.msra.mxu0 %v110
  %1932 = vmatpush.msra.mxu0 %v109
  %1933 = vmatpush.msra.mxu0 %v108
  %1934 = vmatpush.msra.mxu0 %v107
  %1935 = vmatpush.msra.mxu0 %v106
  %1936 = vmatpush.msra.mxu0 %v105
  %1937 = vmatpush.msra.mxu0 %v104
  %1938 = vmatmul.f32.gmra.mxu0 %v1917
  %v1939 = vpop.f32.mrf.mxu0
  %v1940 = vadd.f32 0.0, %v1939
  %1941 = vdwg.mxu0
  %1942 = vmatpush.msra.mxu0 0.0
  %1943 = vmatpush.msra.mxu0 0.0
  %1944 = vmatpush.msra.mxu0 0.0
  %1945 = vmatpush.msra.mxu0 0.0
  %1946 = vmatpush.msra.mxu0 0.0
  %1947 = vmatpush.msra.mxu0 0.0
  %1948 = vmatpush.msra.mxu0 %v687
  %1949 = vmatpush.msra.mxu0 %v128
  %1950 = vmatpush.msra.mxu0 %v127
  %1951 = vmatpush.msra.mxu0 %v126
  %1952 = vmatpush.msra.mxu0 %v125
  %1953 = vmatpush.msra.mxu0 %v124
  %1954 = vmatpush.msra.mxu0 %v123
  %1955 = vmatpush.msra.mxu0 %v122
  %1956 = vmatpush.msra.mxu0 %v121
  %1957 = vmatpush.msra.mxu0 %v120
  %1958 = vmatmul.f32.gmra.mxu0 %v1920
  %v1959 = vpop.f32.mrf.mxu0
  %v1960 = vadd.f32 %v1940, %v1959
  %1961 = vdwg.mxu0
  %1963 = vrot.lane.b32.xlu0 %v1960, 127
  %v1964 = vpop.permute.xlu0 %1963
  %1966 = vmatpush.msra.mxu0 0.0
  %1967 = vmatpush.msra.mxu0 0.0
  %1968 = vmatpush.msra.mxu0 0.0
  %1969 = vmatpush.msra.mxu0 0.0
  %1970 = vmatpush.msra.mxu0 0.0
  %1971 = vmatpush.msra.mxu0 0.0
  %1972 = vmatpush.msra.mxu0 0.0
  %1973 = vmatpush.msra.mxu0 0.0
  %1974 = vmatpush.msra.mxu0 0.0
  %1975 = vmatpush.msra.mxu0 0.0
  %1976 = vmatpush.msra.mxu0 0.0
  %1977 = vmatpush.msra.mxu0 0.0
  %1978 = vmatpush.msra.mxu0 0.0
  %1979 = vmatpush.msra.mxu0 0.0
  %1980 = vmatpush.msra.mxu0 0.0
  %1981 = vmatpush.msra.mxu0 %v1964
  %1982 = vmatmul.f32.gmra.mxu0 %v735
  %v1983 = vpop.f32.mrf.mxu0
  %v1984 = vadd.f32 0.0, %v1983
  %1985 = vmatmul.f32.gmra.mxu0 %v738
  %v1986 = vpop.f32.mrf.mxu0
  %v1987 = vadd.f32 0.0, %v1986
  %1988 = vdwg.mxu0
  %1989 = vmatpush.msra.mxu0 0.0
  %1990 = vmatpush.msra.mxu0 0.0
  %1991 = vmatpush.msra.mxu0 0.0
  %1992 = vmatpush.msra.mxu0 0.0
  %1993 = vmatpush.msra.mxu0 0.0
  %1994 = vmatpush.msra.mxu0 0.0
  %1995 = vmatpush.msra.mxu0 0.0
  %1996 = vmatpush.msra.mxu0 0.0
  %1997 = vmatpush.msra.mxu0 0.0
  %1998 = vmatpush.msra.mxu0 0.0
  %1999 = vmatpush.msra.mxu0 0.0
  %2000 = vmatpush.msra.mxu0 0.0
  %2001 = vmatpush.msra.mxu0 0.0
  %2002 = vmatpush.msra.mxu0 0.0
  %2003 = vmatpush.msra.mxu0 0.0
  %2004 = vmatpush.msra.mxu0 %v1960
  %2005 = vmatmul.f32.gmra.mxu0 %v764
  %v2006 = vpop.f32.mrf.mxu0
  %v2007 = vadd.f32 %v1984, %v2006
  %2008 = vmatmul.f32.gmra.mxu0 %v767
  %v2009 = vpop.f32.mrf.mxu0
  %v2010 = vadd.f32 %v1987, %v2009
  %2011 = vdwg.mxu0
  %2012 = vrot.lane.b32.xlu0 %v1960, 121
  %v2013 = vpop.permute.xlu0 %2012
  %2015 = vmatpush.msra.mxu0 0.0
  %2016 = vmatpush.msra.mxu0 0.0
  %2017 = vmatpush.msra.mxu0 0.0
  %2018 = vmatpush.msra.mxu0 0.0
  %2019 = vmatpush.msra.mxu0 0.0
  %2020 = vmatpush.msra.mxu0 0.0
  %2021 = vmatpush.msra.mxu0 0.0
  %2022 = vmatpush.msra.mxu0 0.0
  %2023 = vmatpush.msra.mxu0 0.0
  %2024 = vmatpush.msra.mxu0 0.0
  %2025 = vmatpush.msra.mxu0 0.0
  %2026 = vmatpush.msra.mxu0 0.0
  %2027 = vmatpush.msra.mxu0 0.0
  %2028 = vmatpush.msra.mxu0 0.0
  %2029 = vmatpush.msra.mxu0 0.0
  %2030 = vmatpush.msra.mxu0 %v2013
  %2031 = vmatmul.f32.gmra.mxu0 %v796
  %v2032 = vpop.f32.mrf.mxu0
  %v2033 = vadd.f32 0.0, %v2032
  %2034 = vmatmul.f32.gmra.mxu0 %v799
  %v2035 = vpop.f32.mrf.mxu0
  %v2036 = vadd.f32 0.0, %v2035
  %2037 = vdwg.mxu0
  %v2038 = vadd.f32 %v2007, %v2033
  %v2039 = vadd.f32 %v2010, %v2036
  %2040 = vrot.lane.b32.xlu0 %v1960, 120
  %v2041 = vpop.permute.xlu0 %2040
  %2043 = vmatpush.msra.mxu0 0.0
  %2044 = vmatpush.msra.mxu0 0.0
  %2045 = vmatpush.msra.mxu0 0.0
  %2046 = vmatpush.msra.mxu0 0.0
  %2047 = vmatpush.msra.mxu0 0.0
  %2048 = vmatpush.msra.mxu0 0.0
  %2049 = vmatpush.msra.mxu0 0.0
  %2050 = vmatpush.msra.mxu0 0.0
  %2051 = vmatpush.msra.mxu0 0.0
  %2052 = vmatpush.msra.mxu0 0.0
  %2053 = vmatpush.msra.mxu0 0.0
  %2054 = vmatpush.msra.mxu0 0.0
  %2055 = vmatpush.msra.mxu0 0.0
  %2056 = vmatpush.msra.mxu0 0.0
  %2057 = vmatpush.msra.mxu0 0.0
  %2058 = vmatpush.msra.mxu0 %v2041
  %2059 = vmatmul.f32.gmra.mxu0 %v830
  %v2060 = vpop.f32.mrf.mxu0
  %v2061 = vadd.f32 0.0, %v2060
  %2062 = vmatmul.f32.gmra.mxu0 %v833
  %v2063 = vpop.f32.mrf.mxu0
  %v2064 = vadd.f32 0.0, %v2063
  %2065 = vdwg.mxu0
  %v2066 = vadd.f32 %v2038, %v2061
  %v2067 = vadd.f32 %v2039, %v2064
  %v2068 = vadd.f32 %v2066, %v863
  %v2069 = vadd.f32 %v2067, %v868
  %v2070 = vmax.f32 %v2068, 0.0
  %v2071 = vmax.f32 %v2069, 0.0
  %2074 = vrot.lane.b32.xlu0 %v2070, 127
  %v2075 = vpop.permute.xlu0 %2074
  %2076 = vrot.lane.b32.xlu0 %v2071, 127
  %v2077 = vpop.permute.xlu0 %2076
  %v2080 = vmax.f32 %v2070, %v2075
  %v2081 = vmax.f32 %v2071, %v2077
  %2084 = vrot.lane.b32.xlu0 %v2080, 121
  %v2085 = vpop.permute.xlu0 %2084
  %2086 = vrot.lane.b32.xlu0 %v2081, 121
  %v2087 = vpop.permute.xlu0 %2086
  %v2090 = vmax.f32 %v2080, %v2085
  %v2091 = vmax.f32 %v2081, %v2087
  %v2093 = vsel %vm894, %v2090, 0
  %v2096 = vsel %vm894, %v2091, 0
  %2098 = vmatpush.msra.mxu0 0.0
  %2099 = vmatpush.msra.mxu0 0.0
  %2100 = vmatpush.msra.mxu0 0.0
  %2101 = vmatpush.msra.mxu0 0.0
  %2102 = vmatpush.msra.mxu0 0.0
  %2103 = vmatpush.msra.mxu0 0.0
  %2104 = vmatpush.msra.mxu0 0.0
  %2105 = vmatpush.msra.mxu0 0.0
  %2106 = vmatpush.msra.mxu0 0.0
  %2107 = vmatpush.msra.mxu0 0.0
  %2108 = vmatpush.msra.mxu0 0.0
  %2109 = vmatpush.msra.mxu0 %v903
  %2110 = vmatpush.msra.mxu0 %v133
  %2111 = vmatpush.msra.mxu0 %v132
  %2112 = vmatpush.msra.mxu0 %v131
  %2113 = vmatpush.msra.mxu0 %v130
  %2114 = vmatmul.f32.gmra.mxu0 %v2093
  %v2115 = vpop.f32.mrf.mxu0
  %v2116 = vadd.f32 0.0, %v2115
  %2117 = vmatmul.f32.gmra.mxu0 %v2096
  %v2118 = vpop.f32.mrf.mxu0
  %v2119 = vadd.f32 0.0, %v2118
  %2120 = vdwg.mxu0
  %2123 = vrot.lane.b32.xlu0 %v2116, 127
  %v2124 = vpop.permute.xlu0 %2123
  %2125 = vrot.lane.b32.xlu0 %v2119, 127
  %v2126 = vpop.permute.xlu0 %2125
  %2129 = vmatpush.msra.mxu0 0.0
  %2130 = vmatpush.msra.mxu0 0.0
  %2131 = vmatpush.msra.mxu0 0.0
  %2132 = vmatpush.msra.mxu0 0.0
  %2133 = vmatpush.msra.mxu0 0.0
  %2134 = vmatpush.msra.mxu0 0.0
  %2135 = vmatpush.msra.mxu0 0.0
  %2136 = vmatpush.msra.mxu0 0.0
  %2137 = vmatpush.msra.mxu0 0.0
  %2138 = vmatpush.msra.mxu0 0.0
  %2139 = vmatpush.msra.mxu0 0.0
  %2140 = vmatpush.msra.mxu0 0.0
  %2141 = vmatpush.msra.mxu0 0.0
  %2142 = vmatpush.msra.mxu0 0.0
  %2143 = vmatpush.msra.mxu0 %v2126
  %2144 = vmatpush.msra.mxu0 %v2124
  %2145 = vmatmul.f32.gmra.mxu0 %v938
  %v2146 = vpop.f32.mrf.mxu0
  %v2147 = vadd.f32 0.0, %v2146
  %2148 = vmatmul.f32.gmra.mxu0 %v941
  %v2149 = vpop.f32.mrf.mxu0
  %v2150 = vadd.f32 0.0, %v2149
  %2151 = vmatmul.f32.gmra.mxu0 %v944
  %v2152 = vpop.f32.mrf.mxu0
  %v2153 = vadd.f32 0.0, %v2152
  %2154 = vmatmul.f32.gmra.mxu0 %v947
  %v2155 = vpop.f32.mrf.mxu0
  %v2156 = vadd.f32 0.0, %v2155
  %2157 = vdwg.mxu0
  %2158 = vmatpush.msra.mxu0 0.0
  %2159 = vmatpush.msra.mxu0 0.0
  %2160 = vmatpush.msra.mxu0 0.0
  %2161 = vmatpush.msra.mxu0 0.0
  %2162 = vmatpush.msra.mxu0 0.0
  %2163 = vmatpush.msra.mxu0 0.0
  %2164 = vmatpush.msra.mxu0 0.0
  %2165 = vmatpush.msra.mxu0 0.0
  %2166 = vmatpush.msra.mxu0 0.0
  %2167 = vmatpush.msra.mxu0 0.0
  %2168 = vmatpush.msra.mxu0 0.0
  %2169 = vmatpush.msra.mxu0 0.0
  %2170 = vmatpush.msra.mxu0 0.0
  %2171 = vmatpush.msra.mxu0 0.0
  %2172 = vmatpush.msra.mxu0 %v2119
  %2173 = vmatpush.msra.mxu0 %v2116
  %2174 = vmatmul.f32.gmra.mxu0 %v979
  %v2175 = vpop.f32.mrf.mxu0
  %v2176 = vadd.f32 %v2147, %v2175
  %2177 = vmatmul.f32.gmra.mxu0 %v982
  %v2178 = vpop.f32.mrf.mxu0
  %v2179 = vadd.f32 %v2150, %v2178
  %2180 = vmatmul.f32.gmra.mxu0 %v985
  %v2181 = vpop.f32.mrf.mxu0
  %v2182 = vadd.f32 %v2153, %v2181
  %2183 = vmatmul.f32.gmra.mxu0 %v988
  %v2184 = vpop.f32.mrf.mxu0
  %v2185 = vadd.f32 %v2156, %v2184
  %2186 = vdwg.mxu0
  %2187 = vrot.lane.b32.xlu0 %v2116, 126
  %v2188 = vpop.permute.xlu0 %2187
  %2189 = vrot.lane.b32.xlu0 %v2119, 126
  %v2190 = vpop.permute.xlu0 %2189
  %2193 = vmatpush.msra.mxu0 0.0
  %2194 = vmatpush.msra.mxu0 0.0
  %2195 = vmatpush.msra.mxu0 0.0
  %2196 = vmatpush.msra.mxu0 0.0
  %2197 = vmatpush.msra.mxu0 0.0
  %2198 = vmatpush.msra.mxu0 0.0
  %2199 = vmatpush.msra.mxu0 0.0
  %2200 = vmatpush.msra.mxu0 0.0
  %2201 = vmatpush.msra.mxu0 0.0
  %2202 = vmatpush.msra.mxu0 0.0
  %2203 = vmatpush.msra.mxu0 0.0
  %2204 = vmatpush.msra.mxu0 0.0
  %2205 = vmatpush.msra.mxu0 0.0
  %2206 = vmatpush.msra.mxu0 0.0
  %2207 = vmatpush.msra.mxu0 %v2190
  %2208 = vmatpush.msra.mxu0 %v2188
  %2209 = vmatmul.f32.gmra.mxu0 %v1026
  %v2210 = vpop.f32.mrf.mxu0
  %v2211 = vadd.f32 0.0, %v2210
  %2212 = vmatmul.f32.gmra.mxu0 %v1029
  %v2213 = vpop.f32.mrf.mxu0
  %v2214 = vadd.f32 0.0, %v2213
  %2215 = vmatmul.f32.gmra.mxu0 %v1032
  %v2216 = vpop.f32.mrf.mxu0
  %v2217 = vadd.f32 0.0, %v2216
  %2218 = vmatmul.f32.gmra.mxu0 %v1035
  %v2219 = vpop.f32.mrf.mxu0
  %v2220 = vadd.f32 0.0, %v2219
  %2221 = vdwg.mxu0
  %v2222 = vadd.f32 %v2176, %v2211
  %v2223 = vadd.f32 %v2179, %v2214
  %v2224 = vadd.f32 %v2182, %v2217
  %v2225 = vadd.f32 %v2185, %v2220
  %2226 = vrot.lane.b32.xlu0 %v2116, 125
  %v2227 = vpop.permute.xlu0 %2226
  %2228 = vrot.lane.b32.xlu0 %v2119, 125
  %v2229 = vpop.permute.xlu0 %2228
  %2232 = vmatpush.msra.mxu0 0.0
  %2233 = vmatpush.msra.mxu0 0.0
  %2234 = vmatpush.msra.mxu0 0.0
  %2235 = vmatpush.msra.mxu0 0.0
  %2236 = vmatpush.msra.mxu0 0.0
  %2237 = vmatpush.msra.mxu0 0.0
  %2238 = vmatpush.msra.mxu0 0.0
  %2239 = vmatpush.msra.mxu0 0.0
  %2240 = vmatpush.msra.mxu0 0.0
  %2241 = vmatpush.msra.mxu0 0.0
  %2242 = vmatpush.msra.mxu0 0.0
  %2243 = vmatpush.msra.mxu0 0.0
  %2244 = vmatpush.msra.mxu0 0.0
  %2245 = vmatpush.msra.mxu0 0.0
  %2246 = vmatpush.msra.mxu0 %v2229
  %2247 = vmatpush.msra.mxu0 %v2227
  %2248 = vmatmul.f32.gmra.mxu0 %v1077
  %v2249 = vpop.f32.mrf.mxu0
  %v2250 = vadd.f32 0.0, %v2249
  %2251 = vmatmul.f32.gmra.mxu0 %v1080
  %v2252 = vpop.f32.mrf.mxu0
  %v2253 = vadd.f32 0.0, %v2252
  %2254 = vmatmul.f32.gmra.mxu0 %v1083
  %v2255 = vpop.f32.mrf.mxu0
  %v2256 = vadd.f32 0.0, %v2255
  %2257 = vmatmul.f32.gmra.mxu0 %v1086
  %v2258 = vpop.f32.mrf.mxu0
  %v2259 = vadd.f32 0.0, %v2258
  %2260 = vdwg.mxu0
  %v2261 = vadd.f32 %v2222, %v2250
  %v2262 = vadd.f32 %v2223, %v2253
  %v2263 = vadd.f32 %v2224, %v2256
  %v2264 = vadd.f32 %v2225, %v2259
  %2265 = vrot.lane.b32.xlu0 %v2116, 124
  %v2266 = vpop.permute.xlu0 %2265
  %2267 = vrot.lane.b32.xlu0 %v2119, 124
  %v2268 = vpop.permute.xlu0 %2267
  %2271 = vmatpush.msra.mxu0 0.0
  %2272 = vmatpush.msra.mxu0 0.0
  %2273 = vmatpush.msra.mxu0 0.0
  %2274 = vmatpush.msra.mxu0 0.0
  %2275 = vmatpush.msra.mxu0 0.0
  %2276 = vmatpush.msra.mxu0 0.0
  %2277 = vmatpush.msra.mxu0 0.0
  %2278 = vmatpush.msra.mxu0 0.0
  %2279 = vmatpush.msra.mxu0 0.0
  %2280 = vmatpush.msra.mxu0 0.0
  %2281 = vmatpush.msra.mxu0 0.0
  %2282 = vmatpush.msra.mxu0 0.0
  %2283 = vmatpush.msra.mxu0 0.0
  %2284 = vmatpush.msra.mxu0 0.0
  %2285 = vmatpush.msra.mxu0 %v2268
  %2286 = vmatpush.msra.mxu0 %v2266
  %2287 = vmatmul.f32.gmra.mxu0 %v1128
  %v2288 = vpop.f32.mrf.mxu0
  %v2289 = vadd.f32 0.0, %v2288
  %2290 = vmatmul.f32.gmra.mxu0 %v1131
  %v2291 = vpop.f32.mrf.mxu0
  %v2292 = vadd.f32 0.0, %v2291
  %2293 = vmatmul.f32.gmra.mxu0 %v1134
  %v2294 = vpop.f32.mrf.mxu0
  %v2295 = vadd.f32 0.0, %v2294
  %2296 = vmatmul.f32.gmra.mxu0 %v1137
  %v2297 = vpop.f32.mrf.mxu0
  %v2298 = vadd.f32 0.0, %v2297
  %2299 = vdwg.mxu0
  %v2300 = vadd.f32 %v2261, %v2289
  %v2301 = vadd.f32 %v2262, %v2292
  %v2302 = vadd.f32 %v2263, %v2295
  %v2303 = vadd.f32 %v2264, %v2298
  %2304 = vrot.lane.b32.xlu0 %v2116, 123
  %v2305 = vpop.permute.xlu0 %2304
  %2306 = vrot.lane.b32.xlu0 %v2119, 123
  %v2307 = vpop.permute.xlu0 %2306
  %2310 = vmatpush.msra.mxu0 0.0
  %2311 = vmatpush.msra.mxu0 0.0
  %2312 = vmatpush.msra.mxu0 0.0
  %2313 = vmatpush.msra.mxu0 0.0
  %2314 = vmatpush.msra.mxu0 0.0
  %2315 = vmatpush.msra.mxu0 0.0
  %2316 = vmatpush.msra.mxu0 0.0
  %2317 = vmatpush.msra.mxu0 0.0
  %2318 = vmatpush.msra.mxu0 0.0
  %2319 = vmatpush.msra.mxu0 0.0
  %2320 = vmatpush.msra.mxu0 0.0
  %2321 = vmatpush.msra.mxu0 0.0
  %2322 = vmatpush.msra.mxu0 0.0
  %2323 = vmatpush.msra.mxu0 0.0
  %2324 = vmatpush.msra.mxu0 %v2307
  %2325 = vmatpush.msra.mxu0 %v2305
  %2326 = vmatmul.f32.gmra.mxu0 %v1179
  %v2327 = vpop.f32.mrf.mxu0
  %v2328 = vadd.f32 0.0, %v2327
  %2329 = vmatmul.f32.gmra.mxu0 %v1182
  %v2330 = vpop.f32.mrf.mxu0
  %v2331 = vadd.f32 0.0, %v2330
  %2332 = vmatmul.f32.gmra.mxu0 %v1185
  %v2333 = vpop.f32.mrf.mxu0
  %v2334 = vadd.f32 0.0, %v2333
  %2335 = vmatmul.f32.gmra.mxu0 %v1188
  %v2336 = vpop.f32.mrf.mxu0
  %v2337 = vadd.f32 0.0, %v2336
  %2338 = vdwg.mxu0
  %v2339 = vadd.f32 %v2300, %v2328
  %v2340 = vadd.f32 %v2301, %v2331
  %v2341 = vadd.f32 %v2302, %v2334
  %v2342 = vadd.f32 %v2303, %v2337
  %2343 = vrot.lane.b32.xlu0 %v2116, 122
  %v2344 = vpop.permute.xlu0 %2343
  %2345 = vrot.lane.b32.xlu0 %v2119, 122
  %v2346 = vpop.permute.xlu0 %2345
  %2349 = vmatpush.msra.mxu0 0.0
  %2350 = vmatpush.msra.mxu0 0.0
  %2351 = vmatpush.msra.mxu0 0.0
  %2352 = vmatpush.msra.mxu0 0.0
  %2353 = vmatpush.msra.mxu0 0.0
  %2354 = vmatpush.msra.mxu0 0.0
  %2355 = vmatpush.msra.mxu0 0.0
  %2356 = vmatpush.msra.mxu0 0.0
  %2357 = vmatpush.msra.mxu0 0.0
  %2358 = vmatpush.msra.mxu0 0.0
  %2359 = vmatpush.msra.mxu0 0.0
  %2360 = vmatpush.msra.mxu0 0.0
  %2361 = vmatpush.msra.mxu0 0.0
  %2362 = vmatpush.msra.mxu0 0.0
  %2363 = vmatpush.msra.mxu0 %v2346
  %2364 = vmatpush.msra.mxu0 %v2344
  %2365 = vmatmul.f32.gmra.mxu0 %v1230
  %v2366 = vpop.f32.mrf.mxu0
  %v2367 = vadd.f32 0.0, %v2366
  %2368 = vmatmul.f32.gmra.mxu0 %v1233
  %v2369 = vpop.f32.mrf.mxu0
  %v2370 = vadd.f32 0.0, %v2369
  %2371 = vmatmul.f32.gmra.mxu0 %v1236
  %v2372 = vpop.f32.mrf.mxu0
  %v2373 = vadd.f32 0.0, %v2372
  %2374 = vmatmul.f32.gmra.mxu0 %v1239
  %v2375 = vpop.f32.mrf.mxu0
  %v2376 = vadd.f32 0.0, %v2375
  %2377 = vdwg.mxu0
  %v2378 = vadd.f32 %v2339, %v2367
  %v2379 = vadd.f32 %v2340, %v2370
  %v2380 = vadd.f32 %v2341, %v2373
  %v2381 = vadd.f32 %v2342, %v2376
  %2382 = vrot.lane.b32.xlu0 %v2116, 121
  %v2383 = vpop.permute.xlu0 %2382
  %2384 = vrot.lane.b32.xlu0 %v2119, 121
  %v2385 = vpop.permute.xlu0 %2384
  %2388 = vmatpush.msra.mxu0 0.0
  %2389 = vmatpush.msra.mxu0 0.0
  %2390 = vmatpush.msra.mxu0 0.0
  %2391 = vmatpush.msra.mxu0 0.0
  %2392 = vmatpush.msra.mxu0 0.0
  %2393 = vmatpush.msra.mxu0 0.0
  %2394 = vmatpush.msra.mxu0 0.0
  %2395 = vmatpush.msra.mxu0 0.0
  %2396 = vmatpush.msra.mxu0 0.0
  %2397 = vmatpush.msra.mxu0 0.0
  %2398 = vmatpush.msra.mxu0 0.0
  %2399 = vmatpush.msra.mxu0 0.0
  %2400 = vmatpush.msra.mxu0 0.0
  %2401 = vmatpush.msra.mxu0 0.0
  %2402 = vmatpush.msra.mxu0 %v2385
  %2403 = vmatpush.msra.mxu0 %v2383
  %2404 = vmatmul.f32.gmra.mxu0 %v1281
  %v2405 = vpop.f32.mrf.mxu0
  %v2406 = vadd.f32 0.0, %v2405
  %2407 = vmatmul.f32.gmra.mxu0 %v1284
  %v2408 = vpop.f32.mrf.mxu0
  %v2409 = vadd.f32 0.0, %v2408
  %2410 = vmatmul.f32.gmra.mxu0 %v1287
  %v2411 = vpop.f32.mrf.mxu0
  %v2412 = vadd.f32 0.0, %v2411
  %2413 = vmatmul.f32.gmra.mxu0 %v1290
  %v2414 = vpop.f32.mrf.mxu0
  %v2415 = vadd.f32 0.0, %v2414
  %2416 = vdwg.mxu0
  %v2417 = vadd.f32 %v2378, %v2406
  %v2418 = vadd.f32 %v2379, %v2409
  %v2419 = vadd.f32 %v2380, %v2412
  %v2420 = vadd.f32 %v2381, %v2415
  %2421 = vrot.lane.b32.xlu0 %v2116, 120
  %v2422 = vpop.permute.xlu0 %2421
  %2423 = vrot.lane.b32.xlu0 %v2119, 120
  %v2424 = vpop.permute.xlu0 %2423
  %2427 = vmatpush.msra.mxu0 0.0
  %2428 = vmatpush.msra.mxu0 0.0
  %2429 = vmatpush.msra.mxu0 0.0
  %2430 = vmatpush.msra.mxu0 0.0
  %2431 = vmatpush.msra.mxu0 0.0
  %2432 = vmatpush.msra.mxu0 0.0
  %2433 = vmatpush.msra.mxu0 0.0
  %2434 = vmatpush.msra.mxu0 0.0
  %2435 = vmatpush.msra.mxu0 0.0
  %2436 = vmatpush.msra.mxu0 0.0
  %2437 = vmatpush.msra.mxu0 0.0
  %2438 = vmatpush.msra.mxu0 0.0
  %2439 = vmatpush.msra.mxu0 0.0
  %2440 = vmatpush.msra.mxu0 0.0
  %2441 = vmatpush.msra.mxu0 %v2424
  %2442 = vmatpush.msra.mxu0 %v2422
  %2443 = vmatmul.f32.gmra.mxu0 %v1332
  %v2444 = vpop.f32.mrf.mxu0
  %v2445 = vadd.f32 0.0, %v2444
  %2446 = vmatmul.f32.gmra.mxu0 %v1335
  %v2447 = vpop.f32.mrf.mxu0
  %v2448 = vadd.f32 0.0, %v2447
  %2449 = vmatmul.f32.gmra.mxu0 %v1338
  %v2450 = vpop.f32.mrf.mxu0
  %v2451 = vadd.f32 0.0, %v2450
  %2452 = vmatmul.f32.gmra.mxu0 %v1341
  %v2453 = vpop.f32.mrf.mxu0
  %v2454 = vadd.f32 0.0, %v2453
  %2455 = vdwg.mxu0
  %v2456 = vadd.f32 %v2417, %v2445
  %v2457 = vadd.f32 %v2418, %v2448
  %v2458 = vadd.f32 %v2419, %v2451
  %v2459 = vadd.f32 %v2420, %v2454
  %v2460 = vadd.f32 %v2456, %v98
  %v2461 = vadd.f32 %v2457, %v99
  %v2462 = vadd.f32 %v2458, %v100
  %v2463 = vadd.f32 %v2459, %v101
  %v2464 = vmax.f32 %v2460, 0.0
  %v2465 = vmax.f32 %v2461, 0.0
  %v2466 = vmax.f32 %v2462, 0.0
  %v2467 = vmax.f32 %v2463, 0.0
  %2468 = vmatpush.msra.mxu0 0.0
  %2469 = vmatpush.msra.mxu0 0.0
  %2470 = vmatpush.msra.mxu0 0.0
  %2471 = vmatpush.msra.mxu0 0.0
  %2472 = vmatpush.msra.mxu0 0.0
  %2473 = vmatpush.msra.mxu0 0.0
  %2474 = vmatpush.msra.mxu0 0.0
  %2475 = vmatpush.msra.mxu0 0.0
  %2476 = vmatpush.msra.mxu0 0.0
  %2477 = vmatpush.msra.mxu0 0.0
  %2478 = vmatpush.msra.mxu0 0.0
  %2479 = vmatpush.msra.mxu0 0.0
  %2480 = vmatpush.msra.mxu0 %v2467
  %2481 = vmatpush.msra.mxu0 %v2466
  %2482 = vmatpush.msra.mxu0 %v2465
  %2483 = vmatpush.msra.mxu0 %v2464
  %2484 = vmatmul.f32.gmra.mxu0 %v1386
  %v2485 = vpop.f32.mrf.mxu0
  %v2486 = vadd.f32 %v103, %v2485
  %2487 = vdwg.mxu0
  %v2488 = vsub.f32 0.0, %v2486
  %v2489 = vmul.f32 %v2488, 1.442695
  %v2490 = vpow.pop %v2489
  %v2491 = vadd.f32 %v2490, 1.0
  %v2492 = vrcp.pop %v2491
  %2493 = vst.msk [vmem:[%s11 + $0x1] sm:$0x1] %vm1413, %v2492
  // Predicated region
  $region46: #{custom_cnn_forward.1} parent=0 // pred_check
    _
  $region47: #{custom_cnn_forward.1} parent=0 // pred_check_branch
    %2495 = sbr.rel (0) target = $region49
  $region48: #{custom_cnn_forward.1} parent=0 // pred_region
    _
  $region49: #{custom_cnn_forward.1} parent=0 // pred_fallthru
    _
  // Predicated region
  $region50: #{custom_cnn_forward.1} parent=0 // pred_check
    _
  $region51: #{custom_cnn_forward.1} parent=0 // pred_check_branch
    %2497 = sbr.rel (0) target = $region53
  $region52: #{custom_cnn_forward.1} parent=0 // pred_region
    _
  $region53: #{custom_cnn_forward.1} parent=0 // pred_fallthru
    _

</llo_original>
